<compile_context>
chip_gen: v6e
topology: v6e:2x2x1
jax: 0.10.0
libtpu: 0.0.40
codegen_flags: <defaults>
</compile_context>

<pallas_src>
import math

import jax
import jax.numpy as jnp
from jax import lax
from jax.experimental import pallas as pl
from jax.experimental.pallas import tpu as pltpu

LN_EPS = 1e-5  # torch.nn.LayerNorm default


def _layer_norm_f32(x, gamma, beta):
    mu = jnp.mean(x, axis=-1, keepdims=True)
    var = jnp.mean((x - mu) ** 2, axis=-1, keepdims=True)
    return (x - mu) * lax.rsqrt(var + LN_EPS) * gamma + beta


def _gelu_exact(x):
    # torch nn.GELU() default = exact (erf) gelu
    return 0.5 * x * (1.0 + lax.erf(x * (1.0 / math.sqrt(2.0))))


def _make_kernel(S, H, F, NH, TQ, compute_dtype, has_bias, use_nr_recip):
    dk = H // NH
    cdt = jnp.dtype(compute_dtype)

    def kernel(x_ref, *refs):
        if has_bias:
            bias_ref, refs = refs[0], refs[1:]
        else:
            bias_ref = None
        (ln1_g_ref, ln1_b_ref,
         wq_ref, bq_ref, wkv_ref, bkv_ref, wo_ref, bo_ref,
         ln2_g_ref, ln2_b_ref,
         w1_ref, b1_ref, w2_ref, b2_ref,
         out_ref, k_scr, v_scr) = refs

        qi = pl.program_id(1)

        # ---- once per batch element: project K/V for the full sequence ----
        @pl.when(qi == 0)
        def _():
            xf = x_ref[0].astype(jnp.float32)                        # (S, H)
            yf = _layer_norm_f32(xf, ln1_g_ref[...], ln1_b_ref[...])
            kv = (jnp.dot(yf.astype(cdt), wkv_ref[...],
                          preferred_element_type=jnp.float32)
                  + bkv_ref[...]).astype(cdt)                         # (S, 2H), single cast
            k_scr[...] = pltpu.einshape("snd->nsd", kv[:, :H].reshape(S, NH, dk))
            v_scr[...] = pltpu.einshape("snd->nsd", kv[:, H:].reshape(S, NH, dk))

        # ---- per query tile ----
        q0 = pl.multiple_of(qi * TQ, TQ)
        xq = x_ref[0, pl.ds(q0, TQ), :].astype(jnp.float32)          # (TQ, H)
        yq = _layer_norm_f32(xq, ln1_g_ref[...], ln1_b_ref[...])

        # Q projection; attention scale already folded into Wq/bq by wrapper.
        q = (jnp.dot(yq.astype(cdt), wq_ref[...],
                     preferred_element_type=jnp.float32)
             + bq_ref[...]).astype(cdt)                               # (TQ, H), single cast
        q3 = pltpu.einshape("snd->nsd", q.reshape(TQ, NH, dk))        # (NH, TQ, dk)

        s = jnp.einsum("nqd,nkd->nqk", q3, k_scr[...],
                       preferred_element_type=jnp.float32)            # (NH, TQ, S)
        if bias_ref is not None:
            s = s + bias_ref[0].astype(jnp.float32)                   # bf16 -> f32 upcast

        # Softmax over keys (dim=3 in the torch module); f32 stats.
        m = jnp.max(s, axis=-1, keepdims=True)
        p = jnp.exp(s - m)
        denom = jnp.sum(p, axis=-1, keepdims=True)
        r = pl.reciprocal(denom, approx=True)                         # EUP slot
        if use_nr_recip:
            r = r * (2.0 - denom * r)                                 # 1 Newton step ~ f32 accurate
        p = p * r
        # att_dropout -> identity (eval)

        ctx3 = jnp.einsum("nqk,nkd->nqd", p.astype(cdt), v_scr[...],
                          preferred_element_type=jnp.float32)          # (NH, TQ, dk)
        ctx = pltpu.einshape("nsd->snd", ctx3.astype(cdt)).reshape(TQ, H)
        attn = (jnp.dot(ctx, wo_ref[...],
                        preferred_element_type=jnp.float32)
                + bo_ref[...])
        # self_attention_dropout -> identity (eval)
        x1 = xq + attn

        # ---- feed-forward block ----
        y2 = _layer_norm_f32(x1, ln2_g_ref[...], ln2_b_ref[...])
        h1 = _gelu_exact(jnp.dot(y2.astype(cdt), w1_ref[...],
                                 preferred_element_type=jnp.float32) + b1_ref[...])
        ffn = (jnp.dot(h1.astype(cdt), w2_ref[...],
                       preferred_element_type=jnp.float32)
               + b2_ref[...])
        # ffn_dropout -> identity (eval)
        out_ref[0] = (x1 + ffn).astype(out_ref.dtype)

    return kernel


def _pick_q_tile(S):
    if S <= 256:
        return S
    for t in (256, 128, 64, 32, 16, 8):   # prefer >=256 rows in flight for the MXU
        if S % t == 0:
            return t
    # TODO(synk): pad/mask ragged sequence lengths instead of single-tile fallback.
    return S


def _vmem_limit_bytes(S, TQ, H, F, NH, compute_dtype, x_itemsize, has_bias):
    """Generation-aware VMEM budget (advisory for the pipeliner)."""
    cb = jnp.dtype(compute_dtype).itemsize
    f32 = 4
    dk = H // NH
    weights = (4 * H * H + 2 * H * F) * cb               # wq+wkv+wo + w1+w2, Buffered(1) -> 1 copy
    vecs = (9 * H + F + 4 * H) * f32                     # biases + LN params
    x_block = 2 * S * H * x_itemsize                     # resident full-x, dbl-buffered over b
    out_block = 2 * TQ * H * x_itemsize
    bias_block = (2 * NH * TQ * S * 2) if has_bias else 0  # bf16 stream, dbl-buffered
    kv_scratch = 2 * NH * S * dk * cb
    kv_build = 3 * S * H * f32 + 2 * S * H * cb          # y_full + (S,2H) f32 + relayout temps
    n_sc = 3 + (1 if has_bias else 0)                    # s, exp(s-m), p (+ f32 bias upcast)
    per_tile = 10 * TQ * H * f32 + n_sc * NH * TQ * S * f32 + 2 * TQ * F * f32
    est = (weights + vecs + x_block + out_block + bias_block
           + kv_scratch + kv_build + per_tile + (8 << 20))
    try:
        cap = int(pltpu.get_tpu_info().vmem_capacity_bytes) - (8 << 20)
    except Exception:
        cap = 56 << 20   # conservative: fits v7x's 64 MiB physical VMEM
    return int(min(max(est, 32 << 20), cap))


def encoder_layer(x, params, attn_bias=None, *, num_heads,
                  compute_dtype=None, q_tile=None):
    B, S, H = x.shape
    F = params["w1"].shape[-1]
    assert H % num_heads == 0
    dk = H // num_heads

    if compute_dtype is None:
        # TODO(synk): default to bf16 on v5e (f32 weights double both HBM DMA and
        # MXU cost there) once chip-generation detection is plumbed through.
        compute_dtype = x.dtype
    compute_dtype = jnp.dtype(compute_dtype)
    use_nr_recip = compute_dtype != jnp.dtype(jnp.bfloat16)
    has_bias = attn_bias is not None

    if q_tile is None:
        q_tile = _pick_q_tile(S)
    assert S % q_tile == 0 and (q_tile == S or q_tile % 8 == 0)
    NQ = S // q_tile

    f32 = jnp.float32
    scale = dk ** -0.5

    def cw(w):  # matmul weights stored/DMAed in the compute dtype
        return w.astype(compute_dtype)

    # One-time weight prep (outside the kernel): fuse K/V into one (H, 2H)
    # matmul; fold the attention scale into Wq / bq.
    wkv = jnp.concatenate([params["wk"], params["wv"]], axis=1)     # (H, 2H)
    bkv = jnp.concatenate([params["bk"], params["bv"]], axis=1)     # (1, 2H)

    weight_args = [
        params["ln1_g"].astype(f32), params["ln1_b"].astype(f32),
        cw(params["wq"] * scale), (params["bq"] * scale).astype(f32),
        cw(wkv), bkv.astype(f32),
        cw(params["wo"]), params["bo"].astype(f32),
        params["ln2_g"].astype(f32), params["ln2_b"].astype(f32),
        cw(params["w1"]), params["b1"].astype(f32),
        cw(params["w2"]), params["b2"].astype(f32),
    ]

    def resident_spec(arr):
        n = arr.ndim
        # Constant index map + single buffer: fetched once, stays resident.
        return pl.BlockSpec(arr.shape, lambda b, q, _n=n: (0,) * _n,
                            pipeline_mode=pl.Buffered(1))

    in_specs = [pl.BlockSpec((1, S, H), lambda b, q: (b, 0, 0))]     # full-x, resident over q
    inputs = [x]
    if has_bias:
        in_specs.append(
            pl.BlockSpec((1, num_heads, q_tile, S), lambda b, q: (b, 0, q, 0)))
        # Always DMA the (B, NH, S, S) bias in bf16; upcast to f32 inside the kernel.
        inputs.append(attn_bias.astype(jnp.bfloat16))
    in_specs += [resident_spec(a) for a in weight_args]
    inputs += weight_args

    kernel = _make_kernel(S, H, F, num_heads, q_tile, compute_dtype,
                          has_bias, use_nr_recip)

    return pl.pallas_call(
        kernel,
        out_shape=jax.ShapeDtypeStruct((B, S, H), x.dtype),
        grid_spec=pltpu.PrefetchScalarGridSpec(
            num_scalar_prefetch=0,
            grid=(B, NQ),
            in_specs=in_specs,
            out_specs=pl.BlockSpec((1, q_tile, H), lambda b, q: (b, q, 0)),
            scratch_shapes=[pltpu.VMEM((num_heads, S, dk), compute_dtype),
                            pltpu.VMEM((num_heads, S, dk), compute_dtype)],
        ),
        compiler_params=pltpu.CompilerParams(
            # q axis is 'arbitrary': K/V scratch written at q==0 is reused by
            # later tiles of the same batch element.
            dimension_semantics=("parallel", "arbitrary"),
            vmem_limit_bytes=_vmem_limit_bytes(
                S, q_tile, H, F, num_heads, compute_dtype,
                jnp.dtype(x.dtype).itemsize, has_bias),
        ),
    )(*inputs)


def init_params(key, hidden_size, ffn_size):
    H, F = hidden_size, ffn_size
    ks = jax.random.split(key, 12)

    def lin(k, fan_in, shape):
        bound = 1.0 / math.sqrt(fan_in)
        return jax.random.uniform(k, shape, jnp.float32, -bound, bound)

    return {
        "ln1_g": jnp.ones((1, H), jnp.float32),
        "ln1_b": jnp.zeros((1, H), jnp.float32),
        "wq": lin(ks[0], H, (H, H)), "bq": lin(ks[1], H, (1, H)),
        "wk": lin(ks[2], H, (H, H)), "bk": lin(ks[3], H, (1, H)),
        "wv": lin(ks[4], H, (H, H)), "bv": lin(ks[5], H, (1, H)),
        "wo": lin(ks[6], H, (H, H)), "bo": lin(ks[7], H, (1, H)),
        "ln2_g": jnp.ones((1, H), jnp.float32),
        "ln2_b": jnp.zeros((1, H), jnp.float32),
        "w1": lin(ks[8], H, (H, F)), "b1": lin(ks[9], H, (1, F)),
        "w2": lin(ks[10], F, (F, H)), "b2": lin(ks[11], F, (1, H)),
    }


def _reference(x, params, attn_bias, num_heads):
    """Pure-JAX reference mirroring the PyTorch forward (dropout = identity)."""
    def ln(v, g, b):
        mu = jnp.mean(v, -1, keepdims=True)
        var = jnp.mean((v - mu) ** 2, -1, keepdims=True)
        return (v - mu) / jnp.sqrt(var + LN_EPS) * g + b

    B, S, H = x.shape
    dk = H // num_heads
    y = ln(x, params["ln1_g"], params["ln1_b"])
    q = (y @ params["wq"] + params["bq"]).reshape(B, S, num_heads, dk).transpose(0, 2, 1, 3)
    k = (y @ params["wk"] + params["bk"]).reshape(B, S, num_heads, dk).transpose(0, 2, 1, 3)
    v = (y @ params["wv"] + params["bv"]).reshape(B, S, num_heads, dk).transpose(0, 2, 1, 3)
    s = jnp.einsum("bhqd,bhkd->bhqk", q * dk ** -0.5, k)
    if attn_bias is not None:
        s = s + attn_bias
    p = jax.nn.softmax(s, axis=-1)
    ctx = jnp.einsum("bhqk,bhkd->bhqd", p, v).transpose(0, 2, 1, 3).reshape(B, S, H)
    x1 = x + ctx @ params["wo"] + params["bo"]
    y2 = ln(x1, params["ln2_g"], params["ln2_b"])
    h1 = jax.nn.gelu(y2 @ params["w1"] + params["b1"], approximate=False)
    return x1 + h1 @ params["w2"] + params["b2"]


if __name__ == "__main__":
    B, S, H, F, NH = 2, 16, 32, 64, 4
    key = jax.random.PRNGKey(0)
    kx, kb, kp = jax.random.split(key, 3)

    x = jax.random.normal(kx, (B, S, H), jnp.float32)
    attn_bias = 0.1 * jax.random.normal(kb, (B, NH, S, S), jnp.float32)
    params = init_params(kp, H, F)

    # The kernel always DMAs the bias in bf16; compare against a reference that
    # sees the same quantized bias so the f32-path check stays tight.
    bias_q = attn_bias.astype(jnp.bfloat16).astype(jnp.float32)
    ref_bias = _reference(x, params, bias_q, NH)
    ref_nobias = _reference(x, params, None, NH)

    # f32 path, with attention bias (single query tile).
    out = encoder_layer(x, params, attn_bias, num_heads=NH)
    jax.block_until_ready(out)
    assert out.shape == (B, S, H)
    assert jnp.allclose(out, ref_bias, atol=5e-4, rtol=5e-4), "mismatch (f32, bias)"

    # f32 path, bias=None specialization + multi-tile query axis (q_tile=8 -> 2 tiles).
    out_nb = encoder_layer(x, params, None, num_heads=NH, q_tile=8)
    jax.block_until_ready(out_nb)
    assert jnp.allclose(out_nb, ref_nobias, atol=5e-4, rtol=5e-4), "mismatch (f32, no bias, tiled)"

    # bf16 matmul path (f32 accumulation + f32 LN/softmax stats), looser tolerance.
    out_bf16 = encoder_layer(x, params, attn_bias, num_heads=NH,
                             compute_dtype=jnp.bfloat16)
    jax.block_until_ready(out_bf16)
    assert jnp.all(jnp.isfinite(out_bf16))
    assert jnp.allclose(out_bf16.astype(jnp.float32), ref_bias,
                        atol=1e-1, rtol=1e-1), "mismatch (bf16)"

    print("KERNEL_OK")
</pallas_src>

<mosaic_0001>
module attributes {stable_mosaic.version = 11 : i64} {
  func.func @kernel(%arg0: i32, %arg1: i32, %arg2: memref<1x16x32xf32, #tpu.memory_space<vmem>>, %arg3: memref<1x4x16x16xbf16, #tpu.memory_space<vmem>>, %arg4: memref<1x32xf32, #tpu.memory_space<vmem>>, %arg5: memref<1x32xf32, #tpu.memory_space<vmem>>, %arg6: memref<32x32xf32, #tpu.memory_space<vmem>>, %arg7: memref<1x32xf32, #tpu.memory_space<vmem>>, %arg8: memref<32x64xf32, #tpu.memory_space<vmem>>, %arg9: memref<1x64xf32, #tpu.memory_space<vmem>>, %arg10: memref<32x32xf32, #tpu.memory_space<vmem>>, %arg11: memref<1x32xf32, #tpu.memory_space<vmem>>, %arg12: memref<1x32xf32, #tpu.memory_space<vmem>>, %arg13: memref<1x32xf32, #tpu.memory_space<vmem>>, %arg14: memref<32x64xf32, #tpu.memory_space<vmem>>, %arg15: memref<1x64xf32, #tpu.memory_space<vmem>>, %arg16: memref<64x32xf32, #tpu.memory_space<vmem>>, %arg17: memref<1x32xf32, #tpu.memory_space<vmem>>, %arg18: memref<1x16x32xf32, #tpu.memory_space<vmem>>, %arg19: memref<4x16x8xf32, #tpu.memory_space<vmem>>, %arg20: memref<4x16x8xf32, #tpu.memory_space<vmem>>) attributes {dimension_semantics = [#tpu.dimension_semantics<parallel>, #tpu.dimension_semantics<arbitrary>], iteration_bounds = array<i64: 2, 1>, scalar_prefetch = 0 : i64, scratch_operands = 2 : i64, tpu.core_type = #tpu.core_type<tc>, window_params = [{transform_indices = @transform_0, window_bounds = array<i64: 1, 16, 32>}, {transform_indices = @transform_1, window_bounds = array<i64: 1, 4, 16, 16>}, {pipeline_mode = #tpu.pipeline_mode<synchronous>, transform_indices = @transform_2, window_bounds = array<i64: 1, 32>}, {pipeline_mode = #tpu.pipeline_mode<synchronous>, transform_indices = @transform_3, window_bounds = array<i64: 1, 32>}, {pipeline_mode = #tpu.pipeline_mode<synchronous>, transform_indices = @transform_4, window_bounds = array<i64: 32, 32>}, {pipeline_mode = #tpu.pipeline_mode<synchronous>, transform_indices = @transform_5, window_bounds = array<i64: 1, 32>}, {pipeline_mode = #tpu.pipeline_mode<synchronous>, transform_indices = @transform_6, window_bounds = array<i64: 32, 64>}, {pipeline_mode = #tpu.pipeline_mode<synchronous>, transform_indices = @transform_7, window_bounds = array<i64: 1, 64>}, {pipeline_mode = #tpu.pipeline_mode<synchronous>, transform_indices = @transform_8, window_bounds = array<i64: 32, 32>}, {pipeline_mode = #tpu.pipeline_mode<synchronous>, transform_indices = @transform_9, window_bounds = array<i64: 1, 32>}, {pipeline_mode = #tpu.pipeline_mode<synchronous>, transform_indices = @transform_10, window_bounds = array<i64: 1, 32>}, {pipeline_mode = #tpu.pipeline_mode<synchronous>, transform_indices = @transform_11, window_bounds = array<i64: 1, 32>}, {pipeline_mode = #tpu.pipeline_mode<synchronous>, transform_indices = @transform_12, window_bounds = array<i64: 32, 64>}, {pipeline_mode = #tpu.pipeline_mode<synchronous>, transform_indices = @transform_13, window_bounds = array<i64: 1, 64>}, {pipeline_mode = #tpu.pipeline_mode<synchronous>, transform_indices = @transform_14, window_bounds = array<i64: 64, 32>}, {pipeline_mode = #tpu.pipeline_mode<synchronous>, transform_indices = @transform_15, window_bounds = array<i64: 1, 32>}, {transform_indices = @transform_16, window_bounds = array<i64: 1, 16, 32>}]} {
    %c0_i32 = arith.constant 0 : i32
    %0 = arith.cmpi eq, %arg1, %c0_i32 : i32
    %1 = arith.extui %0 : i1 to i32
    %c0_i32_0 = arith.constant 0 : i32
    %2 = arith.cmpi ne, %1, %c0_i32_0 : i32
    scf.if %2 {
      %c0_60 = arith.constant 0 : index
      %c0_61 = arith.constant 0 : index
      %c0_62 = arith.constant 0 : index
      %115 = vector.load %arg2[%c0_60, %c0_61, %c0_62] : memref<1x16x32xf32, #tpu.memory_space<vmem>>, vector<1x16x32xf32>
      %116 = vector.shape_cast %115 : vector<1x16x32xf32> to vector<16x32xf32>
      %c0_63 = arith.constant 0 : index
      %c0_64 = arith.constant 0 : index
      %117 = vector.load %arg4[%c0_63, %c0_64] : memref<1x32xf32, #tpu.memory_space<vmem>>, vector<1x32xf32>
      %c0_65 = arith.constant 0 : index
      %c0_66 = arith.constant 0 : index
      %118 = vector.load %arg5[%c0_65, %c0_66] : memref<1x32xf32, #tpu.memory_space<vmem>>, vector<1x32xf32>
      %cst_67 = arith.constant dense<0.000000e+00> : vector<16xf32>
      %119 = vector.multi_reduction <add>, %116, %cst_67 [1] : vector<16x32xf32> to vector<16xf32>
      %120 = vector.shape_cast %119 : vector<16xf32> to vector<16x1xf32>
      %cst_68 = arith.constant 3.200000e+01 : f32
      %121 = vector.broadcast %cst_68 : f32 to vector<16x1xf32>
      %122 = arith.divf %120, %121 : vector<16x1xf32>
      %123 = vector.broadcast %122 : vector<16x1xf32> to vector<16x32xf32>
      %124 = arith.subf %116, %123 : vector<16x32xf32>
      %125 = arith.mulf %124, %124 : vector<16x32xf32>
      %cst_69 = arith.constant dense<0.000000e+00> : vector<16xf32>
      %126 = vector.multi_reduction <add>, %125, %cst_69 [1] : vector<16x32xf32> to vector<16xf32>
      %127 = vector.shape_cast %126 : vector<16xf32> to vector<16x1xf32>
      %cst_70 = arith.constant 3.200000e+01 : f32
      %128 = vector.broadcast %cst_70 : f32 to vector<16x1xf32>
      %129 = arith.divf %127, %128 : vector<16x1xf32>
      %130 = vector.broadcast %122 : vector<16x1xf32> to vector<16x32xf32>
      %131 = arith.subf %116, %130 : vector<16x32xf32>
      %cst_71 = arith.constant 9.99999974E-6 : f32
      %132 = vector.broadcast %cst_71 : f32 to vector<16x1xf32>
      %133 = arith.addf %129, %132 : vector<16x1xf32>
      %134 = math.rsqrt %133 : vector<16x1xf32>
      %135 = vector.broadcast %134 : vector<16x1xf32> to vector<16x32xf32>
      %136 = arith.mulf %131, %135 : vector<16x32xf32>
      %137 = vector.broadcast %117 : vector<1x32xf32> to vector<16x32xf32>
      %138 = arith.mulf %136, %137 : vector<16x32xf32>
      %139 = vector.broadcast %118 : vector<1x32xf32> to vector<16x32xf32>
      %140 = arith.addf %138, %139 : vector<16x32xf32>
      %c0_72 = arith.constant 0 : index
      %c0_73 = arith.constant 0 : index
      %141 = vector.load %arg8[%c0_72, %c0_73] : memref<32x64xf32, #tpu.memory_space<vmem>>, vector<32x64xf32>
      %cst_74 = arith.constant dense<0.000000e+00> : vector<16x64xf32>
      %142 = tpu.matmul %140, %141, %cst_74 {dimension_numbers = #tpu.dot_dimension_numbers<[1], [0], [0], [1], [0, 0, 1, 1], [], []>} : vector<16x32xf32>, vector<32x64xf32>, vector<16x64xf32> -> vector<16x64xf32>
      %c0_75 = arith.constant 0 : index
      %c0_76 = arith.constant 0 : index
      %143 = vector.load %arg9[%c0_75, %c0_76] : memref<1x64xf32, #tpu.memory_space<vmem>>, vector<1x64xf32>
      %144 = vector.broadcast %143 : vector<1x64xf32> to vector<16x64xf32>
      %145 = arith.addf %142, %144 : vector<16x64xf32>
      %146 = vector.extract_strided_slice %145 {offsets = [0, 0], sizes = [16, 32], strides = [1, 1]} : vector<16x64xf32> to vector<16x32xf32>
      %147 = vector.shape_cast %146 : vector<16x32xf32> to vector<16x4x8xf32>
      %148 = tpu.transpose %147, [1, 0, 2] : vector<16x4x8xf32> -> vector<4x16x8xf32>
      %c0_77 = arith.constant 0 : index
      %c0_78 = arith.constant 0 : index
      %c0_79 = arith.constant 0 : index
      %149 = vector.load %arg19[%c0_77, %c0_78, %c0_79] : memref<4x16x8xf32, #tpu.memory_space<vmem>>, vector<4x16x8xf32>
      tpu.vector_store %arg19[%c0_77, %c0_78, %c0_79], %148 {strides = array<i32>} : memref<4x16x8xf32, #tpu.memory_space<vmem>>, vector<4x16x8xf32>,
      %150 = vector.extract_strided_slice %145 {offsets = [0, 32], sizes = [16, 32], strides = [1, 1]} : vector<16x64xf32> to vector<16x32xf32>
      %151 = vector.shape_cast %150 : vector<16x32xf32> to vector<16x4x8xf32>
      %152 = tpu.transpose %151, [1, 0, 2] : vector<16x4x8xf32> -> vector<4x16x8xf32>
      %c0_80 = arith.constant 0 : index
      %c0_81 = arith.constant 0 : index
      %c0_82 = arith.constant 0 : index
      %153 = vector.load %arg20[%c0_80, %c0_81, %c0_82] : memref<4x16x8xf32, #tpu.memory_space<vmem>>, vector<4x16x8xf32>
      tpu.vector_store %arg20[%c0_80, %c0_81, %c0_82], %152 {strides = array<i32>} : memref<4x16x8xf32, #tpu.memory_space<vmem>>, vector<4x16x8xf32>,
    } else {
    }
    %c16_i32 = arith.constant 16 : i32
    %3 = arith.muli %arg1, %c16_i32 : i32
    %4 = tpu.assume_multiple %3, 16 : i32
    %c0 = arith.constant 0 : index
    %5 = arith.index_cast %4 : i32 to index
    %c0_1 = arith.constant 0 : index
    %6 = vector.load %arg2[%c0, %5, %c0_1] : memref<1x16x32xf32, #tpu.memory_space<vmem>>, vector<1x16x32xf32>
    %7 = vector.shape_cast %6 : vector<1x16x32xf32> to vector<16x32xf32>
    %c0_2 = arith.constant 0 : index
    %c0_3 = arith.constant 0 : index
    %8 = vector.load %arg4[%c0_2, %c0_3] : memref<1x32xf32, #tpu.memory_space<vmem>>, vector<1x32xf32>
    %c0_4 = arith.constant 0 : index
    %c0_5 = arith.constant 0 : index
    %9 = vector.load %arg5[%c0_4, %c0_5] : memref<1x32xf32, #tpu.memory_space<vmem>>, vector<1x32xf32>
    %cst = arith.constant dense<0.000000e+00> : vector<16xf32>
    %10 = vector.multi_reduction <add>, %7, %cst [1] : vector<16x32xf32> to vector<16xf32>
    %11 = vector.shape_cast %10 : vector<16xf32> to vector<16x1xf32>
    %cst_6 = arith.constant 3.200000e+01 : f32
    %12 = vector.broadcast %cst_6 : f32 to vector<16x1xf32>
    %13 = arith.divf %11, %12 : vector<16x1xf32>
    %14 = vector.broadcast %13 : vector<16x1xf32> to vector<16x32xf32>
    %15 = arith.subf %7, %14 : vector<16x32xf32>
    %16 = arith.mulf %15, %15 : vector<16x32xf32>
    %cst_7 = arith.constant dense<0.000000e+00> : vector<16xf32>
    %17 = vector.multi_reduction <add>, %16, %cst_7 [1] : vector<16x32xf32> to vector<16xf32>
    %18 = vector.shape_cast %17 : vector<16xf32> to vector<16x1xf32>
    %cst_8 = arith.constant 3.200000e+01 : f32
    %19 = vector.broadcast %cst_8 : f32 to vector<16x1xf32>
    %20 = arith.divf %18, %19 : vector<16x1xf32>
    %21 = vector.broadcast %13 : vector<16x1xf32> to vector<16x32xf32>
    %22 = arith.subf %7, %21 : vector<16x32xf32>
    %cst_9 = arith.constant 9.99999974E-6 : f32
    %23 = vector.broadcast %cst_9 : f32 to vector<16x1xf32>
    %24 = arith.addf %20, %23 : vector<16x1xf32>
    %25 = math.rsqrt %24 : vector<16x1xf32>
    %26 = vector.broadcast %25 : vector<16x1xf32> to vector<16x32xf32>
    %27 = arith.mulf %22, %26 : vector<16x32xf32>
    %28 = vector.broadcast %8 : vector<1x32xf32> to vector<16x32xf32>
    %29 = arith.mulf %27, %28 : vector<16x32xf32>
    %30 = vector.broadcast %9 : vector<1x32xf32> to vector<16x32xf32>
    %31 = arith.addf %29, %30 : vector<16x32xf32>
    %c0_10 = arith.constant 0 : index
    %c0_11 = arith.constant 0 : index
    %32 = vector.load %arg6[%c0_10, %c0_11] : memref<32x32xf32, #tpu.memory_space<vmem>>, vector<32x32xf32>
    %cst_12 = arith.constant dense<0.000000e+00> : vector<16x32xf32>
    %33 = tpu.matmul %31, %32, %cst_12 {dimension_numbers = #tpu.dot_dimension_numbers<[1], [0], [0], [1], [0, 0, 1, 1], [], []>} : vector<16x32xf32>, vector<32x32xf32>, vector<16x32xf32> -> vector<16x32xf32>
    %c0_13 = arith.constant 0 : index
    %c0_14 = arith.constant 0 : index
    %34 = vector.load %arg7[%c0_13, %c0_14] : memref<1x32xf32, #tpu.memory_space<vmem>>, vector<1x32xf32>
    %35 = vector.broadcast %34 : vector<1x32xf32> to vector<16x32xf32>
    %36 = arith.addf %33, %35 : vector<16x32xf32>
    %37 = vector.shape_cast %36 : vector<16x32xf32> to vector<16x4x8xf32>
    %38 = tpu.transpose %37, [1, 0, 2] : vector<16x4x8xf32> -> vector<4x16x8xf32>
    %c0_15 = arith.constant 0 : index
    %c0_16 = arith.constant 0 : index
    %c0_17 = arith.constant 0 : index
    %39 = vector.load %arg19[%c0_15, %c0_16, %c0_17] : memref<4x16x8xf32, #tpu.memory_space<vmem>>, vector<4x16x8xf32>
    "tpu.trace_start"() <{level = 10 : i32, message = "nqd,nkd->nqk"}> : () -> ()
    %cst_18 = arith.constant dense<0.000000e+00> : vector<4x16x16xf32>
    %40 = tpu.matmul %38, %39, %cst_18 {dimension_numbers = #tpu.dot_dimension_numbers<[2], [2], [1], [1], [0, 0, 0, 1, 1, 1], [0], [0]>} : vector<4x16x8xf32>, vector<4x16x8xf32>, vector<4x16x16xf32> -> vector<4x16x16xf32>
    "tpu.trace_stop"() : () -> ()
    %c0_19 = arith.constant 0 : index
    %c0_20 = arith.constant 0 : index
    %c0_21 = arith.constant 0 : index
    %c0_22 = arith.constant 0 : index
    %41 = vector.load %arg3[%c0_19, %c0_20, %c0_21, %c0_22] : memref<1x4x16x16xbf16, #tpu.memory_space<vmem>>, vector<1x4x16x16xbf16>
    %42 = vector.shape_cast %41 : vector<1x4x16x16xbf16> to vector<4x16x16xbf16>
    %43 = arith.extf %42 : vector<4x16x16xbf16> to vector<4x16x16xf32>
    %44 = arith.addf %40, %43 : vector<4x16x16xf32>
    %cst_23 = arith.constant dense<0xFF800000> : vector<4x16xf32>
    %45 = vector.multi_reduction <maximumf>, %44, %cst_23 [2] : vector<4x16x16xf32> to vector<4x16xf32>
    %46 = vector.shape_cast %45 : vector<4x16xf32> to vector<4x16x1xf32>
    %47 = vector.broadcast %46 : vector<4x16x1xf32> to vector<4x16x16xf32>
    %48 = arith.subf %44, %47 : vector<4x16x16xf32>
    %49 = math.exp %48 : vector<4x16x16xf32>
    %cst_24 = arith.constant dense<0.000000e+00> : vector<4x16xf32>
    %50 = vector.multi_reduction <add>, %49, %cst_24 [2] : vector<4x16x16xf32> to vector<4x16xf32>
    %51 = vector.shape_cast %50 : vector<4x16xf32> to vector<4x16x1xf32>
    %52 = tpu.reciprocal %51 {approx = true} : vector<4x16x1xf32> -> vector<4x16x1xf32>
    %53 = arith.mulf %51, %52 : vector<4x16x1xf32>
    %cst_25 = arith.constant 2.000000e+00 : f32
    %54 = vector.broadcast %cst_25 : f32 to vector<4x16x1xf32>
    %55 = arith.subf %54, %53 : vector<4x16x1xf32>
    %56 = arith.mulf %52, %55 : vector<4x16x1xf32>
    %57 = vector.broadcast %56 : vector<4x16x1xf32> to vector<4x16x16xf32>
    %58 = arith.mulf %49, %57 : vector<4x16x16xf32>
    %c0_26 = arith.constant 0 : index
    %c0_27 = arith.constant 0 : index
    %c0_28 = arith.constant 0 : index
    %59 = vector.load %arg20[%c0_26, %c0_27, %c0_28] : memref<4x16x8xf32, #tpu.memory_space<vmem>>, vector<4x16x8xf32>
    "tpu.trace_start"() <{level = 10 : i32, message = "nqk,nkd->nqd"}> : () -> ()
    %cst_29 = arith.constant dense<0.000000e+00> : vector<4x16x8xf32>
    %60 = tpu.matmul %58, %59, %cst_29 {dimension_numbers = #tpu.dot_dimension_numbers<[2], [1], [1], [2], [0, 0, 0, 1, 1, 2], [0], [0]>} : vector<4x16x16xf32>, vector<4x16x8xf32>, vector<4x16x8xf32> -> vector<4x16x8xf32>
    "tpu.trace_stop"() : () -> ()
    %61 = tpu.transpose %60, [1, 0, 2] : vector<4x16x8xf32> -> vector<16x4x8xf32>
    %62 = vector.shape_cast %61 : vector<16x4x8xf32> to vector<16x32xf32>
    %c0_30 = arith.constant 0 : index
    %c0_31 = arith.constant 0 : index
    %63 = vector.load %arg10[%c0_30, %c0_31] : memref<32x32xf32, #tpu.memory_space<vmem>>, vector<32x32xf32>
    %cst_32 = arith.constant dense<0.000000e+00> : vector<16x32xf32>
    %64 = tpu.matmul %62, %63, %cst_32 {dimension_numbers = #tpu.dot_dimension_numbers<[1], [0], [0], [1], [0, 0, 1, 1], [], []>} : vector<16x32xf32>, vector<32x32xf32>, vector<16x32xf32> -> vector<16x32xf32>
    %c0_33 = arith.constant 0 : index
    %c0_34 = arith.constant 0 : index
    %65 = vector.load %arg11[%c0_33, %c0_34] : memref<1x32xf32, #tpu.memory_space<vmem>>, vector<1x32xf32>
    %66 = vector.broadcast %65 : vector<1x32xf32> to vector<16x32xf32>
    %67 = arith.addf %64, %66 : vector<16x32xf32>
    %68 = arith.addf %7, %67 : vector<16x32xf32>
    %c0_35 = arith.constant 0 : index
    %c0_36 = arith.constant 0 : index
    %69 = vector.load %arg12[%c0_35, %c0_36] : memref<1x32xf32, #tpu.memory_space<vmem>>, vector<1x32xf32>
    %c0_37 = arith.constant 0 : index
    %c0_38 = arith.constant 0 : index
    %70 = vector.load %arg13[%c0_37, %c0_38] : memref<1x32xf32, #tpu.memory_space<vmem>>, vector<1x32xf32>
    %cst_39 = arith.constant dense<0.000000e+00> : vector<16xf32>
    %71 = vector.multi_reduction <add>, %68, %cst_39 [1] : vector<16x32xf32> to vector<16xf32>
    %72 = vector.shape_cast %71 : vector<16xf32> to vector<16x1xf32>
    %cst_40 = arith.constant 3.200000e+01 : f32
    %73 = vector.broadcast %cst_40 : f32 to vector<16x1xf32>
    %74 = arith.divf %72, %73 : vector<16x1xf32>
    %75 = vector.broadcast %74 : vector<16x1xf32> to vector<16x32xf32>
    %76 = arith.subf %68, %75 : vector<16x32xf32>
    %77 = arith.mulf %76, %76 : vector<16x32xf32>
    %cst_41 = arith.constant dense<0.000000e+00> : vector<16xf32>
    %78 = vector.multi_reduction <add>, %77, %cst_41 [1] : vector<16x32xf32> to vector<16xf32>
    %79 = vector.shape_cast %78 : vector<16xf32> to vector<16x1xf32>
    %cst_42 = arith.constant 3.200000e+01 : f32
    %80 = vector.broadcast %cst_42 : f32 to vector<16x1xf32>
    %81 = arith.divf %79, %80 : vector<16x1xf32>
    %82 = vector.broadcast %74 : vector<16x1xf32> to vector<16x32xf32>
    %83 = arith.subf %68, %82 : vector<16x32xf32>
    %cst_43 = arith.constant 9.99999974E-6 : f32
    %84 = vector.broadcast %cst_43 : f32 to vector<16x1xf32>
    %85 = arith.addf %81, %84 : vector<16x1xf32>
    %86 = math.rsqrt %85 : vector<16x1xf32>
    %87 = vector.broadcast %86 : vector<16x1xf32> to vector<16x32xf32>
    %88 = arith.mulf %83, %87 : vector<16x32xf32>
    %89 = vector.broadcast %69 : vector<1x32xf32> to vector<16x32xf32>
    %90 = arith.mulf %88, %89 : vector<16x32xf32>
    %91 = vector.broadcast %70 : vector<1x32xf32> to vector<16x32xf32>
    %92 = arith.addf %90, %91 : vector<16x32xf32>
    %c0_44 = arith.constant 0 : index
    %c0_45 = arith.constant 0 : index
    %93 = vector.load %arg14[%c0_44, %c0_45] : memref<32x64xf32, #tpu.memory_space<vmem>>, vector<32x64xf32>
    %cst_46 = arith.constant dense<0.000000e+00> : vector<16x64xf32>
    %94 = tpu.matmul %92, %93, %cst_46 {dimension_numbers = #tpu.dot_dimension_numbers<[1], [0], [0], [1], [0, 0, 1, 1], [], []>} : vector<16x32xf32>, vector<32x64xf32>, vector<16x64xf32> -> vector<16x64xf32>
    %c0_47 = arith.constant 0 : index
    %c0_48 = arith.constant 0 : index
    %95 = vector.load %arg15[%c0_47, %c0_48] : memref<1x64xf32, #tpu.memory_space<vmem>>, vector<1x64xf32>
    %96 = vector.broadcast %95 : vector<1x64xf32> to vector<16x64xf32>
    %97 = arith.addf %94, %96 : vector<16x64xf32>
    %cst_49 = arith.constant 5.000000e-01 : f32
    %98 = vector.broadcast %cst_49 : f32 to vector<16x64xf32>
    %99 = arith.mulf %98, %97 : vector<16x64xf32>
    %cst_50 = arith.constant 0.707106769 : f32
    %100 = vector.broadcast %cst_50 : f32 to vector<16x64xf32>
    %101 = arith.mulf %97, %100 : vector<16x64xf32>
    %102 = math.erf %101 : vector<16x64xf32>
    %cst_51 = arith.constant 1.000000e+00 : f32
    %103 = vector.broadcast %cst_51 : f32 to vector<16x64xf32>
    %104 = arith.addf %103, %102 : vector<16x64xf32>
    %105 = arith.mulf %99, %104 : vector<16x64xf32>
    %c0_52 = arith.constant 0 : index
    %c0_53 = arith.constant 0 : index
    %106 = vector.load %arg16[%c0_52, %c0_53] : memref<64x32xf32, #tpu.memory_space<vmem>>, vector<64x32xf32>
    %cst_54 = arith.constant dense<0.000000e+00> : vector<16x32xf32>
    %107 = tpu.matmul %105, %106, %cst_54 {dimension_numbers = #tpu.dot_dimension_numbers<[1], [0], [0], [1], [0, 0, 1, 1], [], []>} : vector<16x64xf32>, vector<64x32xf32>, vector<16x32xf32> -> vector<16x32xf32>
    %c0_55 = arith.constant 0 : index
    %c0_56 = arith.constant 0 : index
    %108 = vector.load %arg17[%c0_55, %c0_56] : memref<1x32xf32, #tpu.memory_space<vmem>>, vector<1x32xf32>
    %109 = vector.broadcast %108 : vector<1x32xf32> to vector<16x32xf32>
    %110 = arith.addf %107, %109 : vector<16x32xf32>
    %111 = arith.addf %68, %110 : vector<16x32xf32>
    %c0_57 = arith.constant 0 : index
    %c0_58 = arith.constant 0 : index
    %c0_59 = arith.constant 0 : index
    %112 = vector.load %arg18[%c0_57, %c0_58, %c0_59] : memref<1x16x32xf32, #tpu.memory_space<vmem>>, vector<1x16x32xf32>
    %113 = vector.shape_cast %112 : vector<1x16x32xf32> to vector<16x32xf32>
    %114 = vector.shape_cast %111 : vector<16x32xf32> to vector<1x16x32xf32>
    tpu.vector_store %arg18[%c0_57, %c0_58, %c0_59], %114 {strides = array<i32>} : memref<1x16x32xf32, #tpu.memory_space<vmem>>, vector<1x16x32xf32>,
    return
  }
  func.func @transform_0(%arg0: i32, %arg1: i32) -> (i32, i32, i32) {
    %c0_i32 = arith.constant 0 : i32
    %c0_i32_0 = arith.constant 0 : i32
    %c0_i32_1 = arith.constant 0 : i32
    return %arg0, %c0_i32, %c0_i32_0 : i32, i32, i32
  }
  func.func @transform_1(%arg0: i32, %arg1: i32) -> (i32, i32, i32, i32) {
    %c0_i32 = arith.constant 0 : i32
    %c0_i32_0 = arith.constant 0 : i32
    %c0_i32_1 = arith.constant 0 : i32
    return %arg0, %c0_i32, %arg1, %c0_i32_0 : i32, i32, i32, i32
  }
  func.func @transform_2(%arg0: i32, %arg1: i32) -> (i32, i32) {
    %c0_i32 = arith.constant 0 : i32
    %c0_i32_0 = arith.constant 0 : i32
    %c0_i32_1 = arith.constant 0 : i32
    return %c0_i32, %c0_i32_0 : i32, i32
  }
  func.func @transform_3(%arg0: i32, %arg1: i32) -> (i32, i32) {
    %c0_i32 = arith.constant 0 : i32
    %c0_i32_0 = arith.constant 0 : i32
    %c0_i32_1 = arith.constant 0 : i32
    return %c0_i32, %c0_i32_0 : i32, i32
  }
  func.func @transform_4(%arg0: i32, %arg1: i32) -> (i32, i32) {
    %c0_i32 = arith.constant 0 : i32
    %c0_i32_0 = arith.constant 0 : i32
    %c0_i32_1 = arith.constant 0 : i32
    return %c0_i32, %c0_i32_0 : i32, i32
  }
  func.func @transform_5(%arg0: i32, %arg1: i32) -> (i32, i32) {
    %c0_i32 = arith.constant 0 : i32
    %c0_i32_0 = arith.constant 0 : i32
    %c0_i32_1 = arith.constant 0 : i32
    return %c0_i32, %c0_i32_0 : i32, i32
  }
  func.func @transform_6(%arg0: i32, %arg1: i32) -> (i32, i32) {
    %c0_i32 = arith.constant 0 : i32
    %c0_i32_0 = arith.constant 0 : i32
    %c0_i32_1 = arith.constant 0 : i32
    return %c0_i32, %c0_i32_0 : i32, i32
  }
  func.func @transform_7(%arg0: i32, %arg1: i32) -> (i32, i32) {
    %c0_i32 = arith.constant 0 : i32
    %c0_i32_0 = arith.constant 0 : i32
    %c0_i32_1 = arith.constant 0 : i32
    return %c0_i32, %c0_i32_0 : i32, i32
  }
  func.func @transform_8(%arg0: i32, %arg1: i32) -> (i32, i32) {
    %c0_i32 = arith.constant 0 : i32
    %c0_i32_0 = arith.constant 0 : i32
    %c0_i32_1 = arith.constant 0 : i32
    return %c0_i32, %c0_i32_0 : i32, i32
  }
  func.func @transform_9(%arg0: i32, %arg1: i32) -> (i32, i32) {
    %c0_i32 = arith.constant 0 : i32
    %c0_i32_0 = arith.constant 0 : i32
    %c0_i32_1 = arith.constant 0 : i32
    return %c0_i32, %c0_i32_0 : i32, i32
  }
  func.func @transform_10(%arg0: i32, %arg1: i32) -> (i32, i32) {
    %c0_i32 = arith.constant 0 : i32
    %c0_i32_0 = arith.constant 0 : i32
    %c0_i32_1 = arith.constant 0 : i32
    return %c0_i32, %c0_i32_0 : i32, i32
  }
  func.func @transform_11(%arg0: i32, %arg1: i32) -> (i32, i32) {
    %c0_i32 = arith.constant 0 : i32
    %c0_i32_0 = arith.constant 0 : i32
    %c0_i32_1 = arith.constant 0 : i32
    return %c0_i32, %c0_i32_0 : i32, i32
  }
  func.func @transform_12(%arg0: i32, %arg1: i32) -> (i32, i32) {
    %c0_i32 = arith.constant 0 : i32
    %c0_i32_0 = arith.constant 0 : i32
    %c0_i32_1 = arith.constant 0 : i32
    return %c0_i32, %c0_i32_0 : i32, i32
  }
  func.func @transform_13(%arg0: i32, %arg1: i32) -> (i32, i32) {
    %c0_i32 = arith.constant 0 : i32
    %c0_i32_0 = arith.constant 0 : i32
    %c0_i32_1 = arith.constant 0 : i32
    return %c0_i32, %c0_i32_0 : i32, i32
  }
  func.func @transform_14(%arg0: i32, %arg1: i32) -> (i32, i32) {
    %c0_i32 = arith.constant 0 : i32
    %c0_i32_0 = arith.constant 0 : i32
    %c0_i32_1 = arith.constant 0 : i32
    return %c0_i32, %c0_i32_0 : i32, i32
  }
  func.func @transform_15(%arg0: i32, %arg1: i32) -> (i32, i32) {
    %c0_i32 = arith.constant 0 : i32
    %c0_i32_0 = arith.constant 0 : i32
    %c0_i32_1 = arith.constant 0 : i32
    return %c0_i32, %c0_i32_0 : i32, i32
  }
  func.func @transform_16(%arg0: i32, %arg1: i32) -> (i32, i32, i32) {
    %c0_i32 = arith.constant 0 : i32
    %c0_i32_0 = arith.constant 0 : i32
    return %arg0, %arg1, %c0_i32 : i32, i32, i32
  }
}

</mosaic_0001>

<llo_original>
// kernel: tpu_custom_call.1
$region0: #{tpu_custom_call.1}
  #allocation0 [shape = 'u32[]', space=smem, size = 0x4, offset = 0x4, fixed_abs, tag = 'smem constant byte address 0x4 - core index']
  #allocation1 [shape = 'u32[144,128]{1,0:T(1,128)}', space=vmem, size = 0x12000, scoped, tag = 'internal scratch']
  #allocation2 [shape = 'f32[4,16,8]{2,1,0:T(8,128)}', space=vmem, size = 0x8000, scoped, tag = 'scratch operand']
  #allocation3 [shape = 'f32[4,16,8]{2,1,0:T(8,128)}', space=vmem, size = 0x8000, scoped, tag = 'scratch operand']
  %s0 = inlined_call_operand.vmem [shape: f32[2,16,32], index: 0, kind: input, shape index: {}]
  %s1 = inlined_call_operand.vmem [shape: bf16[2,4,16,16], index: 1, kind: input, shape index: {}]
  %s2 = inlined_call_operand.vmem [shape: f32[1,32], index: 2, kind: input, shape index: {}]
  %s3 = inlined_call_operand.vmem [shape: f32[1,32], index: 3, kind: input, shape index: {}]
  %s4 = inlined_call_operand.hbm [shape: f32[32,32], index: 4, kind: input, shape index: {}]
  %s5 = inlined_call_operand.vmem [shape: f32[1,32], index: 5, kind: input, shape index: {}]
  %s6 = inlined_call_operand.hbm [shape: f32[32,64], index: 6, kind: input, shape index: {}]
  %s7 = inlined_call_operand.vmem [shape: f32[1,64], index: 7, kind: input, shape index: {}]
  %s8 = inlined_call_operand.hbm [shape: f32[32,32], index: 8, kind: input, shape index: {}]
  %s9 = inlined_call_operand.vmem [shape: f32[1,32], index: 9, kind: input, shape index: {}]
  %s10 = inlined_call_operand.vmem [shape: f32[1,32], index: 10, kind: input, shape index: {}]
  %s11 = inlined_call_operand.vmem [shape: f32[1,32], index: 11, kind: input, shape index: {}]
  %s12 = inlined_call_operand.hbm [shape: f32[32,64], index: 12, kind: input, shape index: {}]
  %s13 = inlined_call_operand.vmem [shape: f32[1,64], index: 13, kind: input, shape index: {}]
  %s14 = inlined_call_operand.vmem [shape: f32[64,32], index: 14, kind: input, shape index: {}]
  %s15 = inlined_call_operand.vmem [shape: f32[1,32], index: 15, kind: input, shape index: {}]
  %s16 = inlined_call_operand.hbm [shape: f32[2,16,32], index: 16, kind: output, shape index: {}]
  %s17 = sld [smem:[#allocation0]]
  $region117: #{tpu_custom_call.1} parent=0
    _
  %s19 = ssub.s32 1, %s17
  %s20 = scalar_select 0, %s19, %s17
  $region1: #{tpu_custom_call.1} parent=0
    #allocation4 [shape = 'u8[16384]{0}', space=vmem, size = 0x4000, scoped, tag = 'input window, operand 4, single buffered']
    #allocation5 [shape = 's32[2]{0}', space=sflag, size = 0x8, scoped, tag = 'scoped memory for tpu_custom_call.1']
    #allocation6 [shape = 's32[2]{0}', space=sflag, size = 0x8, scoped, tag = 'scoped memory for tpu_custom_call.1']
    #allocation7 [shape = 'u8[16384]{0}', space=vmem, size = 0x4000, scoped, tag = 'input window, operand 6, single buffered']
    #allocation8 [shape = 's32[1]{0}', space=sflag, size = 0x4, scoped, tag = 'scoped memory for tpu_custom_call.1']
    #allocation9 [shape = 'u8[16384]{0}', space=vmem, size = 0x4000, scoped, tag = 'input window, operand 8, single buffered']
    #allocation10 [shape = 'u8[16384]{0}', space=vmem, size = 0x4000, scoped, tag = 'input window, operand 12, single buffered']
    #allocation11 [shape = 's32[1]{0}', space=sflag, size = 0x4, scoped, tag = 'scoped memory for tpu_custom_call.1']
    #allocation12 [shape = 'u8[16384]{0}', space=vmem, size = 0x4000, scoped, tag = 'output window, operand 0']
    %21 = vsyncpa [#allocation5], 0
    %22 = vsyncpa [#allocation8], 0
    %23 = vsyncpa [#allocation11], 0
    %24 = vsyncpa [#allocation6], 0
    %s25 = scalar_lea.sflag [#allocation6], 1
    %26 = vsyncpa %s25, 0
    loop: start=0, step=1, limit=4
    $region2: #{tpu_custom_call.1} parent=1 // loop_pre_header
      _
    $region3: #{tpu_custom_call.1} parent=1 // loop_header
      %s28 = sphi 0, %s32
      %p29 = scmp.ge.s32.totalorder %s28, 4
      %s35 = sphi 0, %s47
      %s36 = sphi 0, %s43
      %s37 = sphi 0, %s35
      %s38 = sphi 0, %s36
      %s39 = sphi 0, %s37
      %s40 = sphi 0, %s38
      %s50 = sphi 0, %s52
      %s53 = sphi 0, %s50
      %s54 = sphi 0, %s53
      %s70 = sphi 0, %s54
      %s78 = sphi 0, %s80
      %s81 = sphi 0, %s78
      %s82 = sphi 0, %s81
      %s98 = sphi 0, %s82
      %s102 = sphi 0, %s102
      %s104 = sphi 0, %s102
      %s105 = sphi 0, %s104
      %s119 = sphi 0, %s105
      %s123 = sphi 0, %s123
      %s125 = sphi 0, %s123
      %s126 = sphi 0, %s125
      %s140 = sphi 0, %s126
      %s144 = sphi 0, %s144
      %s146 = sphi 0, %s144
      %s147 = sphi 0, %s146
      %s161 = sphi 0, %s147
      %s165 = sphi 0, %s165
      %s167 = sphi 0, %s165
      %s168 = sphi 0, %s167
      %s182 = sphi 0, %s168
      %s186 = sphi 0, %s186
      %s188 = sphi 0, %s186
      %s189 = sphi 0, %s188
      %s203 = sphi 0, %s189
      %s207 = sphi 0, %s207
      %s209 = sphi 0, %s207
      %s210 = sphi 0, %s209
      %s224 = sphi 0, %s210
      %s228 = sphi 0, %s228
      %s230 = sphi 0, %s228
      %s231 = sphi 0, %s230
      %s245 = sphi 0, %s231
      %s249 = sphi 0, %s249
      %s251 = sphi 0, %s249
      %s252 = sphi 0, %s251
      %s266 = sphi 0, %s252
      %s270 = sphi 0, %s270
      %s272 = sphi 0, %s270
      %s273 = sphi 0, %s272
      %s287 = sphi 0, %s273
      %s291 = sphi 0, %s291
      %s293 = sphi 0, %s291
      %s294 = sphi 0, %s293
      %s308 = sphi 0, %s294
      %s312 = sphi 0, %s312
      %s314 = sphi 0, %s312
      %s315 = sphi 0, %s314
      %s329 = sphi 0, %s315
      %s333 = sphi 0, %s333
      %s335 = sphi 0, %s333
      %s336 = sphi 0, %s335
      %s350 = sphi 0, %s336
      %s354 = sphi 0, %s354
      %s356 = sphi 0, %s354
      %s357 = sphi 0, %s356
      %s371 = sphi 0, %s357
      %s375 = sphi 0, %s375
      %s377 = sphi 0, %s375
      %s378 = sphi 0, %s377
      %s392 = sphi 0, %s378
      %s400 = sphi 0, %s402
      %s403 = sphi 0, %s400
      %s404 = sphi 0, %s403
      %s420 = sphi 0, %s404
    $region4: #{tpu_custom_call.1} parent=1 // loop_header_branch
      %31 = sbr.rel (%p29) target = $region8
    $region5: #{tpu_custom_call.1} parent=1 // loop_body
      %s33 = ssub.s32 %s28, 1
      %s34 = ssub.s32 %s28, 2
      %s41 = sadd.s32 1, %s36
      %p42 = scmp.ge.s32.totalorder %s41, 1
      %s43 = scalar_select %p42, 0, %s41
      %s44 = sadd.s32 1, %s35
      %s45 = scalar_select %p42, %s44, %s35
      %p46 = scmp.ge.s32.totalorder %s45, 2
      %s47 = scalar_select %p46, 0, %s45
      %s48 = ssub.s32 %s35, %s47
      %p49 = scmp.eq.s32.totalorder %s48, 0
      %s51 = sadd.s32 %s50, 1
      %s52 = scalar_select %p49, %s50, %s51
      %p55 = pneg %p49
      %p56 = scmp.eq.s32.totalorder %s28, 1
      %p57 = por %p55, %p56
      %p58 = scmp.ne.s32.totalorder %s50, %s53
      %p59 = scmp.eq.s32.totalorder %s28, 0
      %p60 = por %p58, %p59
      %p61 = scmp.ne.s32.totalorder %s50, %s53
      %p62 = scmp.eq.s32.totalorder %s33, 1
      %p63 = por %p61, %p62
      %p64 = scmp.ne.s32.totalorder %s53, %s54
      %p65 = scmp.eq.s32.totalorder %s33, 0
      %p66 = por %p64, %p65
      %p67 = scmp.ne.s32.totalorder %s53, %s54
      %p68 = scmp.eq.s32.totalorder %s34, 1
      %p69 = por %p67, %p68
      %p71 = scmp.ne.s32.totalorder %s54, %s70
      %p72 = scmp.eq.s32.totalorder %s34, 0
      %p73 = por %p71, %p72
      %s74 = ssub.s32 %s35, %s47
      %s75 = ssub.s32 %s36, %s43
      %s76 = sor.u32 %s74, %s75
      %p77 = scmp.eq.s32.totalorder %s76, 0
      %s79 = sadd.s32 %s78, 1
      %s80 = scalar_select %p77, %s78, %s79
      %p83 = pneg %p77
      %p84 = scmp.eq.s32.totalorder %s28, 1
      %p85 = por %p83, %p84
      %p86 = scmp.ne.s32.totalorder %s78, %s81
      %p87 = scmp.eq.s32.totalorder %s28, 0
      %p88 = por %p86, %p87
      %p89 = scmp.ne.s32.totalorder %s78, %s81
      %p90 = scmp.eq.s32.totalorder %s33, 1
      %p91 = por %p89, %p90
      %p92 = scmp.ne.s32.totalorder %s81, %s82
      %p93 = scmp.eq.s32.totalorder %s33, 0
      %p94 = por %p92, %p93
      %p95 = scmp.ne.s32.totalorder %s81, %s82
      %p96 = scmp.eq.s32.totalorder %s34, 1
      %p97 = por %p95, %p96
      %p99 = scmp.ne.s32.totalorder %s82, %s98
      %p100 = scmp.eq.s32.totalorder %s34, 0
      %p101 = por %p99, %p100
      %s103 = sadd.s32 %s102, 1
      %p106 = scmp.eq.s32.totalorder %s28, 1
      %p107 = scmp.ne.s32.totalorder %s102, %s104
      %p108 = scmp.eq.s32.totalorder %s28, 0
      %p109 = por %p107, %p108
      %p110 = scmp.ne.s32.totalorder %s102, %s104
      %p111 = scmp.eq.s32.totalorder %s33, 1
      %p112 = por %p110, %p111
      %p113 = scmp.ne.s32.totalorder %s104, %s105
      %p114 = scmp.eq.s32.totalorder %s33, 0
      %p115 = por %p113, %p114
      %p116 = scmp.ne.s32.totalorder %s104, %s105
      %p117 = scmp.eq.s32.totalorder %s34, 1
      %p118 = por %p116, %p117
      %p120 = scmp.ne.s32.totalorder %s105, %s119
      %p121 = scmp.eq.s32.totalorder %s34, 0
      %p122 = por %p120, %p121
      %s124 = sadd.s32 %s123, 1
      %p127 = scmp.eq.s32.totalorder %s28, 1
      %p128 = scmp.ne.s32.totalorder %s123, %s125
      %p129 = scmp.eq.s32.totalorder %s28, 0
      %p130 = por %p128, %p129
      %p131 = scmp.ne.s32.totalorder %s123, %s125
      %p132 = scmp.eq.s32.totalorder %s33, 1
      %p133 = por %p131, %p132
      %p134 = scmp.ne.s32.totalorder %s125, %s126
      %p135 = scmp.eq.s32.totalorder %s33, 0
      %p136 = por %p134, %p135
      %p137 = scmp.ne.s32.totalorder %s125, %s126
      %p138 = scmp.eq.s32.totalorder %s34, 1
      %p139 = por %p137, %p138
      %p141 = scmp.ne.s32.totalorder %s126, %s140
      %p142 = scmp.eq.s32.totalorder %s34, 0
      %p143 = por %p141, %p142
      %s145 = sadd.s32 %s144, 1
      %p148 = scmp.eq.s32.totalorder %s28, 1
      %p149 = scmp.ne.s32.totalorder %s144, %s146
      %p150 = scmp.eq.s32.totalorder %s28, 0
      %p151 = por %p149, %p150
      %p152 = scmp.ne.s32.totalorder %s144, %s146
      %p153 = scmp.eq.s32.totalorder %s33, 1
      %p154 = por %p152, %p153
      %p155 = scmp.ne.s32.totalorder %s146, %s147
      %p156 = scmp.eq.s32.totalorder %s33, 0
      %p157 = por %p155, %p156
      %p158 = scmp.ne.s32.totalorder %s146, %s147
      %p159 = scmp.eq.s32.totalorder %s34, 1
      %p160 = por %p158, %p159
      %p162 = scmp.ne.s32.totalorder %s147, %s161
      %p163 = scmp.eq.s32.totalorder %s34, 0
      %p164 = por %p162, %p163
      %s166 = sadd.s32 %s165, 1
      %p169 = scmp.eq.s32.totalorder %s28, 1
      %p170 = scmp.ne.s32.totalorder %s165, %s167
      %p171 = scmp.eq.s32.totalorder %s28, 0
      %p172 = por %p170, %p171
      %p173 = scmp.ne.s32.totalorder %s165, %s167
      %p174 = scmp.eq.s32.totalorder %s33, 1
      %p175 = por %p173, %p174
      %p176 = scmp.ne.s32.totalorder %s167, %s168
      %p177 = scmp.eq.s32.totalorder %s33, 0
      %p178 = por %p176, %p177
      %p179 = scmp.ne.s32.totalorder %s167, %s168
      %p180 = scmp.eq.s32.totalorder %s34, 1
      %p181 = por %p179, %p180
      %p183 = scmp.ne.s32.totalorder %s168, %s182
      %p184 = scmp.eq.s32.totalorder %s34, 0
      %p185 = por %p183, %p184
      %s187 = sadd.s32 %s186, 1
      %p190 = scmp.eq.s32.totalorder %s28, 1
      %p191 = scmp.ne.s32.totalorder %s186, %s188
      %p192 = scmp.eq.s32.totalorder %s28, 0
      %p193 = por %p191, %p192
      %p194 = scmp.ne.s32.totalorder %s186, %s188
      %p195 = scmp.eq.s32.totalorder %s33, 1
      %p196 = por %p194, %p195
      %p197 = scmp.ne.s32.totalorder %s188, %s189
      %p198 = scmp.eq.s32.totalorder %s33, 0
      %p199 = por %p197, %p198
      %p200 = scmp.ne.s32.totalorder %s188, %s189
      %p201 = scmp.eq.s32.totalorder %s34, 1
      %p202 = por %p200, %p201
      %p204 = scmp.ne.s32.totalorder %s189, %s203
      %p205 = scmp.eq.s32.totalorder %s34, 0
      %p206 = por %p204, %p205
      %s208 = sadd.s32 %s207, 1
      %p211 = scmp.eq.s32.totalorder %s28, 1
      %p212 = scmp.ne.s32.totalorder %s207, %s209
      %p213 = scmp.eq.s32.totalorder %s28, 0
      %p214 = por %p212, %p213
      %p215 = scmp.ne.s32.totalorder %s207, %s209
      %p216 = scmp.eq.s32.totalorder %s33, 1
      %p217 = por %p215, %p216
      %p218 = scmp.ne.s32.totalorder %s209, %s210
      %p219 = scmp.eq.s32.totalorder %s33, 0
      %p220 = por %p218, %p219
      %p221 = scmp.ne.s32.totalorder %s209, %s210
      %p222 = scmp.eq.s32.totalorder %s34, 1
      %p223 = por %p221, %p222
      %p225 = scmp.ne.s32.totalorder %s210, %s224
      %p226 = scmp.eq.s32.totalorder %s34, 0
      %p227 = por %p225, %p226
      %s229 = sadd.s32 %s228, 1
      %p232 = scmp.eq.s32.totalorder %s28, 1
      %p233 = scmp.ne.s32.totalorder %s228, %s230
      %p234 = scmp.eq.s32.totalorder %s28, 0
      %p235 = por %p233, %p234
      %p236 = scmp.ne.s32.totalorder %s228, %s230
      %p237 = scmp.eq.s32.totalorder %s33, 1
      %p238 = por %p236, %p237
      %p239 = scmp.ne.s32.totalorder %s230, %s231
      %p240 = scmp.eq.s32.totalorder %s33, 0
      %p241 = por %p239, %p240
      %p242 = scmp.ne.s32.totalorder %s230, %s231
      %p243 = scmp.eq.s32.totalorder %s34, 1
      %p244 = por %p242, %p243
      %p246 = scmp.ne.s32.totalorder %s231, %s245
      %p247 = scmp.eq.s32.totalorder %s34, 0
      %p248 = por %p246, %p247
      %s250 = sadd.s32 %s249, 1
      %p253 = scmp.eq.s32.totalorder %s28, 1
      %p254 = scmp.ne.s32.totalorder %s249, %s251
      %p255 = scmp.eq.s32.totalorder %s28, 0
      %p256 = por %p254, %p255
      %p257 = scmp.ne.s32.totalorder %s249, %s251
      %p258 = scmp.eq.s32.totalorder %s33, 1
      %p259 = por %p257, %p258
      %p260 = scmp.ne.s32.totalorder %s251, %s252
      %p261 = scmp.eq.s32.totalorder %s33, 0
      %p262 = por %p260, %p261
      %p263 = scmp.ne.s32.totalorder %s251, %s252
      %p264 = scmp.eq.s32.totalorder %s34, 1
      %p265 = por %p263, %p264
      %p267 = scmp.ne.s32.totalorder %s252, %s266
      %p268 = scmp.eq.s32.totalorder %s34, 0
      %p269 = por %p267, %p268
      %s271 = sadd.s32 %s270, 1
      %p274 = scmp.eq.s32.totalorder %s28, 1
      %p275 = scmp.ne.s32.totalorder %s270, %s272
      %p276 = scmp.eq.s32.totalorder %s28, 0
      %p277 = por %p275, %p276
      %p278 = scmp.ne.s32.totalorder %s270, %s272
      %p279 = scmp.eq.s32.totalorder %s33, 1
      %p280 = por %p278, %p279
      %p281 = scmp.ne.s32.totalorder %s272, %s273
      %p282 = scmp.eq.s32.totalorder %s33, 0
      %p283 = por %p281, %p282
      %p284 = scmp.ne.s32.totalorder %s272, %s273
      %p285 = scmp.eq.s32.totalorder %s34, 1
      %p286 = por %p284, %p285
      %p288 = scmp.ne.s32.totalorder %s273, %s287
      %p289 = scmp.eq.s32.totalorder %s34, 0
      %p290 = por %p288, %p289
      %s292 = sadd.s32 %s291, 1
      %p295 = scmp.eq.s32.totalorder %s28, 1
      %p296 = scmp.ne.s32.totalorder %s291, %s293
      %p297 = scmp.eq.s32.totalorder %s28, 0
      %p298 = por %p296, %p297
      %p299 = scmp.ne.s32.totalorder %s291, %s293
      %p300 = scmp.eq.s32.totalorder %s33, 1
      %p301 = por %p299, %p300
      %p302 = scmp.ne.s32.totalorder %s293, %s294
      %p303 = scmp.eq.s32.totalorder %s33, 0
      %p304 = por %p302, %p303
      %p305 = scmp.ne.s32.totalorder %s293, %s294
      %p306 = scmp.eq.s32.totalorder %s34, 1
      %p307 = por %p305, %p306
      %p309 = scmp.ne.s32.totalorder %s294, %s308
      %p310 = scmp.eq.s32.totalorder %s34, 0
      %p311 = por %p309, %p310
      %s313 = sadd.s32 %s312, 1
      %p316 = scmp.eq.s32.totalorder %s28, 1
      %p317 = scmp.ne.s32.totalorder %s312, %s314
      %p318 = scmp.eq.s32.totalorder %s28, 0
      %p319 = por %p317, %p318
      %p320 = scmp.ne.s32.totalorder %s312, %s314
      %p321 = scmp.eq.s32.totalorder %s33, 1
      %p322 = por %p320, %p321
      %p323 = scmp.ne.s32.totalorder %s314, %s315
      %p324 = scmp.eq.s32.totalorder %s33, 0
      %p325 = por %p323, %p324
      %p326 = scmp.ne.s32.totalorder %s314, %s315
      %p327 = scmp.eq.s32.totalorder %s34, 1
      %p328 = por %p326, %p327
      %p330 = scmp.ne.s32.totalorder %s315, %s329
      %p331 = scmp.eq.s32.totalorder %s34, 0
      %p332 = por %p330, %p331
      %s334 = sadd.s32 %s333, 1
      %p337 = scmp.eq.s32.totalorder %s28, 1
      %p338 = scmp.ne.s32.totalorder %s333, %s335
      %p339 = scmp.eq.s32.totalorder %s28, 0
      %p340 = por %p338, %p339
      %p341 = scmp.ne.s32.totalorder %s333, %s335
      %p342 = scmp.eq.s32.totalorder %s33, 1
      %p343 = por %p341, %p342
      %p344 = scmp.ne.s32.totalorder %s335, %s336
      %p345 = scmp.eq.s32.totalorder %s33, 0
      %p346 = por %p344, %p345
      %p347 = scmp.ne.s32.totalorder %s335, %s336
      %p348 = scmp.eq.s32.totalorder %s34, 1
      %p349 = por %p347, %p348
      %p351 = scmp.ne.s32.totalorder %s336, %s350
      %p352 = scmp.eq.s32.totalorder %s34, 0
      %p353 = por %p351, %p352
      %s355 = sadd.s32 %s354, 1
      %p358 = scmp.eq.s32.totalorder %s28, 1
      %p359 = scmp.ne.s32.totalorder %s354, %s356
      %p360 = scmp.eq.s32.totalorder %s28, 0
      %p361 = por %p359, %p360
      %p362 = scmp.ne.s32.totalorder %s354, %s356
      %p363 = scmp.eq.s32.totalorder %s33, 1
      %p364 = por %p362, %p363
      %p365 = scmp.ne.s32.totalorder %s356, %s357
      %p366 = scmp.eq.s32.totalorder %s33, 0
      %p367 = por %p365, %p366
      %p368 = scmp.ne.s32.totalorder %s356, %s357
      %p369 = scmp.eq.s32.totalorder %s34, 1
      %p370 = por %p368, %p369
      %p372 = scmp.ne.s32.totalorder %s357, %s371
      %p373 = scmp.eq.s32.totalorder %s34, 0
      %p374 = por %p372, %p373
      %s376 = sadd.s32 %s375, 1
      %p379 = scmp.eq.s32.totalorder %s28, 1
      %p380 = scmp.ne.s32.totalorder %s375, %s377
      %p381 = scmp.eq.s32.totalorder %s28, 0
      %p382 = por %p380, %p381
      %p383 = scmp.ne.s32.totalorder %s375, %s377
      %p384 = scmp.eq.s32.totalorder %s33, 1
      %p385 = por %p383, %p384
      %p386 = scmp.ne.s32.totalorder %s377, %s378
      %p387 = scmp.eq.s32.totalorder %s33, 0
      %p388 = por %p386, %p387
      %p389 = scmp.ne.s32.totalorder %s377, %s378
      %p390 = scmp.eq.s32.totalorder %s34, 1
      %p391 = por %p389, %p390
      %p393 = scmp.ne.s32.totalorder %s378, %s392
      %p394 = scmp.eq.s32.totalorder %s34, 0
      %p395 = por %p393, %p394
      %s396 = ssub.s32 %s35, %s47
      %s397 = ssub.s32 %s36, %s43
      %s398 = sor.u32 %s396, %s397
      %p399 = scmp.eq.s32.totalorder %s398, 0
      %s401 = sadd.s32 %s400, 1
      %s402 = scalar_select %p399, %s400, %s401
      %p405 = pneg %p399
      %p406 = scmp.eq.s32.totalorder %s28, 1
      %p407 = por %p405, %p406
      %p408 = scmp.ne.s32.totalorder %s400, %s403
      %p409 = scmp.eq.s32.totalorder %s28, 0
      %p410 = por %p408, %p409
      %p411 = scmp.ne.s32.totalorder %s400, %s403
      %p412 = scmp.eq.s32.totalorder %s33, 1
      %p413 = por %p411, %p412
      %p414 = scmp.ne.s32.totalorder %s403, %s404
      %p415 = scmp.eq.s32.totalorder %s33, 0
      %p416 = por %p414, %p415
      %p417 = scmp.ne.s32.totalorder %s403, %s404
      %p418 = scmp.eq.s32.totalorder %s34, 1
      %p419 = por %p417, %p418
      %p421 = scmp.ne.s32.totalorder %s404, %s420
      %p422 = scmp.eq.s32.totalorder %s34, 0
      %p423 = por %p421, %p422
      %p424 = scmp.le.s32.totalorder 1, %s28
      %p425 = scmp.lt.s32.totalorder %s28, 3
      %p426 = pnand %p424, %p425
      %p427 = pneg %p426
      // Predicated region
      $region9: #{tpu_custom_call.1} parent=5 // pred_check
        _
      $region10: #{tpu_custom_call.1} parent=5 // pred_check_branch
        %429 = sbr.rel (%p426) target = $region12
      $region11: #{tpu_custom_call.1} parent=5 // pred_region
        %s430 = ssub.s32 %s28, 1
        // Predicated region
        $region13: #{tpu_custom_call.1} parent=11 // pred_check
          %p431 = pneg %p115
        $region14: #{tpu_custom_call.1} parent=11 // pred_check_branch
          %433 = sbr.rel (%p431) target = $region16
        $region15: #{tpu_custom_call.1} parent=11 // pred_region
          _
        $region16: #{tpu_custom_call.1} parent=11 // pred_fallthru
          _
        // Predicated region
        $region17: #{tpu_custom_call.1} parent=11 // pred_check
          %p434 = pneg %p136
        $region18: #{tpu_custom_call.1} parent=11 // pred_check_branch
          %436 = sbr.rel (%p434) target = $region20
        $region19: #{tpu_custom_call.1} parent=11 // pred_region
          _
        $region20: #{tpu_custom_call.1} parent=11 // pred_fallthru
          _
        // Predicated region
        $region21: #{tpu_custom_call.1} parent=11 // pred_check
          %p437 = pneg %p157
        $region22: #{tpu_custom_call.1} parent=11 // pred_check_branch
          %439 = sbr.rel (%p437) target = $region24
        $region23: #{tpu_custom_call.1} parent=11 // pred_region
          %s441 = ssub.s32 512, 512
          %442 = vsyncadd [#allocation5], %s441
          %s443 = sshll.u32 [#allocation4], 4
          %s444 = int_to_ptr.vmem [resolvable:$true] %s443
          %449 = dma.hbm_to_vmem [thread:$0]  %s4, 512, %s444, [#allocation5], 128, 128, 8
        $region24: #{tpu_custom_call.1} parent=11 // pred_fallthru
          _
        // Predicated region
        $region25: #{tpu_custom_call.1} parent=11 // pred_check
          %p450 = pneg %p178
        $region26: #{tpu_custom_call.1} parent=11 // pred_check_branch
          %452 = sbr.rel (%p450) target = $region28
        $region27: #{tpu_custom_call.1} parent=11 // pred_region
          _
        $region28: #{tpu_custom_call.1} parent=11 // pred_fallthru
          _
        // Predicated region
        $region29: #{tpu_custom_call.1} parent=11 // pred_check
          %p453 = pneg %p199
        $region30: #{tpu_custom_call.1} parent=11 // pred_check_branch
          %455 = sbr.rel (%p453) target = $region32
        $region31: #{tpu_custom_call.1} parent=11 // pred_region
          %s457 = ssub.s32 512, 512
          %458 = vsyncadd [#allocation8], %s457
          %s459 = sshll.u32 [#allocation7], 4
          %s460 = int_to_ptr.vmem [resolvable:$true] %s459
          %465 = dma.hbm_to_vmem [thread:$0]  %s6, 512, %s460, [#allocation8], 128, 128, 8
        $region32: #{tpu_custom_call.1} parent=11 // pred_fallthru
          _
        // Predicated region
        $region33: #{tpu_custom_call.1} parent=11 // pred_check
          %p466 = pneg %p220
        $region34: #{tpu_custom_call.1} parent=11 // pred_check_branch
          %468 = sbr.rel (%p466) target = $region36
        $region35: #{tpu_custom_call.1} parent=11 // pred_region
          _
        $region36: #{tpu_custom_call.1} parent=11 // pred_fallthru
          _
        // Predicated region
        $region37: #{tpu_custom_call.1} parent=11 // pred_check
          %p469 = pneg %p241
        $region38: #{tpu_custom_call.1} parent=11 // pred_check_branch
          %471 = sbr.rel (%p469) target = $region40
        $region39: #{tpu_custom_call.1} parent=11 // pred_region
          %s473 = ssub.s32 512, 512
          %474 = vsyncadd [#allocation8], %s473
          %s475 = sshll.u32 [#allocation9], 4
          %s476 = int_to_ptr.vmem [resolvable:$true] %s475
          %481 = dma.hbm_to_vmem [thread:$0]  %s8, 512, %s476, [#allocation8], 128, 128, 8
        $region40: #{tpu_custom_call.1} parent=11 // pred_fallthru
          _
        // Predicated region
        $region41: #{tpu_custom_call.1} parent=11 // pred_check
          %p482 = pneg %p262
        $region42: #{tpu_custom_call.1} parent=11 // pred_check_branch
          %484 = sbr.rel (%p482) target = $region44
        $region43: #{tpu_custom_call.1} parent=11 // pred_region
          _
        $region44: #{tpu_custom_call.1} parent=11 // pred_fallthru
          _
        // Predicated region
        $region45: #{tpu_custom_call.1} parent=11 // pred_check
          %p485 = pneg %p283
        $region46: #{tpu_custom_call.1} parent=11 // pred_check_branch
          %487 = sbr.rel (%p485) target = $region48
        $region47: #{tpu_custom_call.1} parent=11 // pred_region
          _
        $region48: #{tpu_custom_call.1} parent=11 // pred_fallthru
          _
        // Predicated region
        $region49: #{tpu_custom_call.1} parent=11 // pred_check
          %p488 = pneg %p304
        $region50: #{tpu_custom_call.1} parent=11 // pred_check_branch
          %490 = sbr.rel (%p488) target = $region52
        $region51: #{tpu_custom_call.1} parent=11 // pred_region
          _
        $region52: #{tpu_custom_call.1} parent=11 // pred_fallthru
          _
        // Predicated region
        $region53: #{tpu_custom_call.1} parent=11 // pred_check
          %p491 = pneg %p325
        $region54: #{tpu_custom_call.1} parent=11 // pred_check_branch
          %493 = sbr.rel (%p491) target = $region56
        $region55: #{tpu_custom_call.1} parent=11 // pred_region
          %s495 = ssub.s32 512, 512
          %496 = vsyncadd [#allocation11], %s495
          %s497 = sshll.u32 [#allocation10], 4
          %s498 = int_to_ptr.vmem [resolvable:$true] %s497
          %503 = dma.hbm_to_vmem [thread:$0]  %s12, 512, %s498, [#allocation11], 128, 128, 8
        $region56: #{tpu_custom_call.1} parent=11 // pred_fallthru
          _
        // Predicated region
        $region57: #{tpu_custom_call.1} parent=11 // pred_check
          %p504 = pneg %p346
        $region58: #{tpu_custom_call.1} parent=11 // pred_check_branch
          %506 = sbr.rel (%p504) target = $region60
        $region59: #{tpu_custom_call.1} parent=11 // pred_region
          _
        $region60: #{tpu_custom_call.1} parent=11 // pred_fallthru
          _
        // Predicated region
        $region61: #{tpu_custom_call.1} parent=11 // pred_check
          %p507 = pneg %p367
        $region62: #{tpu_custom_call.1} parent=11 // pred_check_branch
          %509 = sbr.rel (%p507) target = $region64
        $region63: #{tpu_custom_call.1} parent=11 // pred_region
          _
        $region64: #{tpu_custom_call.1} parent=11 // pred_fallthru
          _
        // Predicated region
        $region65: #{tpu_custom_call.1} parent=11 // pred_check
          %p510 = pneg %p388
        $region66: #{tpu_custom_call.1} parent=11 // pred_check_branch
          %512 = sbr.rel (%p510) target = $region68
        $region67: #{tpu_custom_call.1} parent=11 // pred_region
          _
        $region68: #{tpu_custom_call.1} parent=11 // pred_fallthru
          _
      $region12: #{tpu_custom_call.1} parent=5 // pred_fallthru
        _
      %p513 = scmp.lt.s32.totalorder %s28, 2
      // Predicated region
      $region69: #{tpu_custom_call.1} parent=5 // pred_check
        %p514 = pneg %p513
      $region70: #{tpu_custom_call.1} parent=5 // pred_check_branch
        %516 = sbr.rel (%p514) target = $region72
      $region71: #{tpu_custom_call.1} parent=5 // pred_region
        // Predicated region
        $region73: #{tpu_custom_call.1} parent=71 // pred_check
          %p517 = pneg %p60
        $region74: #{tpu_custom_call.1} parent=71 // pred_check_branch
          %519 = sbr.rel (%p517) target = $region76
        $region75: #{tpu_custom_call.1} parent=71 // pred_region
          %p520 = scmp.lt.s32.totalorder %s35, 1
          %s521 = scalar_select %p520, %s35, 1
          %s522 = smul.addr %s521, 2
          %s523 = smul.addr %s522, 8
          %s524 = scalar_lea.vmem %s0, %s523
        $region76: #{tpu_custom_call.1} parent=71 // pred_fallthru
          _
        // Predicated region
        $region77: #{tpu_custom_call.1} parent=71 // pred_check
          %p525 = pneg %p88
        $region78: #{tpu_custom_call.1} parent=71 // pred_check_branch
          %527 = sbr.rel (%p525) target = $region80
        $region79: #{tpu_custom_call.1} parent=71 // pred_region
          %s528 = smul.u32 2, %s36
          %p529 = scmp.lt.s32.totalorder %s35, 1
          %s530 = scalar_select %p529, %s35, 1
          %p531 = scmp.lt.s32.totalorder %s528, 1
          %s532 = scalar_select %p531, %s528, 1
          %s533 = smul.addr %s530, 8
          %s534 = sadd.s32 %s532, %s533
          %s535 = smul.addr %s534, 4
          %s536 = scalar_lea.vmem %s1, %s535
          %s537 = smul.u32 2, %s36
        $region80: #{tpu_custom_call.1} parent=71 // pred_fallthru
          _
      $region72: #{tpu_custom_call.1} parent=5 // pred_fallthru
        _
      %p538 = scmp.le.s32.totalorder 1, %s28
      %p539 = scmp.lt.s32.totalorder %s28, 3
      %p540 = pnand %p538, %p539
      %p541 = pneg %p540
      // Predicated region
      $region81: #{tpu_custom_call.1} parent=5 // pred_check
        _
      $region82: #{tpu_custom_call.1} parent=5 // pred_check_branch
        %543 = sbr.rel (%p540) target = $region84
      $region83: #{tpu_custom_call.1} parent=5 // pred_region
        %s544 = ssub.s32 %s28, 1
        // Predicated region
        $region85: #{tpu_custom_call.1} parent=83 // pred_check
          %p545 = pneg %p157
        $region86: #{tpu_custom_call.1} parent=83 // pred_check_branch
          %547 = sbr.rel (%p545) target = $region88
        $region87: #{tpu_custom_call.1} parent=83 // pred_region
          %548 = dma.done [#allocation5], 512
        $region88: #{tpu_custom_call.1} parent=83 // pred_fallthru
          _
        // Predicated region
        $region89: #{tpu_custom_call.1} parent=83 // pred_check
          %p549 = pneg %p199
        $region90: #{tpu_custom_call.1} parent=83 // pred_check_branch
          %551 = sbr.rel (%p549) target = $region92
        $region91: #{tpu_custom_call.1} parent=83 // pred_region
          %552 = dma.done [#allocation8], 512
        $region92: #{tpu_custom_call.1} parent=83 // pred_fallthru
          _
        // Predicated region
        $region93: #{tpu_custom_call.1} parent=83 // pred_check
          %p553 = pneg %p241
        $region94: #{tpu_custom_call.1} parent=83 // pred_check_branch
          %555 = sbr.rel (%p553) target = $region96
        $region95: #{tpu_custom_call.1} parent=83 // pred_region
          %556 = dma.done [#allocation8], 512
        $region96: #{tpu_custom_call.1} parent=83 // pred_fallthru
          _
        // Predicated region
        $region97: #{tpu_custom_call.1} parent=83 // pred_check
          %p557 = pneg %p325
        $region98: #{tpu_custom_call.1} parent=83 // pred_check_branch
          %559 = sbr.rel (%p557) target = $region100
        $region99: #{tpu_custom_call.1} parent=83 // pred_region
          %560 = dma.done [#allocation11], 512
        $region100: #{tpu_custom_call.1} parent=83 // pred_fallthru
          _
        %p561 = scmp.lt.s32.totalorder %s37, 1
        %s562 = scalar_select %p561, %s37, 1
        %s563 = smul.addr %s562, 2
        %s564 = smul.addr %s563, 8
        %s565 = scalar_lea.vmem %s0, %s564
        %p566 = pneg %p66
        %p567 = pneg %p63
        %s568 = smul.u32 2, %s38
        %p569 = scmp.lt.s32.totalorder %s37, 1
        %s570 = scalar_select %p569, %s37, 1
        %p571 = scmp.lt.s32.totalorder %s568, 1
        %s572 = scalar_select %p571, %s568, 1
        %s573 = smul.addr %s570, 8
        %s574 = sadd.s32 %s572, %s573
        %s575 = smul.addr %s574, 4
        %s576 = scalar_lea.vmem %s1, %s575
        %p577 = pneg %p94
        %p578 = pneg %p91
        %p579 = pneg %p115
        %p580 = pneg %p112
        %p581 = pneg %p136
        %p582 = pneg %p133
        %p583 = pneg %p157
        %p584 = pneg %p154
        %p585 = pneg %p178
        %p586 = pneg %p175
        %p587 = pneg %p199
        %p588 = pneg %p196
        %p589 = pneg %p220
        %p590 = pneg %p217
        %p591 = pneg %p241
        %p592 = pneg %p238
        %p593 = pneg %p262
        %p594 = pneg %p259
        %p595 = pneg %p283
        %p596 = pneg %p280
        %p597 = pneg %p304
        %p598 = pneg %p301
        %p599 = pneg %p325
        %p600 = pneg %p322
        %p601 = pneg %p346
        %p602 = pneg %p343
        %p603 = pneg %p367
        %p604 = pneg %p364
        %p605 = pneg %p388
        %p606 = pneg %p385
        %p607 = pneg %p416
        %p608 = pneg %p413
        %s609 = sand.u32 %s403, 1
        %s610 = scalar_lea.sflag [#allocation6], %s609
        %s611 = sand.u32 %s403, 1
        %s612 = smul.addr %s611, 16
        %s613 = scalar_lea.vmem [#allocation12], %s612
        %p614 = scmp.lt.s32.totalorder %s37, 1
        %s615 = scalar_select %p614, %s37, 1
        %s616 = smul.addr %s615, 2
        %s617 = smul.addr %s616, 8
        %s618 = scalar_lea.vmem %s0, %s617
        %s619 = smul.u32 2, %s38
        %p620 = scmp.lt.s32.totalorder %s37, 1
        %s621 = scalar_select %p620, %s37, 1
        %p622 = scmp.lt.s32.totalorder %s619, 1
        %s623 = scalar_select %p622, %s619, 1
        %s624 = smul.addr %s621, 8
        %s625 = sadd.s32 %s623, %s624
        %s626 = smul.addr %s625, 4
        %s627 = scalar_lea.vmem %s1, %s626
        %s628 = smul.u32 2, %s38
        %s629 = smul.u32 2, %s38
        %p630 = scmp.eq.s32.totalorder %s38, 0
        // Predicated region
        $region101: #{tpu_custom_call.1} parent=83 // pred_check
          %p631 = pneg %p630
        $region102: #{tpu_custom_call.1} parent=83 // pred_check_branch
          %633 = sbr.rel (%p631) target = $region104
        $region103: #{tpu_custom_call.1} parent=83 // pred_region
          %v634 = vld [vmem:[%s618] sm:$0xff]
          %v635 = vld [vmem:[%s618 + $0x8] sm:$0xff]
          %v636 = vld [vmem:[%s2] sm:$0x1]
          %v637 = vld [vmem:[%s3] sm:$0x1]
          %vm638 = vcmask 261120
          %v639 = vsel %vm638, %v634, 0.0
          %640 = vadd.xlane.f32.xlu0 %v639
          %v641 = vpop.xlane.xlu0 %640
          %v642 = vsel %vm638, %v635, 0.0
          %643 = vadd.xlane.f32.xlu0 %v642
          %v644 = vpop.xlane.xlu0 %643
          %v645 = vrcp.pop 32.0
          %v646 = vmul.f32 %v641, %v645
          %v647 = vmul.f32 %v644, %v645
          %v648 = vsub.f32 %v634, %v646
          %v649 = vsub.f32 %v635, %v647
          %v650 = vmul.f32 %v648, %v648
          %v651 = vmul.f32 %v649, %v649
          %v652 = vsel %vm638, %v650, 0.0
          %653 = vadd.xlane.f32.xlu0 %v652
          %v654 = vpop.xlane.xlu0 %653
          %v655 = vsel %vm638, %v651, 0.0
          %656 = vadd.xlane.f32.xlu0 %v655
          %v657 = vpop.xlane.xlu0 %656
          %v658 = vmul.f32 %v654, %v645
          %v659 = vmul.f32 %v657, %v645
          %v660 = vadd.f32 %v658, 1e-05
          %v661 = vadd.f32 %v659, 1e-05
          %v662 = vrsqrt.pop %v660
          %v663 = vrsqrt.pop %v661
          %v664 = vmul.f32 %v648, %v662
          %v665 = vmul.f32 %v649, %v663
          %v667 = vlaneseq
          %v668 = vshrl.u32 %v667, 7
          %v669 = vsub.s32 0, %v668
          %v670 = vrot.slane %v636, %v669
          %v672 = vmul.f32 %v664, %v670
          %v673 = vmul.f32 %v665, %v670
          %v675 = vlaneseq
          %v676 = vshrl.u32 %v675, 7
          %v677 = vsub.s32 0, %v676
          %v678 = vrot.slane %v637, %v677
          %v680 = vadd.f32 %v672, %v678
          %v681 = vadd.f32 %v673, %v678
          %v682 = vld [vmem:[#allocation7] sm:$0xff]
          %v683 = vld [vmem:[#allocation7 + $0x8] sm:$0xff]
          %v684 = vld [vmem:[#allocation7 + $0x10] sm:$0xff]
          %v685 = vld [vmem:[#allocation7 + $0x18] sm:$0xff]
          %v686 = vld [vmem:[%s7] sm:$0x1]
          %v688 = vlaneseq
          %v689 = vshrl.u32 %v688, 7
          %v690 = vsub.s32 0, %v689
          %v691 = vrot.slane %v686, %v690
          %v694 = vsel %vm638, %v680, 0
          %v697 = vsel %vm638, %v681, 0
          %699 = vmatprep.subr.mxu0 0.0
          %700 = vmatpush1.msra.mxu0 0.0
          %701 = vmatprep.subr.mxu0 0.0
          %702 = vmatpush1.msra.mxu0 0.0
          %703 = vmatprep.subr.mxu0 0.0
          %704 = vmatpush1.msra.mxu0 0.0
          %705 = vmatprep.subr.mxu0 0.0
          %706 = vmatpush1.msra.mxu0 0.0
          %707 = vmatprep.subr.mxu0 0.0
          %708 = vmatpush1.msra.mxu0 0.0
          %709 = vmatprep.subr.mxu0 0.0
          %710 = vmatpush1.msra.mxu0 0.0
          %711 = vmatprep.subr.mxu0 0.0
          %712 = vmatpush1.msra.mxu0 0.0
          %713 = vmatprep.subr.mxu0 0.0
          %714 = vmatpush1.msra.mxu0 0.0
          %715 = vmatprep.subr.mxu0 0.0
          %716 = vmatpush1.msra.mxu0 0.0
          %717 = vmatprep.subr.mxu0 0.0
          %718 = vmatpush1.msra.mxu0 0.0
          %719 = vmatprep.subr.mxu0 0.0
          %720 = vmatpush1.msra.mxu0 0.0
          %721 = vmatprep.subr.mxu0 0.0
          %722 = vmatpush1.msra.mxu0 0.0
          %723 = vmatprep.subr.mxu0 0.0
          %724 = vmatpush1.msra.mxu0 %v685
          %725 = vmatprep.subr.mxu0 0.0
          %726 = vmatpush1.msra.mxu0 %v684
          %727 = vmatprep.subr.mxu0 0.0
          %728 = vmatpush1.msra.mxu0 %v683
          %729 = vmatprep.subr.mxu0 0.0
          %730 = vmatpush1.msra.mxu0 %v682
          %731 = vmatprep.subr.mxu0 0.0
          %732 = vmatpush2.msra.mxu0 0.0
          %733 = vmatprep.subr.mxu0 0.0
          %734 = vmatpush2.msra.mxu0 0.0
          %735 = vmatprep.subr.mxu0 0.0
          %736 = vmatpush2.msra.mxu0 0.0
          %737 = vmatprep.subr.mxu0 0.0
          %738 = vmatpush2.msra.mxu0 0.0
          %739 = vmatprep.subr.mxu0 0.0
          %740 = vmatpush2.msra.mxu0 0.0
          %741 = vmatprep.subr.mxu0 0.0
          %742 = vmatpush2.msra.mxu0 0.0
          %743 = vmatprep.subr.mxu0 0.0
          %744 = vmatpush2.msra.mxu0 0.0
          %745 = vmatprep.subr.mxu0 0.0
          %746 = vmatpush2.msra.mxu0 0.0
          %747 = vmatprep.subr.mxu0 0.0
          %748 = vmatpush2.msra.mxu0 0.0
          %749 = vmatprep.subr.mxu0 0.0
          %750 = vmatpush2.msra.mxu0 0.0
          %751 = vmatprep.subr.mxu0 0.0
          %752 = vmatpush2.msra.mxu0 0.0
          %753 = vmatprep.subr.mxu0 0.0
          %754 = vmatpush2.msra.mxu0 0.0
          %755 = vmatprep.subr.mxu0 0.0
          %756 = vmatpush2.msra.mxu0 0.0
          %757 = vmatprep.subr.mxu0 0.0
          %758 = vmatpush2.msra.mxu0 0.0
          %759 = vmatprep.subr.mxu0 0.0
          %760 = vmatpush2.msra.mxu0 0.0
          %761 = vmatprep.subr.mxu0 0.0
          %762 = vmatpush2.msra.mxu0 0.0
          %763 = vmatprep.mubr.f32.mxu0 0.0
          %764 = vmatmul.mubr.f32.gmra.mxu0 %v694
          %v765 = vpop.f32.mrf.mxu0
          %v766 = vadd.f32 %v691, %v765
          %v767 = vpop.f32.mrf.mxu0
          %768 = vmatprep.mubr.f32.mxu0 0.0
          %769 = vmatmul.mubr.f32.gmra.mxu0 %v697
          %v770 = vpop.f32.mrf.mxu0
          %v771 = vadd.f32 %v691, %v770
          %v772 = vpop.f32.mrf.mxu0
          %773 = vdwg.mxu0
          %776 = vrot.lane.b32.xlu0 %v766, 120
          %v777 = vpop.permute.xlu0 %776
          %778 = vrot.lane.b32.xlu0 %v771, 120
          %v779 = vpop.permute.xlu0 %778
          %782 = vrot.lane.b32.xlu0 %v766, 112
          %v783 = vpop.permute.xlu0 %782
          %784 = vrot.lane.b32.xlu0 %v771, 112
          %v785 = vpop.permute.xlu0 %784
          %788 = vrot.lane.b32.xlu0 %v766, 104
          %v789 = vpop.permute.xlu0 %788
          %790 = vrot.lane.b32.xlu0 %v771, 104
          %v791 = vpop.permute.xlu0 %790
          %v794 = vcombine.low %v766, %v783
          %v795 = vcombine.high %v766, %v783
          %v797 = vunpack.c.l.s4 1983009808
          %v798 = vunpack.c.0.s8 %v797
          %v799 = vlaneseq
          %v800 = vshrl.u32 %v799, 7
          %v801 = vsub.s32 %v798, %v800
          %v802 = vrot.slane %v794, %v801
          %v804 = vunpack.c.l.s4 1983009808
          %v805 = vunpack.c.0.s8 %v804
          %v806 = vlaneseq
          %v807 = vshrl.u32 %v806, 7
          %v808 = vsub.s32 %v805, %v807
          %v809 = vrot.slane %v795, %v808
          %v810 = vcombine.low %v777, %v789
          %v811 = vcombine.high %v777, %v789
          %v813 = vunpack.c.l.s4 1983009808
          %v814 = vunpack.c.0.s8 %v813
          %v815 = vlaneseq
          %v816 = vshrl.u32 %v815, 7
          %v817 = vsub.s32 %v814, %v816
          %v818 = vrot.slane %v810, %v817
          %v820 = vunpack.c.l.s4 1983009808
          %v821 = vunpack.c.0.s8 %v820
          %v822 = vlaneseq
          %v823 = vshrl.u32 %v822, 7
          %v824 = vsub.s32 %v821, %v823
          %v825 = vrot.slane %v811, %v824
          %v826 = vcombine.low %v802, %v818
          %v827 = vcombine.high %v802, %v818
          %v829 = vunpack.c.l.s4 1934713408
          %v830 = vunpack.c.0.s8 %v829
          %v831 = vlaneseq
          %v832 = vshrl.u32 %v831, 7
          %v833 = vsub.s32 %v830, %v832
          %v834 = vrot.slane %v826, %v833
          %v836 = vunpack.c.l.s4 1934713408
          %v837 = vunpack.c.0.s8 %v836
          %v838 = vlaneseq
          %v839 = vshrl.u32 %v838, 7
          %v840 = vsub.s32 %v837, %v839
          %v841 = vrot.slane %v827, %v840
          %v842 = vcombine.low %v809, %v825
          %v843 = vcombine.high %v809, %v825
          %v845 = vunpack.c.l.s4 1934713408
          %v846 = vunpack.c.0.s8 %v845
          %v847 = vlaneseq
          %v848 = vshrl.u32 %v847, 7
          %v849 = vsub.s32 %v846, %v848
          %v850 = vrot.slane %v842, %v849
          %v852 = vunpack.c.l.s4 1934713408
          %v853 = vunpack.c.0.s8 %v852
          %v854 = vlaneseq
          %v855 = vshrl.u32 %v854, 7
          %v856 = vsub.s32 %v853, %v855
          %v857 = vrot.slane %v843, %v856
          %v858 = vcombine.high %v834, 0.0
          %v859 = vcombine.high %v841, 0.0
          %v860 = vcombine.high %v850, 0.0
          %v861 = vcombine.high %v857, 0.0
          %v862 = vcombine.low %v771, %v785
          %v863 = vcombine.high %v771, %v785
          %v865 = vunpack.c.l.s4 1983009808
          %v866 = vunpack.c.0.s8 %v865
          %v867 = vlaneseq
          %v868 = vshrl.u32 %v867, 7
          %v869 = vsub.s32 %v866, %v868
          %v870 = vrot.slane %v862, %v869
          %v872 = vunpack.c.l.s4 1983009808
          %v873 = vunpack.c.0.s8 %v872
          %v874 = vlaneseq
          %v875 = vshrl.u32 %v874, 7
          %v876 = vsub.s32 %v873, %v875
          %v877 = vrot.slane %v863, %v876
          %v878 = vcombine.low %v779, %v791
          %v879 = vcombine.high %v779, %v791
          %v881 = vunpack.c.l.s4 1983009808
          %v882 = vunpack.c.0.s8 %v881
          %v883 = vlaneseq
          %v884 = vshrl.u32 %v883, 7
          %v885 = vsub.s32 %v882, %v884
          %v886 = vrot.slane %v878, %v885
          %v888 = vunpack.c.l.s4 1983009808
          %v889 = vunpack.c.0.s8 %v888
          %v890 = vlaneseq
          %v891 = vshrl.u32 %v890, 7
          %v892 = vsub.s32 %v889, %v891
          %v893 = vrot.slane %v879, %v892
          %v894 = vcombine.low %v870, %v886
          %v895 = vcombine.high %v870, %v886
          %v897 = vunpack.c.l.s4 1934713408
          %v898 = vunpack.c.0.s8 %v897
          %v899 = vlaneseq
          %v900 = vshrl.u32 %v899, 7
          %v901 = vsub.s32 %v898, %v900
          %v902 = vrot.slane %v894, %v901
          %v904 = vunpack.c.l.s4 1934713408
          %v905 = vunpack.c.0.s8 %v904
          %v906 = vlaneseq
          %v907 = vshrl.u32 %v906, 7
          %v908 = vsub.s32 %v905, %v907
          %v909 = vrot.slane %v895, %v908
          %v910 = vcombine.low %v877, %v893
          %v911 = vcombine.high %v877, %v893
          %v913 = vunpack.c.l.s4 1934713408
          %v914 = vunpack.c.0.s8 %v913
          %v915 = vlaneseq
          %v916 = vshrl.u32 %v915, 7
          %v917 = vsub.s32 %v914, %v916
          %v918 = vrot.slane %v910, %v917
          %v920 = vunpack.c.l.s4 1934713408
          %v921 = vunpack.c.0.s8 %v920
          %v922 = vlaneseq
          %v923 = vshrl.u32 %v922, 7
          %v924 = vsub.s32 %v921, %v923
          %v925 = vrot.slane %v911, %v924
          %v926 = vcombine.high %v902, 0.0
          %v927 = vcombine.high %v909, 0.0
          %v928 = vcombine.high %v918, 0.0
          %v929 = vcombine.high %v925, 0.0
          %v930 = vcombine.low %v834, %v841
          %v932 = vunpack.c.l.s4 1983009808
          %v933 = vunpack.c.0.s8 %v932
          %v934 = vlaneseq
          %v935 = vshrl.u32 %v934, 7
          %v936 = vsub.s32 %v933, %v935
          %v937 = vrot.slane %v930, %v936
          %v938 = vcombine.low %v858, %v859
          %v940 = vunpack.c.l.s4 1983009808
          %v941 = vunpack.c.0.s8 %v940
          %v942 = vlaneseq
          %v943 = vshrl.u32 %v942, 7
          %v944 = vsub.s32 %v941, %v943
          %v945 = vrot.slane %v938, %v944
          %v946 = vcombine.low %v850, %v857
          %v948 = vunpack.c.l.s4 1983009808
          %v949 = vunpack.c.0.s8 %v948
          %v950 = vlaneseq
          %v951 = vshrl.u32 %v950, 7
          %v952 = vsub.s32 %v949, %v951
          %v953 = vrot.slane %v946, %v952
          %v954 = vcombine.low %v860, %v861
          %v956 = vunpack.c.l.s4 1983009808
          %v957 = vunpack.c.0.s8 %v956
          %v958 = vlaneseq
          %v959 = vshrl.u32 %v958, 7
          %v960 = vsub.s32 %v957, %v959
          %v961 = vrot.slane %v954, %v960
          %v962 = vcombine.low %v937, %v945
          %v963 = vcombine.high %v937, %v945
          %v965 = vunpack.c.l.s4 1934713408
          %v966 = vunpack.c.0.s8 %v965
          %v967 = vlaneseq
          %v968 = vshrl.u32 %v967, 7
          %v969 = vsub.s32 %v966, %v968
          %v970 = vrot.slane %v962, %v969
          %v972 = vunpack.c.l.s4 1934713408
          %v973 = vunpack.c.0.s8 %v972
          %v974 = vlaneseq
          %v975 = vshrl.u32 %v974, 7
          %v976 = vsub.s32 %v973, %v975
          %v977 = vrot.slane %v963, %v976
          %v978 = vcombine.low %v953, %v961
          %v979 = vcombine.high %v953, %v961
          %v981 = vunpack.c.l.s4 1934713408
          %v982 = vunpack.c.0.s8 %v981
          %v983 = vlaneseq
          %v984 = vshrl.u32 %v983, 7
          %v985 = vsub.s32 %v982, %v984
          %v986 = vrot.slane %v978, %v985
          %v988 = vunpack.c.l.s4 1934713408
          %v989 = vunpack.c.0.s8 %v988
          %v990 = vlaneseq
          %v991 = vshrl.u32 %v990, 7
          %v992 = vsub.s32 %v989, %v991
          %v993 = vrot.slane %v979, %v992
          %v994 = vcombine.low %v970, %v986
          %v995 = vcombine.high %v970, %v986
          %v996 = vcombine.low %v977, %v993
          %v997 = vcombine.high %v977, %v993
          %v998 = vcombine.low %v902, %v909
          %v1000 = vunpack.c.l.s4 1983009808
          %v1001 = vunpack.c.0.s8 %v1000
          %v1002 = vlaneseq
          %v1003 = vshrl.u32 %v1002, 7
          %v1004 = vsub.s32 %v1001, %v1003
          %v1005 = vrot.slane %v998, %v1004
          %v1006 = vcombine.low %v926, %v927
          %v1008 = vunpack.c.l.s4 1983009808
          %v1009 = vunpack.c.0.s8 %v1008
          %v1010 = vlaneseq
          %v1011 = vshrl.u32 %v1010, 7
          %v1012 = vsub.s32 %v1009, %v1011
          %v1013 = vrot.slane %v1006, %v1012
          %v1014 = vcombine.low %v918, %v925
          %v1016 = vunpack.c.l.s4 1983009808
          %v1017 = vunpack.c.0.s8 %v1016
          %v1018 = vlaneseq
          %v1019 = vshrl.u32 %v1018, 7
          %v1020 = vsub.s32 %v1017, %v1019
          %v1021 = vrot.slane %v1014, %v1020
          %v1022 = vcombine.low %v928, %v929
          %v1024 = vunpack.c.l.s4 1983009808
          %v1025 = vunpack.c.0.s8 %v1024
          %v1026 = vlaneseq
          %v1027 = vshrl.u32 %v1026, 7
          %v1028 = vsub.s32 %v1025, %v1027
          %v1029 = vrot.slane %v1022, %v1028
          %v1030 = vcombine.low %v1005, %v1013
          %v1031 = vcombine.high %v1005, %v1013
          %v1033 = vunpack.c.l.s4 1934713408
          %v1034 = vunpack.c.0.s8 %v1033
          %v1035 = vlaneseq
          %v1036 = vshrl.u32 %v1035, 7
          %v1037 = vsub.s32 %v1034, %v1036
          %v1038 = vrot.slane %v1030, %v1037
          %v1040 = vunpack.c.l.s4 1934713408
          %v1041 = vunpack.c.0.s8 %v1040
          %v1042 = vlaneseq
          %v1043 = vshrl.u32 %v1042, 7
          %v1044 = vsub.s32 %v1041, %v1043
          %v1045 = vrot.slane %v1031, %v1044
          %v1046 = vcombine.low %v1021, %v1029
          %v1047 = vcombine.high %v1021, %v1029
          %v1049 = vunpack.c.l.s4 1934713408
          %v1050 = vunpack.c.0.s8 %v1049
          %v1051 = vlaneseq
          %v1052 = vshrl.u32 %v1051, 7
          %v1053 = vsub.s32 %v1050, %v1052
          %v1054 = vrot.slane %v1046, %v1053
          %v1056 = vunpack.c.l.s4 1934713408
          %v1057 = vunpack.c.0.s8 %v1056
          %v1058 = vlaneseq
          %v1059 = vshrl.u32 %v1058, 7
          %v1060 = vsub.s32 %v1057, %v1059
          %v1061 = vrot.slane %v1047, %v1060
          %v1062 = vcombine.low %v1038, %v1054
          %v1063 = vcombine.high %v1038, %v1054
          %v1064 = vcombine.low %v1045, %v1061
          %v1065 = vcombine.high %v1045, %v1061
          %vm1066 = vcmask 64512
          %1067 = vst.msk [vmem:[#allocation2] sm:$0xff] %vm1066, %v994
          %1068 = vst.msk [vmem:[#allocation2 + $0x8] sm:$0xff] %vm1066, %v1062
          %1069 = vst.msk [vmem:[#allocation2 + $0x10] sm:$0xff] %vm1066, %v995
          %1070 = vst.msk [vmem:[#allocation2 + $0x18] sm:$0xff] %vm1066, %v1063
          %1071 = vst.msk [vmem:[#allocation2 + $0x20] sm:$0xff] %vm1066, %v996
          %1072 = vst.msk [vmem:[#allocation2 + $0x28] sm:$0xff] %vm1066, %v1064
          %1073 = vst.msk [vmem:[#allocation2 + $0x30] sm:$0xff] %vm1066, %v997
          %1074 = vst.msk [vmem:[#allocation2 + $0x38] sm:$0xff] %vm1066, %v1065
          %1075 = vrot.lane.b32.xlu0 %v766, 96
          %v1076 = vpop.permute.xlu0 %1075
          %1077 = vrot.lane.b32.xlu0 %v771, 96
          %v1078 = vpop.permute.xlu0 %1077
          %1079 = vrot.lane.b32.xlu0 %v777, 96
          %v1080 = vpop.permute.xlu0 %1079
          %1081 = vrot.lane.b32.xlu0 %v779, 96
          %v1082 = vpop.permute.xlu0 %1081
          %1083 = vrot.lane.b32.xlu0 %v783, 96
          %v1084 = vpop.permute.xlu0 %1083
          %1085 = vrot.lane.b32.xlu0 %v785, 96
          %v1086 = vpop.permute.xlu0 %1085
          %1087 = vrot.lane.b32.xlu0 %v789, 96
          %v1088 = vpop.permute.xlu0 %1087
          %1089 = vrot.lane.b32.xlu0 %v791, 96
          %v1090 = vpop.permute.xlu0 %1089
          %v1099 = vcombine.low %v1076, %v1084
          %v1100 = vcombine.high %v1076, %v1084
          %v1102 = vunpack.c.l.s4 1983009808
          %v1103 = vunpack.c.0.s8 %v1102
          %v1104 = vlaneseq
          %v1105 = vshrl.u32 %v1104, 7
          %v1106 = vsub.s32 %v1103, %v1105
          %v1107 = vrot.slane %v1099, %v1106
          %v1109 = vunpack.c.l.s4 1983009808
          %v1110 = vunpack.c.0.s8 %v1109
          %v1111 = vlaneseq
          %v1112 = vshrl.u32 %v1111, 7
          %v1113 = vsub.s32 %v1110, %v1112
          %v1114 = vrot.slane %v1100, %v1113
          %v1115 = vcombine.low %v1080, %v1088
          %v1116 = vcombine.high %v1080, %v1088
          %v1118 = vunpack.c.l.s4 1983009808
          %v1119 = vunpack.c.0.s8 %v1118
          %v1120 = vlaneseq
          %v1121 = vshrl.u32 %v1120, 7
          %v1122 = vsub.s32 %v1119, %v1121
          %v1123 = vrot.slane %v1115, %v1122
          %v1125 = vunpack.c.l.s4 1983009808
          %v1126 = vunpack.c.0.s8 %v1125
          %v1127 = vlaneseq
          %v1128 = vshrl.u32 %v1127, 7
          %v1129 = vsub.s32 %v1126, %v1128
          %v1130 = vrot.slane %v1116, %v1129
          %v1131 = vcombine.low %v1107, %v1123
          %v1132 = vcombine.high %v1107, %v1123
          %v1134 = vunpack.c.l.s4 1934713408
          %v1135 = vunpack.c.0.s8 %v1134
          %v1136 = vlaneseq
          %v1137 = vshrl.u32 %v1136, 7
          %v1138 = vsub.s32 %v1135, %v1137
          %v1139 = vrot.slane %v1131, %v1138
          %v1141 = vunpack.c.l.s4 1934713408
          %v1142 = vunpack.c.0.s8 %v1141
          %v1143 = vlaneseq
          %v1144 = vshrl.u32 %v1143, 7
          %v1145 = vsub.s32 %v1142, %v1144
          %v1146 = vrot.slane %v1132, %v1145
          %v1147 = vcombine.low %v1114, %v1130
          %v1148 = vcombine.high %v1114, %v1130
          %v1150 = vunpack.c.l.s4 1934713408
          %v1151 = vunpack.c.0.s8 %v1150
          %v1152 = vlaneseq
          %v1153 = vshrl.u32 %v1152, 7
          %v1154 = vsub.s32 %v1151, %v1153
          %v1155 = vrot.slane %v1147, %v1154
          %v1157 = vunpack.c.l.s4 1934713408
          %v1158 = vunpack.c.0.s8 %v1157
          %v1159 = vlaneseq
          %v1160 = vshrl.u32 %v1159, 7
          %v1161 = vsub.s32 %v1158, %v1160
          %v1162 = vrot.slane %v1148, %v1161
          %v1163 = vcombine.high %v1139, 0.0
          %v1164 = vcombine.high %v1146, 0.0
          %v1165 = vcombine.high %v1155, 0.0
          %v1166 = vcombine.high %v1162, 0.0
          %v1167 = vcombine.low %v1078, %v1086
          %v1168 = vcombine.high %v1078, %v1086
          %v1170 = vunpack.c.l.s4 1983009808
          %v1171 = vunpack.c.0.s8 %v1170
          %v1172 = vlaneseq
          %v1173 = vshrl.u32 %v1172, 7
          %v1174 = vsub.s32 %v1171, %v1173
          %v1175 = vrot.slane %v1167, %v1174
          %v1177 = vunpack.c.l.s4 1983009808
          %v1178 = vunpack.c.0.s8 %v1177
          %v1179 = vlaneseq
          %v1180 = vshrl.u32 %v1179, 7
          %v1181 = vsub.s32 %v1178, %v1180
          %v1182 = vrot.slane %v1168, %v1181
          %v1183 = vcombine.low %v1082, %v1090
          %v1184 = vcombine.high %v1082, %v1090
          %v1186 = vunpack.c.l.s4 1983009808
          %v1187 = vunpack.c.0.s8 %v1186
          %v1188 = vlaneseq
          %v1189 = vshrl.u32 %v1188, 7
          %v1190 = vsub.s32 %v1187, %v1189
          %v1191 = vrot.slane %v1183, %v1190
          %v1193 = vunpack.c.l.s4 1983009808
          %v1194 = vunpack.c.0.s8 %v1193
          %v1195 = vlaneseq
          %v1196 = vshrl.u32 %v1195, 7
          %v1197 = vsub.s32 %v1194, %v1196
          %v1198 = vrot.slane %v1184, %v1197
          %v1199 = vcombine.low %v1175, %v1191
          %v1200 = vcombine.high %v1175, %v1191
          %v1202 = vunpack.c.l.s4 1934713408
          %v1203 = vunpack.c.0.s8 %v1202
          %v1204 = vlaneseq
          %v1205 = vshrl.u32 %v1204, 7
          %v1206 = vsub.s32 %v1203, %v1205
          %v1207 = vrot.slane %v1199, %v1206
          %v1209 = vunpack.c.l.s4 1934713408
          %v1210 = vunpack.c.0.s8 %v1209
          %v1211 = vlaneseq
          %v1212 = vshrl.u32 %v1211, 7
          %v1213 = vsub.s32 %v1210, %v1212
          %v1214 = vrot.slane %v1200, %v1213
          %v1215 = vcombine.low %v1182, %v1198
          %v1216 = vcombine.high %v1182, %v1198
          %v1218 = vunpack.c.l.s4 1934713408
          %v1219 = vunpack.c.0.s8 %v1218
          %v1220 = vlaneseq
          %v1221 = vshrl.u32 %v1220, 7
          %v1222 = vsub.s32 %v1219, %v1221
          %v1223 = vrot.slane %v1215, %v1222
          %v1225 = vunpack.c.l.s4 1934713408
          %v1226 = vunpack.c.0.s8 %v1225
          %v1227 = vlaneseq
          %v1228 = vshrl.u32 %v1227, 7
          %v1229 = vsub.s32 %v1226, %v1228
          %v1230 = vrot.slane %v1216, %v1229
          %v1231 = vcombine.high %v1207, 0.0
          %v1232 = vcombine.high %v1214, 0.0
          %v1233 = vcombine.high %v1223, 0.0
          %v1234 = vcombine.high %v1230, 0.0
          %v1235 = vcombine.low %v1139, %v1146
          %v1237 = vunpack.c.l.s4 1983009808
          %v1238 = vunpack.c.0.s8 %v1237
          %v1239 = vlaneseq
          %v1240 = vshrl.u32 %v1239, 7
          %v1241 = vsub.s32 %v1238, %v1240
          %v1242 = vrot.slane %v1235, %v1241
          %v1243 = vcombine.low %v1163, %v1164
          %v1245 = vunpack.c.l.s4 1983009808
          %v1246 = vunpack.c.0.s8 %v1245
          %v1247 = vlaneseq
          %v1248 = vshrl.u32 %v1247, 7
          %v1249 = vsub.s32 %v1246, %v1248
          %v1250 = vrot.slane %v1243, %v1249
          %v1251 = vcombine.low %v1155, %v1162
          %v1253 = vunpack.c.l.s4 1983009808
          %v1254 = vunpack.c.0.s8 %v1253
          %v1255 = vlaneseq
          %v1256 = vshrl.u32 %v1255, 7
          %v1257 = vsub.s32 %v1254, %v1256
          %v1258 = vrot.slane %v1251, %v1257
          %v1259 = vcombine.low %v1165, %v1166
          %v1261 = vunpack.c.l.s4 1983009808
          %v1262 = vunpack.c.0.s8 %v1261
          %v1263 = vlaneseq
          %v1264 = vshrl.u32 %v1263, 7
          %v1265 = vsub.s32 %v1262, %v1264
          %v1266 = vrot.slane %v1259, %v1265
          %v1267 = vcombine.low %v1242, %v1250
          %v1268 = vcombine.high %v1242, %v1250
          %v1270 = vunpack.c.l.s4 1934713408
          %v1271 = vunpack.c.0.s8 %v1270
          %v1272 = vlaneseq
          %v1273 = vshrl.u32 %v1272, 7
          %v1274 = vsub.s32 %v1271, %v1273
          %v1275 = vrot.slane %v1267, %v1274
          %v1277 = vunpack.c.l.s4 1934713408
          %v1278 = vunpack.c.0.s8 %v1277
          %v1279 = vlaneseq
          %v1280 = vshrl.u32 %v1279, 7
          %v1281 = vsub.s32 %v1278, %v1280
          %v1282 = vrot.slane %v1268, %v1281
          %v1283 = vcombine.low %v1258, %v1266
          %v1284 = vcombine.high %v1258, %v1266
          %v1286 = vunpack.c.l.s4 1934713408
          %v1287 = vunpack.c.0.s8 %v1286
          %v1288 = vlaneseq
          %v1289 = vshrl.u32 %v1288, 7
          %v1290 = vsub.s32 %v1287, %v1289
          %v1291 = vrot.slane %v1283, %v1290
          %v1293 = vunpack.c.l.s4 1934713408
          %v1294 = vunpack.c.0.s8 %v1293
          %v1295 = vlaneseq
          %v1296 = vshrl.u32 %v1295, 7
          %v1297 = vsub.s32 %v1294, %v1296
          %v1298 = vrot.slane %v1284, %v1297
          %v1299 = vcombine.low %v1275, %v1291
          %v1300 = vcombine.high %v1275, %v1291
          %v1301 = vcombine.low %v1282, %v1298
          %v1302 = vcombine.high %v1282, %v1298
          %v1303 = vcombine.low %v1207, %v1214
          %v1305 = vunpack.c.l.s4 1983009808
          %v1306 = vunpack.c.0.s8 %v1305
          %v1307 = vlaneseq
          %v1308 = vshrl.u32 %v1307, 7
          %v1309 = vsub.s32 %v1306, %v1308
          %v1310 = vrot.slane %v1303, %v1309
          %v1311 = vcombine.low %v1231, %v1232
          %v1313 = vunpack.c.l.s4 1983009808
          %v1314 = vunpack.c.0.s8 %v1313
          %v1315 = vlaneseq
          %v1316 = vshrl.u32 %v1315, 7
          %v1317 = vsub.s32 %v1314, %v1316
          %v1318 = vrot.slane %v1311, %v1317
          %v1319 = vcombine.low %v1223, %v1230
          %v1321 = vunpack.c.l.s4 1983009808
          %v1322 = vunpack.c.0.s8 %v1321
          %v1323 = vlaneseq
          %v1324 = vshrl.u32 %v1323, 7
          %v1325 = vsub.s32 %v1322, %v1324
          %v1326 = vrot.slane %v1319, %v1325
          %v1327 = vcombine.low %v1233, %v1234
          %v1329 = vunpack.c.l.s4 1983009808
          %v1330 = vunpack.c.0.s8 %v1329
          %v1331 = vlaneseq
          %v1332 = vshrl.u32 %v1331, 7
          %v1333 = vsub.s32 %v1330, %v1332
          %v1334 = vrot.slane %v1327, %v1333
          %v1335 = vcombine.low %v1310, %v1318
          %v1336 = vcombine.high %v1310, %v1318
          %v1338 = vunpack.c.l.s4 1934713408
          %v1339 = vunpack.c.0.s8 %v1338
          %v1340 = vlaneseq
          %v1341 = vshrl.u32 %v1340, 7
          %v1342 = vsub.s32 %v1339, %v1341
          %v1343 = vrot.slane %v1335, %v1342
          %v1345 = vunpack.c.l.s4 1934713408
          %v1346 = vunpack.c.0.s8 %v1345
          %v1347 = vlaneseq
          %v1348 = vshrl.u32 %v1347, 7
          %v1349 = vsub.s32 %v1346, %v1348
          %v1350 = vrot.slane %v1336, %v1349
          %v1351 = vcombine.low %v1326, %v1334
          %v1352 = vcombine.high %v1326, %v1334
          %v1354 = vunpack.c.l.s4 1934713408
          %v1355 = vunpack.c.0.s8 %v1354
          %v1356 = vlaneseq
          %v1357 = vshrl.u32 %v1356, 7
          %v1358 = vsub.s32 %v1355, %v1357
          %v1359 = vrot.slane %v1351, %v1358
          %v1361 = vunpack.c.l.s4 1934713408
          %v1362 = vunpack.c.0.s8 %v1361
          %v1363 = vlaneseq
          %v1364 = vshrl.u32 %v1363, 7
          %v1365 = vsub.s32 %v1362, %v1364
          %v1366 = vrot.slane %v1352, %v1365
          %v1367 = vcombine.low %v1343, %v1359
          %v1368 = vcombine.high %v1343, %v1359
          %v1369 = vcombine.low %v1350, %v1366
          %v1370 = vcombine.high %v1350, %v1366
          %1371 = vst.msk [vmem:[#allocation3] sm:$0xff] %vm1066, %v1299
          %1372 = vst.msk [vmem:[#allocation3 + $0x8] sm:$0xff] %vm1066, %v1367
          %1373 = vst.msk [vmem:[#allocation3 + $0x10] sm:$0xff] %vm1066, %v1300
          %1374 = vst.msk [vmem:[#allocation3 + $0x18] sm:$0xff] %vm1066, %v1368
          %1375 = vst.msk [vmem:[#allocation3 + $0x20] sm:$0xff] %vm1066, %v1301
          %1376 = vst.msk [vmem:[#allocation3 + $0x28] sm:$0xff] %vm1066, %v1369
          %1377 = vst.msk [vmem:[#allocation3 + $0x30] sm:$0xff] %vm1066, %v1302
          %1378 = vst.msk [vmem:[#allocation3 + $0x38] sm:$0xff] %vm1066, %v1370
        $region104: #{tpu_custom_call.1} parent=83 // pred_fallthru
          _
        %s1379 = smul.u32 %s38, 16
        %s1380 = scalar_lea.vmem %s618, %s1379
        %v1381 = vld [vmem:[%s1380] sm:$0xff]
        %v1382 = vld [vmem:[%s1380 + $0x8] sm:$0xff]
        %v1383 = vld [vmem:[%s2] sm:$0x1]
        %v1384 = vld [vmem:[%s3] sm:$0x1]
        %vm1385 = vcmask 261120
        %v1386 = vsel %vm1385, %v1381, 0.0
        %1387 = vadd.xlane.f32.xlu0 %v1386
        %v1388 = vpop.xlane.xlu0 %1387
        %v1389 = vsel %vm1385, %v1382, 0.0
        %1390 = vadd.xlane.f32.xlu0 %v1389
        %v1391 = vpop.xlane.xlu0 %1390
        %v1392 = vrcp.pop 32.0
        %v1393 = vmul.f32 %v1388, %v1392
        %v1394 = vmul.f32 %v1391, %v1392
        %v1395 = vsub.f32 %v1381, %v1393
        %v1396 = vsub.f32 %v1382, %v1394
        %v1397 = vmul.f32 %v1395, %v1395
        %v1398 = vmul.f32 %v1396, %v1396
        %v1399 = vsel %vm1385, %v1397, 0.0
        %1400 = vadd.xlane.f32.xlu0 %v1399
        %v1401 = vpop.xlane.xlu0 %1400
        %v1402 = vsel %vm1385, %v1398, 0.0
        %1403 = vadd.xlane.f32.xlu0 %v1402
        %v1404 = vpop.xlane.xlu0 %1403
        %v1405 = vmul.f32 %v1401, %v1392
        %v1406 = vmul.f32 %v1404, %v1392
        %v1407 = vadd.f32 %v1405, 1e-05
        %v1408 = vadd.f32 %v1406, 1e-05
        %v1409 = vrsqrt.pop %v1407
        %v1410 = vrsqrt.pop %v1408
        %v1411 = vmul.f32 %v1395, %v1409
        %v1412 = vmul.f32 %v1396, %v1410
        %v1414 = vlaneseq
        %v1415 = vshrl.u32 %v1414, 7
        %v1416 = vsub.s32 0, %v1415
        %v1417 = vrot.slane %v1383, %v1416
        %v1419 = vmul.f32 %v1411, %v1417
        %v1420 = vmul.f32 %v1412, %v1417
        %v1422 = vlaneseq
        %v1423 = vshrl.u32 %v1422, 7
        %v1424 = vsub.s32 0, %v1423
        %v1425 = vrot.slane %v1384, %v1424
        %v1427 = vadd.f32 %v1419, %v1425
        %v1428 = vadd.f32 %v1420, %v1425
        %v1429 = vld [vmem:[#allocation4] sm:$0xff]
        %v1430 = vld [vmem:[#allocation4 + $0x8] sm:$0xff]
        %v1431 = vld [vmem:[#allocation4 + $0x10] sm:$0xff]
        %v1432 = vld [vmem:[#allocation4 + $0x18] sm:$0xff]
        %v1433 = vld [vmem:[%s5] sm:$0x1]
        %v1435 = vlaneseq
        %v1436 = vshrl.u32 %v1435, 7
        %v1437 = vsub.s32 0, %v1436
        %v1438 = vrot.slane %v1433, %v1437
        %v1441 = vsel %vm1385, %v1427, 0
        %v1444 = vsel %vm1385, %v1428, 0
        %1446 = vmatprep.subr.mxu0 0.0
        %1447 = vmatpush1.msra.mxu0 0.0
        %1448 = vmatprep.subr.mxu0 0.0
        %1449 = vmatpush1.msra.mxu0 0.0
        %1450 = vmatprep.subr.mxu0 0.0
        %1451 = vmatpush1.msra.mxu0 0.0
        %1452 = vmatprep.subr.mxu0 0.0
        %1453 = vmatpush1.msra.mxu0 0.0
        %1454 = vmatprep.subr.mxu0 0.0
        %1455 = vmatpush1.msra.mxu0 0.0
        %1456 = vmatprep.subr.mxu0 0.0
        %1457 = vmatpush1.msra.mxu0 0.0
        %1458 = vmatprep.subr.mxu0 0.0
        %1459 = vmatpush1.msra.mxu0 0.0
        %1460 = vmatprep.subr.mxu0 0.0
        %1461 = vmatpush1.msra.mxu0 0.0
        %1462 = vmatprep.subr.mxu0 0.0
        %1463 = vmatpush1.msra.mxu0 0.0
        %1464 = vmatprep.subr.mxu0 0.0
        %1465 = vmatpush1.msra.mxu0 0.0
        %1466 = vmatprep.subr.mxu0 0.0
        %1467 = vmatpush1.msra.mxu0 0.0
        %1468 = vmatprep.subr.mxu0 0.0
        %1469 = vmatpush1.msra.mxu0 0.0
        %1470 = vmatprep.subr.mxu0 0.0
        %1471 = vmatpush1.msra.mxu0 %v1432
        %1472 = vmatprep.subr.mxu0 0.0
        %1473 = vmatpush1.msra.mxu0 %v1431
        %1474 = vmatprep.subr.mxu0 0.0
        %1475 = vmatpush1.msra.mxu0 %v1430
        %1476 = vmatprep.subr.mxu0 0.0
        %1477 = vmatpush1.msra.mxu0 %v1429
        %1478 = vmatprep.subr.mxu0 0.0
        %1479 = vmatpush2.msra.mxu0 0.0
        %1480 = vmatprep.subr.mxu0 0.0
        %1481 = vmatpush2.msra.mxu0 0.0
        %1482 = vmatprep.subr.mxu0 0.0
        %1483 = vmatpush2.msra.mxu0 0.0
        %1484 = vmatprep.subr.mxu0 0.0
        %1485 = vmatpush2.msra.mxu0 0.0
        %1486 = vmatprep.subr.mxu0 0.0
        %1487 = vmatpush2.msra.mxu0 0.0
        %1488 = vmatprep.subr.mxu0 0.0
        %1489 = vmatpush2.msra.mxu0 0.0
        %1490 = vmatprep.subr.mxu0 0.0
        %1491 = vmatpush2.msra.mxu0 0.0
        %1492 = vmatprep.subr.mxu0 0.0
        %1493 = vmatpush2.msra.mxu0 0.0
        %1494 = vmatprep.subr.mxu0 0.0
        %1495 = vmatpush2.msra.mxu0 0.0
        %1496 = vmatprep.subr.mxu0 0.0
        %1497 = vmatpush2.msra.mxu0 0.0
        %1498 = vmatprep.subr.mxu0 0.0
        %1499 = vmatpush2.msra.mxu0 0.0
        %1500 = vmatprep.subr.mxu0 0.0
        %1501 = vmatpush2.msra.mxu0 0.0
        %1502 = vmatprep.subr.mxu0 0.0
        %1503 = vmatpush2.msra.mxu0 0.0
        %1504 = vmatprep.subr.mxu0 0.0
        %1505 = vmatpush2.msra.mxu0 0.0
        %1506 = vmatprep.subr.mxu0 0.0
        %1507 = vmatpush2.msra.mxu0 0.0
        %1508 = vmatprep.subr.mxu0 0.0
        %1509 = vmatpush2.msra.mxu0 0.0
        %1510 = vmatprep.mubr.f32.mxu0 0.0
        %1511 = vmatmul.mubr.f32.gmra.mxu0 %v1441
        %v1512 = vpop.f32.mrf.mxu0
        %v1513 = vadd.f32 %v1438, %v1512
        %v1514 = vpop.f32.mrf.mxu0
        %1515 = vmatprep.mubr.f32.mxu0 0.0
        %1516 = vmatmul.mubr.f32.gmra.mxu0 %v1444
        %v1517 = vpop.f32.mrf.mxu0
        %v1518 = vadd.f32 %v1438, %v1517
        %v1519 = vpop.f32.mrf.mxu0
        %1520 = vdwg.mxu0
        %1523 = vrot.lane.b32.xlu0 %v1513, 120
        %v1524 = vpop.permute.xlu0 %1523
        %1525 = vrot.lane.b32.xlu0 %v1518, 120
        %v1526 = vpop.permute.xlu0 %1525
        %1529 = vrot.lane.b32.xlu0 %v1513, 112
        %v1530 = vpop.permute.xlu0 %1529
        %1531 = vrot.lane.b32.xlu0 %v1518, 112
        %v1532 = vpop.permute.xlu0 %1531
        %1535 = vrot.lane.b32.xlu0 %v1513, 104
        %v1536 = vpop.permute.xlu0 %1535
        %1537 = vrot.lane.b32.xlu0 %v1518, 104
        %v1538 = vpop.permute.xlu0 %1537
        %v1541 = vcombine.low %v1513, %v1530
        %v1542 = vcombine.high %v1513, %v1530
        %v1544 = vunpack.c.l.s4 1983009808
        %v1545 = vunpack.c.0.s8 %v1544
        %v1546 = vlaneseq
        %v1547 = vshrl.u32 %v1546, 7
        %v1548 = vsub.s32 %v1545, %v1547
        %v1549 = vrot.slane %v1541, %v1548
        %v1551 = vunpack.c.l.s4 1983009808
        %v1552 = vunpack.c.0.s8 %v1551
        %v1553 = vlaneseq
        %v1554 = vshrl.u32 %v1553, 7
        %v1555 = vsub.s32 %v1552, %v1554
        %v1556 = vrot.slane %v1542, %v1555
        %v1557 = vcombine.low %v1524, %v1536
        %v1558 = vcombine.high %v1524, %v1536
        %v1560 = vunpack.c.l.s4 1983009808
        %v1561 = vunpack.c.0.s8 %v1560
        %v1562 = vlaneseq
        %v1563 = vshrl.u32 %v1562, 7
        %v1564 = vsub.s32 %v1561, %v1563
        %v1565 = vrot.slane %v1557, %v1564
        %v1567 = vunpack.c.l.s4 1983009808
        %v1568 = vunpack.c.0.s8 %v1567
        %v1569 = vlaneseq
        %v1570 = vshrl.u32 %v1569, 7
        %v1571 = vsub.s32 %v1568, %v1570
        %v1572 = vrot.slane %v1558, %v1571
        %v1573 = vcombine.low %v1549, %v1565
        %v1574 = vcombine.high %v1549, %v1565
        %v1576 = vunpack.c.l.s4 1934713408
        %v1577 = vunpack.c.0.s8 %v1576
        %v1578 = vlaneseq
        %v1579 = vshrl.u32 %v1578, 7
        %v1580 = vsub.s32 %v1577, %v1579
        %v1581 = vrot.slane %v1573, %v1580
        %v1583 = vunpack.c.l.s4 1934713408
        %v1584 = vunpack.c.0.s8 %v1583
        %v1585 = vlaneseq
        %v1586 = vshrl.u32 %v1585, 7
        %v1587 = vsub.s32 %v1584, %v1586
        %v1588 = vrot.slane %v1574, %v1587
        %v1589 = vcombine.low %v1556, %v1572
        %v1590 = vcombine.high %v1556, %v1572
        %v1592 = vunpack.c.l.s4 1934713408
        %v1593 = vunpack.c.0.s8 %v1592
        %v1594 = vlaneseq
        %v1595 = vshrl.u32 %v1594, 7
        %v1596 = vsub.s32 %v1593, %v1595
        %v1597 = vrot.slane %v1589, %v1596
        %v1599 = vunpack.c.l.s4 1934713408
        %v1600 = vunpack.c.0.s8 %v1599
        %v1601 = vlaneseq
        %v1602 = vshrl.u32 %v1601, 7
        %v1603 = vsub.s32 %v1600, %v1602
        %v1604 = vrot.slane %v1590, %v1603
        %v1605 = vcombine.high %v1581, 0.0
        %v1606 = vcombine.high %v1588, 0.0
        %v1607 = vcombine.high %v1597, 0.0
        %v1608 = vcombine.high %v1604, 0.0
        %v1609 = vcombine.low %v1518, %v1532
        %v1610 = vcombine.high %v1518, %v1532
        %v1612 = vunpack.c.l.s4 1983009808
        %v1613 = vunpack.c.0.s8 %v1612
        %v1614 = vlaneseq
        %v1615 = vshrl.u32 %v1614, 7
        %v1616 = vsub.s32 %v1613, %v1615
        %v1617 = vrot.slane %v1609, %v1616
        %v1619 = vunpack.c.l.s4 1983009808
        %v1620 = vunpack.c.0.s8 %v1619
        %v1621 = vlaneseq
        %v1622 = vshrl.u32 %v1621, 7
        %v1623 = vsub.s32 %v1620, %v1622
        %v1624 = vrot.slane %v1610, %v1623
        %v1625 = vcombine.low %v1526, %v1538
        %v1626 = vcombine.high %v1526, %v1538
        %v1628 = vunpack.c.l.s4 1983009808
        %v1629 = vunpack.c.0.s8 %v1628
        %v1630 = vlaneseq
        %v1631 = vshrl.u32 %v1630, 7
        %v1632 = vsub.s32 %v1629, %v1631
        %v1633 = vrot.slane %v1625, %v1632
        %v1635 = vunpack.c.l.s4 1983009808
        %v1636 = vunpack.c.0.s8 %v1635
        %v1637 = vlaneseq
        %v1638 = vshrl.u32 %v1637, 7
        %v1639 = vsub.s32 %v1636, %v1638
        %v1640 = vrot.slane %v1626, %v1639
        %v1641 = vcombine.low %v1617, %v1633
        %v1642 = vcombine.high %v1617, %v1633
        %v1644 = vunpack.c.l.s4 1934713408
        %v1645 = vunpack.c.0.s8 %v1644
        %v1646 = vlaneseq
        %v1647 = vshrl.u32 %v1646, 7
        %v1648 = vsub.s32 %v1645, %v1647
        %v1649 = vrot.slane %v1641, %v1648
        %v1651 = vunpack.c.l.s4 1934713408
        %v1652 = vunpack.c.0.s8 %v1651
        %v1653 = vlaneseq
        %v1654 = vshrl.u32 %v1653, 7
        %v1655 = vsub.s32 %v1652, %v1654
        %v1656 = vrot.slane %v1642, %v1655
        %v1657 = vcombine.low %v1624, %v1640
        %v1658 = vcombine.high %v1624, %v1640
        %v1660 = vunpack.c.l.s4 1934713408
        %v1661 = vunpack.c.0.s8 %v1660
        %v1662 = vlaneseq
        %v1663 = vshrl.u32 %v1662, 7
        %v1664 = vsub.s32 %v1661, %v1663
        %v1665 = vrot.slane %v1657, %v1664
        %v1667 = vunpack.c.l.s4 1934713408
        %v1668 = vunpack.c.0.s8 %v1667
        %v1669 = vlaneseq
        %v1670 = vshrl.u32 %v1669, 7
        %v1671 = vsub.s32 %v1668, %v1670
        %v1672 = vrot.slane %v1658, %v1671
        %v1673 = vcombine.high %v1649, 0.0
        %v1674 = vcombine.high %v1656, 0.0
        %v1675 = vcombine.high %v1665, 0.0
        %v1676 = vcombine.high %v1672, 0.0
        %v1677 = vcombine.low %v1581, %v1588
        %v1679 = vunpack.c.l.s4 1983009808
        %v1680 = vunpack.c.0.s8 %v1679
        %v1681 = vlaneseq
        %v1682 = vshrl.u32 %v1681, 7
        %v1683 = vsub.s32 %v1680, %v1682
        %v1684 = vrot.slane %v1677, %v1683
        %v1685 = vcombine.low %v1605, %v1606
        %v1687 = vunpack.c.l.s4 1983009808
        %v1688 = vunpack.c.0.s8 %v1687
        %v1689 = vlaneseq
        %v1690 = vshrl.u32 %v1689, 7
        %v1691 = vsub.s32 %v1688, %v1690
        %v1692 = vrot.slane %v1685, %v1691
        %v1693 = vcombine.low %v1597, %v1604
        %v1695 = vunpack.c.l.s4 1983009808
        %v1696 = vunpack.c.0.s8 %v1695
        %v1697 = vlaneseq
        %v1698 = vshrl.u32 %v1697, 7
        %v1699 = vsub.s32 %v1696, %v1698
        %v1700 = vrot.slane %v1693, %v1699
        %v1701 = vcombine.low %v1607, %v1608
        %v1703 = vunpack.c.l.s4 1983009808
        %v1704 = vunpack.c.0.s8 %v1703
        %v1705 = vlaneseq
        %v1706 = vshrl.u32 %v1705, 7
        %v1707 = vsub.s32 %v1704, %v1706
        %v1708 = vrot.slane %v1701, %v1707
        %v1709 = vcombine.low %v1684, %v1692
        %v1710 = vcombine.high %v1684, %v1692
        %v1712 = vunpack.c.l.s4 1934713408
        %v1713 = vunpack.c.0.s8 %v1712
        %v1714 = vlaneseq
        %v1715 = vshrl.u32 %v1714, 7
        %v1716 = vsub.s32 %v1713, %v1715
        %v1717 = vrot.slane %v1709, %v1716
        %v1719 = vunpack.c.l.s4 1934713408
        %v1720 = vunpack.c.0.s8 %v1719
        %v1721 = vlaneseq
        %v1722 = vshrl.u32 %v1721, 7
        %v1723 = vsub.s32 %v1720, %v1722
        %v1724 = vrot.slane %v1710, %v1723
        %v1725 = vcombine.low %v1700, %v1708
        %v1726 = vcombine.high %v1700, %v1708
        %v1728 = vunpack.c.l.s4 1934713408
        %v1729 = vunpack.c.0.s8 %v1728
        %v1730 = vlaneseq
        %v1731 = vshrl.u32 %v1730, 7
        %v1732 = vsub.s32 %v1729, %v1731
        %v1733 = vrot.slane %v1725, %v1732
        %v1735 = vunpack.c.l.s4 1934713408
        %v1736 = vunpack.c.0.s8 %v1735
        %v1737 = vlaneseq
        %v1738 = vshrl.u32 %v1737, 7
        %v1739 = vsub.s32 %v1736, %v1738
        %v1740 = vrot.slane %v1726, %v1739
        %v1741 = vcombine.low %v1717, %v1733
        %v1742 = vcombine.high %v1717, %v1733
        %v1743 = vcombine.low %v1724, %v1740
        %v1744 = vcombine.high %v1724, %v1740
        %v1745 = vcombine.low %v1649, %v1656
        %v1747 = vunpack.c.l.s4 1983009808
        %v1748 = vunpack.c.0.s8 %v1747
        %v1749 = vlaneseq
        %v1750 = vshrl.u32 %v1749, 7
        %v1751 = vsub.s32 %v1748, %v1750
        %v1752 = vrot.slane %v1745, %v1751
        %v1753 = vcombine.low %v1673, %v1674
        %v1755 = vunpack.c.l.s4 1983009808
        %v1756 = vunpack.c.0.s8 %v1755
        %v1757 = vlaneseq
        %v1758 = vshrl.u32 %v1757, 7
        %v1759 = vsub.s32 %v1756, %v1758
        %v1760 = vrot.slane %v1753, %v1759
        %v1761 = vcombine.low %v1665, %v1672
        %v1763 = vunpack.c.l.s4 1983009808
        %v1764 = vunpack.c.0.s8 %v1763
        %v1765 = vlaneseq
        %v1766 = vshrl.u32 %v1765, 7
        %v1767 = vsub.s32 %v1764, %v1766
        %v1768 = vrot.slane %v1761, %v1767
        %v1769 = vcombine.low %v1675, %v1676
        %v1771 = vunpack.c.l.s4 1983009808
        %v1772 = vunpack.c.0.s8 %v1771
        %v1773 = vlaneseq
        %v1774 = vshrl.u32 %v1773, 7
        %v1775 = vsub.s32 %v1772, %v1774
        %v1776 = vrot.slane %v1769, %v1775
        %v1777 = vcombine.low %v1752, %v1760
        %v1778 = vcombine.high %v1752, %v1760
        %v1780 = vunpack.c.l.s4 1934713408
        %v1781 = vunpack.c.0.s8 %v1780
        %v1782 = vlaneseq
        %v1783 = vshrl.u32 %v1782, 7
        %v1784 = vsub.s32 %v1781, %v1783
        %v1785 = vrot.slane %v1777, %v1784
        %v1787 = vunpack.c.l.s4 1934713408
        %v1788 = vunpack.c.0.s8 %v1787
        %v1789 = vlaneseq
        %v1790 = vshrl.u32 %v1789, 7
        %v1791 = vsub.s32 %v1788, %v1790
        %v1792 = vrot.slane %v1778, %v1791
        %v1793 = vcombine.low %v1768, %v1776
        %v1794 = vcombine.high %v1768, %v1776
        %v1796 = vunpack.c.l.s4 1934713408
        %v1797 = vunpack.c.0.s8 %v1796
        %v1798 = vlaneseq
        %v1799 = vshrl.u32 %v1798, 7
        %v1800 = vsub.s32 %v1797, %v1799
        %v1801 = vrot.slane %v1793, %v1800
        %v1803 = vunpack.c.l.s4 1934713408
        %v1804 = vunpack.c.0.s8 %v1803
        %v1805 = vlaneseq
        %v1806 = vshrl.u32 %v1805, 7
        %v1807 = vsub.s32 %v1804, %v1806
        %v1808 = vrot.slane %v1794, %v1807
        %v1809 = vcombine.low %v1785, %v1801
        %v1810 = vcombine.high %v1785, %v1801
        %v1811 = vcombine.low %v1792, %v1808
        %v1812 = vcombine.high %v1792, %v1808
        %v1813 = vld [vmem:[#allocation2] sm:$0xff]
        %v1814 = vld [vmem:[#allocation2 + $0x8] sm:$0xff]
        %v1815 = vld [vmem:[#allocation2 + $0x10] sm:$0xff]
        %v1816 = vld [vmem:[#allocation2 + $0x18] sm:$0xff]
        %v1817 = vld [vmem:[#allocation2 + $0x20] sm:$0xff]
        %v1818 = vld [vmem:[#allocation2 + $0x28] sm:$0xff]
        %v1819 = vld [vmem:[#allocation2 + $0x30] sm:$0xff]
        %v1820 = vld [vmem:[#allocation2 + $0x38] sm:$0xff]
        %v1821 = vld [vmem:[%s627] sm:$0xf]
        %v1822 = vld [vmem:[%s627 + $0x4] sm:$0xf]
        %v1823 = vld [vmem:[%s627 + $0x8] sm:$0xf]
        %v1824 = vld [vmem:[%s627 + $0xc] sm:$0xf]
        %v1825 = vld [vmem:[%s627 + $0x10] sm:$0xf]
        %v1826 = vld [vmem:[%s627 + $0x14] sm:$0xf]
        %v1827 = vld [vmem:[%s627 + $0x18] sm:$0xf]
        %v1828 = vld [vmem:[%s627 + $0x1c] sm:$0xf]
        %v1829 = vunpack.c.l.bf16 %v1821
        %v1830 = vunpack.c.l.bf16 %v1822
        %v1831 = vunpack.c.l.bf16 %v1823
        %v1832 = vunpack.c.l.bf16 %v1824
        %v1833 = vunpack.c.l.bf16 %v1825
        %v1834 = vunpack.c.l.bf16 %v1826
        %v1835 = vunpack.c.l.bf16 %v1827
        %v1836 = vunpack.c.l.bf16 %v1828
        %vm1837 = vcmask 64512
        %v1839 = vsel %vm1837, %v1741, 0
        %v1842 = vsel %vm1837, %v1809, 0
        %v1845 = vsel %vm1837, %v1813, 0
        %v1848 = vsel %vm1837, %v1814, 0
        %1850 = vmatprep.subr.mxu0 0.0
        %1851 = vmatpush1.xpose.msra.mxu0 0.0
        %1852 = vmatprep.subr.mxu0 0.0
        %1853 = vmatpush1.xpose.msra.mxu0 0.0
        %1854 = vmatprep.subr.mxu0 0.0
        %1855 = vmatpush1.xpose.msra.mxu0 0.0
        %1856 = vmatprep.subr.mxu0 0.0
        %1857 = vmatpush1.xpose.msra.mxu0 0.0
        %1858 = vmatprep.subr.mxu0 0.0
        %1859 = vmatpush1.xpose.msra.mxu0 0.0
        %1860 = vmatprep.subr.mxu0 0.0
        %1861 = vmatpush1.xpose.msra.mxu0 0.0
        %1862 = vmatprep.subr.mxu0 0.0
        %1863 = vmatpush1.xpose.msra.mxu0 0.0
        %1864 = vmatprep.subr.mxu0 0.0
        %1865 = vmatpush1.xpose.msra.mxu0 0.0
        %1866 = vmatprep.subr.mxu0 0.0
        %1867 = vmatpush1.xpose.msra.mxu0 0.0
        %1868 = vmatprep.subr.mxu0 0.0
        %1869 = vmatpush1.xpose.msra.mxu0 0.0
        %1870 = vmatprep.subr.mxu0 0.0
        %1871 = vmatpush1.xpose.msra.mxu0 0.0
        %1872 = vmatprep.subr.mxu0 0.0
        %1873 = vmatpush1.xpose.msra.mxu0 0.0
        %1874 = vmatprep.subr.mxu0 0.0
        %1875 = vmatpush1.xpose.msra.mxu0 0.0
        %1876 = vmatprep.subr.mxu0 0.0
        %1877 = vmatpush1.xpose.msra.mxu0 0.0
        %1878 = vmatprep.subr.mxu0 0.0
        %1879 = vmatpush1.xpose.msra.mxu0 %v1848
        %1880 = vmatprep.subr.mxu0 0.0
        %1881 = vmatpush1.xpose.msra.mxu0 %v1845
        %1882 = vmatprep.subr.mxu0 0.0
        %1883 = vmatpush2.xpose.msra.mxu0 0.0
        %1884 = vmatprep.subr.mxu0 0.0
        %1885 = vmatpush2.xpose.msra.mxu0 0.0
        %1886 = vmatprep.subr.mxu0 0.0
        %1887 = vmatpush2.xpose.msra.mxu0 0.0
        %1888 = vmatprep.subr.mxu0 0.0
        %1889 = vmatpush2.xpose.msra.mxu0 0.0
        %1890 = vmatprep.subr.mxu0 0.0
        %1891 = vmatpush2.xpose.msra.mxu0 0.0
        %1892 = vmatprep.subr.mxu0 0.0
        %1893 = vmatpush2.xpose.msra.mxu0 0.0
        %1894 = vmatprep.subr.mxu0 0.0
        %1895 = vmatpush2.xpose.msra.mxu0 0.0
        %1896 = vmatprep.subr.mxu0 0.0
        %1897 = vmatpush2.xpose.msra.mxu0 0.0
        %1898 = vmatprep.subr.mxu0 0.0
        %1899 = vmatpush2.xpose.msra.mxu0 0.0
        %1900 = vmatprep.subr.mxu0 0.0
        %1901 = vmatpush2.xpose.msra.mxu0 0.0
        %1902 = vmatprep.subr.mxu0 0.0
        %1903 = vmatpush2.xpose.msra.mxu0 0.0
        %1904 = vmatprep.subr.mxu0 0.0
        %1905 = vmatpush2.xpose.msra.mxu0 0.0
        %1906 = vmatprep.subr.mxu0 0.0
        %1907 = vmatpush2.xpose.msra.mxu0 0.0
        %1908 = vmatprep.subr.mxu0 0.0
        %1909 = vmatpush2.xpose.msra.mxu0 0.0
        %1910 = vmatprep.subr.mxu0 0.0
        %1911 = vmatpush2.xpose.msra.mxu0 0.0
        %1912 = vmatprep.subr.mxu0 0.0
        %1913 = vmatpush2.xpose.msra.mxu0 0.0
        %1914 = vmatprep.mubr.f32.mxu0 0.0
        %1915 = vmatmul.mubr.f32.gmra.mxu0 %v1839
        %v1916 = vpop.f32.mrf.mxu0
        %v1917 = vadd.f32 %v1829, %v1916
        %v1918 = vpop.f32.mrf.mxu0
        %1919 = vmatprep.mubr.f32.mxu0 0.0
        %1920 = vmatmul.mubr.f32.gmra.mxu0 %v1842
        %v1921 = vpop.f32.mrf.mxu0
        %v1922 = vadd.f32 %v1830, %v1921
        %v1923 = vpop.f32.mrf.mxu0
        %1924 = vdwg.mxu0
        %v1926 = vsel %vm1837, %v1742, 0
        %v1929 = vsel %vm1837, %v1810, 0
        %v1932 = vsel %vm1837, %v1815, 0
        %v1935 = vsel %vm1837, %v1816, 0
        %1937 = vmatprep.subr.mxu0 0.0
        %1938 = vmatpush1.xpose.msra.mxu0 0.0
        %1939 = vmatprep.subr.mxu0 0.0
        %1940 = vmatpush1.xpose.msra.mxu0 0.0
        %1941 = vmatprep.subr.mxu0 0.0
        %1942 = vmatpush1.xpose.msra.mxu0 0.0
        %1943 = vmatprep.subr.mxu0 0.0
        %1944 = vmatpush1.xpose.msra.mxu0 0.0
        %1945 = vmatprep.subr.mxu0 0.0
        %1946 = vmatpush1.xpose.msra.mxu0 0.0
        %1947 = vmatprep.subr.mxu0 0.0
        %1948 = vmatpush1.xpose.msra.mxu0 0.0
        %1949 = vmatprep.subr.mxu0 0.0
        %1950 = vmatpush1.xpose.msra.mxu0 0.0
        %1951 = vmatprep.subr.mxu0 0.0
        %1952 = vmatpush1.xpose.msra.mxu0 0.0
        %1953 = vmatprep.subr.mxu0 0.0
        %1954 = vmatpush1.xpose.msra.mxu0 0.0
        %1955 = vmatprep.subr.mxu0 0.0
        %1956 = vmatpush1.xpose.msra.mxu0 0.0
        %1957 = vmatprep.subr.mxu0 0.0
        %1958 = vmatpush1.xpose.msra.mxu0 0.0
        %1959 = vmatprep.subr.mxu0 0.0
        %1960 = vmatpush1.xpose.msra.mxu0 0.0
        %1961 = vmatprep.subr.mxu0 0.0
        %1962 = vmatpush1.xpose.msra.mxu0 0.0
        %1963 = vmatprep.subr.mxu0 0.0
        %1964 = vmatpush1.xpose.msra.mxu0 0.0
        %1965 = vmatprep.subr.mxu0 0.0
        %1966 = vmatpush1.xpose.msra.mxu0 %v1935
        %1967 = vmatprep.subr.mxu0 0.0
        %1968 = vmatpush1.xpose.msra.mxu0 %v1932
        %1969 = vmatprep.subr.mxu0 0.0
        %1970 = vmatpush2.xpose.msra.mxu0 0.0
        %1971 = vmatprep.subr.mxu0 0.0
        %1972 = vmatpush2.xpose.msra.mxu0 0.0
        %1973 = vmatprep.subr.mxu0 0.0
        %1974 = vmatpush2.xpose.msra.mxu0 0.0
        %1975 = vmatprep.subr.mxu0 0.0
        %1976 = vmatpush2.xpose.msra.mxu0 0.0
        %1977 = vmatprep.subr.mxu0 0.0
        %1978 = vmatpush2.xpose.msra.mxu0 0.0
        %1979 = vmatprep.subr.mxu0 0.0
        %1980 = vmatpush2.xpose.msra.mxu0 0.0
        %1981 = vmatprep.subr.mxu0 0.0
        %1982 = vmatpush2.xpose.msra.mxu0 0.0
        %1983 = vmatprep.subr.mxu0 0.0
        %1984 = vmatpush2.xpose.msra.mxu0 0.0
        %1985 = vmatprep.subr.mxu0 0.0
        %1986 = vmatpush2.xpose.msra.mxu0 0.0
        %1987 = vmatprep.subr.mxu0 0.0
        %1988 = vmatpush2.xpose.msra.mxu0 0.0
        %1989 = vmatprep.subr.mxu0 0.0
        %1990 = vmatpush2.xpose.msra.mxu0 0.0
        %1991 = vmatprep.subr.mxu0 0.0
        %1992 = vmatpush2.xpose.msra.mxu0 0.0
        %1993 = vmatprep.subr.mxu0 0.0
        %1994 = vmatpush2.xpose.msra.mxu0 0.0
        %1995 = vmatprep.subr.mxu0 0.0
        %1996 = vmatpush2.xpose.msra.mxu0 0.0
        %1997 = vmatprep.subr.mxu0 0.0
        %1998 = vmatpush2.xpose.msra.mxu0 0.0
        %1999 = vmatprep.subr.mxu0 0.0
        %2000 = vmatpush2.xpose.msra.mxu0 0.0
        %2001 = vmatprep.mubr.f32.mxu0 0.0
        %2002 = vmatmul.mubr.f32.gmra.mxu0 %v1926
        %v2003 = vpop.f32.mrf.mxu0
        %v2004 = vadd.f32 %v1831, %v2003
        %v2005 = vpop.f32.mrf.mxu0
        %2006 = vmatprep.mubr.f32.mxu0 0.0
        %2007 = vmatmul.mubr.f32.gmra.mxu0 %v1929
        %v2008 = vpop.f32.mrf.mxu0
        %v2009 = vadd.f32 %v1832, %v2008
        %v2010 = vpop.f32.mrf.mxu0
        %2011 = vdwg.mxu0
        %v2013 = vsel %vm1837, %v1743, 0
        %v2016 = vsel %vm1837, %v1811, 0
        %v2019 = vsel %vm1837, %v1817, 0
        %v2022 = vsel %vm1837, %v1818, 0
        %2024 = vmatprep.subr.mxu0 0.0
        %2025 = vmatpush1.xpose.msra.mxu0 0.0
        %2026 = vmatprep.subr.mxu0 0.0
        %2027 = vmatpush1.xpose.msra.mxu0 0.0
        %2028 = vmatprep.subr.mxu0 0.0
        %2029 = vmatpush1.xpose.msra.mxu0 0.0
        %2030 = vmatprep.subr.mxu0 0.0
        %2031 = vmatpush1.xpose.msra.mxu0 0.0
        %2032 = vmatprep.subr.mxu0 0.0
        %2033 = vmatpush1.xpose.msra.mxu0 0.0
        %2034 = vmatprep.subr.mxu0 0.0
        %2035 = vmatpush1.xpose.msra.mxu0 0.0
        %2036 = vmatprep.subr.mxu0 0.0
        %2037 = vmatpush1.xpose.msra.mxu0 0.0
        %2038 = vmatprep.subr.mxu0 0.0
        %2039 = vmatpush1.xpose.msra.mxu0 0.0
        %2040 = vmatprep.subr.mxu0 0.0
        %2041 = vmatpush1.xpose.msra.mxu0 0.0
        %2042 = vmatprep.subr.mxu0 0.0
        %2043 = vmatpush1.xpose.msra.mxu0 0.0
        %2044 = vmatprep.subr.mxu0 0.0
        %2045 = vmatpush1.xpose.msra.mxu0 0.0
        %2046 = vmatprep.subr.mxu0 0.0
        %2047 = vmatpush1.xpose.msra.mxu0 0.0
        %2048 = vmatprep.subr.mxu0 0.0
        %2049 = vmatpush1.xpose.msra.mxu0 0.0
        %2050 = vmatprep.subr.mxu0 0.0
        %2051 = vmatpush1.xpose.msra.mxu0 0.0
        %2052 = vmatprep.subr.mxu0 0.0
        %2053 = vmatpush1.xpose.msra.mxu0 %v2022
        %2054 = vmatprep.subr.mxu0 0.0
        %2055 = vmatpush1.xpose.msra.mxu0 %v2019
        %2056 = vmatprep.subr.mxu0 0.0
        %2057 = vmatpush2.xpose.msra.mxu0 0.0
        %2058 = vmatprep.subr.mxu0 0.0
        %2059 = vmatpush2.xpose.msra.mxu0 0.0
        %2060 = vmatprep.subr.mxu0 0.0
        %2061 = vmatpush2.xpose.msra.mxu0 0.0
        %2062 = vmatprep.subr.mxu0 0.0
        %2063 = vmatpush2.xpose.msra.mxu0 0.0
        %2064 = vmatprep.subr.mxu0 0.0
        %2065 = vmatpush2.xpose.msra.mxu0 0.0
        %2066 = vmatprep.subr.mxu0 0.0
        %2067 = vmatpush2.xpose.msra.mxu0 0.0
        %2068 = vmatprep.subr.mxu0 0.0
        %2069 = vmatpush2.xpose.msra.mxu0 0.0
        %2070 = vmatprep.subr.mxu0 0.0
        %2071 = vmatpush2.xpose.msra.mxu0 0.0
        %2072 = vmatprep.subr.mxu0 0.0
        %2073 = vmatpush2.xpose.msra.mxu0 0.0
        %2074 = vmatprep.subr.mxu0 0.0
        %2075 = vmatpush2.xpose.msra.mxu0 0.0
        %2076 = vmatprep.subr.mxu0 0.0
        %2077 = vmatpush2.xpose.msra.mxu0 0.0
        %2078 = vmatprep.subr.mxu0 0.0
        %2079 = vmatpush2.xpose.msra.mxu0 0.0
        %2080 = vmatprep.subr.mxu0 0.0
        %2081 = vmatpush2.xpose.msra.mxu0 0.0
        %2082 = vmatprep.subr.mxu0 0.0
        %2083 = vmatpush2.xpose.msra.mxu0 0.0
        %2084 = vmatprep.subr.mxu0 0.0
        %2085 = vmatpush2.xpose.msra.mxu0 0.0
        %2086 = vmatprep.subr.mxu0 0.0
        %2087 = vmatpush2.xpose.msra.mxu0 0.0
        %2088 = vmatprep.mubr.f32.mxu0 0.0
        %2089 = vmatmul.mubr.f32.gmra.mxu0 %v2013
        %v2090 = vpop.f32.mrf.mxu0
        %v2091 = vadd.f32 %v1833, %v2090
        %v2092 = vpop.f32.mrf.mxu0
        %2093 = vmatprep.mubr.f32.mxu0 0.0
        %2094 = vmatmul.mubr.f32.gmra.mxu0 %v2016
        %v2095 = vpop.f32.mrf.mxu0
        %v2096 = vadd.f32 %v1834, %v2095
        %v2097 = vpop.f32.mrf.mxu0
        %2098 = vdwg.mxu0
        %v2100 = vsel %vm1837, %v1744, 0
        %v2103 = vsel %vm1837, %v1812, 0
        %v2106 = vsel %vm1837, %v1819, 0
        %v2109 = vsel %vm1837, %v1820, 0
        %2111 = vmatprep.subr.mxu0 0.0
        %2112 = vmatpush1.xpose.msra.mxu0 0.0
        %2113 = vmatprep.subr.mxu0 0.0
        %2114 = vmatpush1.xpose.msra.mxu0 0.0
        %2115 = vmatprep.subr.mxu0 0.0
        %2116 = vmatpush1.xpose.msra.mxu0 0.0
        %2117 = vmatprep.subr.mxu0 0.0
        %2118 = vmatpush1.xpose.msra.mxu0 0.0
        %2119 = vmatprep.subr.mxu0 0.0
        %2120 = vmatpush1.xpose.msra.mxu0 0.0
        %2121 = vmatprep.subr.mxu0 0.0
        %2122 = vmatpush1.xpose.msra.mxu0 0.0
        %2123 = vmatprep.subr.mxu0 0.0
        %2124 = vmatpush1.xpose.msra.mxu0 0.0
        %2125 = vmatprep.subr.mxu0 0.0
        %2126 = vmatpush1.xpose.msra.mxu0 0.0
        %2127 = vmatprep.subr.mxu0 0.0
        %2128 = vmatpush1.xpose.msra.mxu0 0.0
        %2129 = vmatprep.subr.mxu0 0.0
        %2130 = vmatpush1.xpose.msra.mxu0 0.0
        %2131 = vmatprep.subr.mxu0 0.0
        %2132 = vmatpush1.xpose.msra.mxu0 0.0
        %2133 = vmatprep.subr.mxu0 0.0
        %2134 = vmatpush1.xpose.msra.mxu0 0.0
        %2135 = vmatprep.subr.mxu0 0.0
        %2136 = vmatpush1.xpose.msra.mxu0 0.0
        %2137 = vmatprep.subr.mxu0 0.0
        %2138 = vmatpush1.xpose.msra.mxu0 0.0
        %2139 = vmatprep.subr.mxu0 0.0
        %2140 = vmatpush1.xpose.msra.mxu0 %v2109
        %2141 = vmatprep.subr.mxu0 0.0
        %2142 = vmatpush1.xpose.msra.mxu0 %v2106
        %2143 = vmatprep.subr.mxu0 0.0
        %2144 = vmatpush2.xpose.msra.mxu0 0.0
        %2145 = vmatprep.subr.mxu0 0.0
        %2146 = vmatpush2.xpose.msra.mxu0 0.0
        %2147 = vmatprep.subr.mxu0 0.0
        %2148 = vmatpush2.xpose.msra.mxu0 0.0
        %2149 = vmatprep.subr.mxu0 0.0
        %2150 = vmatpush2.xpose.msra.mxu0 0.0
        %2151 = vmatprep.subr.mxu0 0.0
        %2152 = vmatpush2.xpose.msra.mxu0 0.0
        %2153 = vmatprep.subr.mxu0 0.0
        %2154 = vmatpush2.xpose.msra.mxu0 0.0
        %2155 = vmatprep.subr.mxu0 0.0
        %2156 = vmatpush2.xpose.msra.mxu0 0.0
        %2157 = vmatprep.subr.mxu0 0.0
        %2158 = vmatpush2.xpose.msra.mxu0 0.0
        %2159 = vmatprep.subr.mxu0 0.0
        %2160 = vmatpush2.xpose.msra.mxu0 0.0
        %2161 = vmatprep.subr.mxu0 0.0
        %2162 = vmatpush2.xpose.msra.mxu0 0.0
        %2163 = vmatprep.subr.mxu0 0.0
        %2164 = vmatpush2.xpose.msra.mxu0 0.0
        %2165 = vmatprep.subr.mxu0 0.0
        %2166 = vmatpush2.xpose.msra.mxu0 0.0
        %2167 = vmatprep.subr.mxu0 0.0
        %2168 = vmatpush2.xpose.msra.mxu0 0.0
        %2169 = vmatprep.subr.mxu0 0.0
        %2170 = vmatpush2.xpose.msra.mxu0 0.0
        %2171 = vmatprep.subr.mxu0 0.0
        %2172 = vmatpush2.xpose.msra.mxu0 0.0
        %2173 = vmatprep.subr.mxu0 0.0
        %2174 = vmatpush2.xpose.msra.mxu0 0.0
        %2175 = vmatprep.mubr.f32.mxu0 0.0
        %2176 = vmatmul.mubr.f32.gmra.mxu0 %v2100
        %v2177 = vpop.f32.mrf.mxu0
        %v2178 = vadd.f32 %v1835, %v2177
        %v2179 = vpop.f32.mrf.mxu0
        %2180 = vmatprep.mubr.f32.mxu0 0.0
        %2181 = vmatmul.mubr.f32.gmra.mxu0 %v2103
        %v2182 = vpop.f32.mrf.mxu0
        %v2183 = vadd.f32 %v1836, %v2182
        %v2184 = vpop.f32.mrf.mxu0
        %2185 = vdwg.mxu0
        %vm2186 = vcmask 130048
        %v2187 = vsel %vm2186, %v1917, -inf
        %2188 = vmax.xlane.f32.xlu0 %v2187
        %v2189 = vpop.xlane.xlu0 %2188
        %v2190 = vsel %vm2186, %v1922, -inf
        %2191 = vmax.xlane.f32.xlu0 %v2190
        %v2192 = vpop.xlane.xlu0 %2191
        %v2193 = vsel %vm2186, %v2004, -inf
        %2194 = vmax.xlane.f32.xlu0 %v2193
        %v2195 = vpop.xlane.xlu0 %2194
        %v2196 = vsel %vm2186, %v2009, -inf
        %2197 = vmax.xlane.f32.xlu0 %v2196
        %v2198 = vpop.xlane.xlu0 %2197
        %v2199 = vsel %vm2186, %v2091, -inf
        %2200 = vmax.xlane.f32.xlu0 %v2199
        %v2201 = vpop.xlane.xlu0 %2200
        %v2202 = vsel %vm2186, %v2096, -inf
        %2203 = vmax.xlane.f32.xlu0 %v2202
        %v2204 = vpop.xlane.xlu0 %2203
        %v2205 = vsel %vm2186, %v2178, -inf
        %2206 = vmax.xlane.f32.xlu0 %v2205
        %v2207 = vpop.xlane.xlu0 %2206
        %v2208 = vsel %vm2186, %v2183, -inf
        %2209 = vmax.xlane.f32.xlu0 %v2208
        %v2210 = vpop.xlane.xlu0 %2209
        %v2211 = vsub.f32 %v1917, %v2189
        %v2212 = vsub.f32 %v1922, %v2192
        %v2213 = vsub.f32 %v2004, %v2195
        %v2214 = vsub.f32 %v2009, %v2198
        %v2215 = vsub.f32 %v2091, %v2201
        %v2216 = vsub.f32 %v2096, %v2204
        %v2217 = vsub.f32 %v2178, %v2207
        %v2218 = vsub.f32 %v2183, %v2210
        %v2219 = vmul.f32 %v2211, 1.442695
        %v2220 = vpow.pop %v2219
        %v2221 = vmul.f32 %v2212, 1.442695
        %v2222 = vpow.pop %v2221
        %v2223 = vmul.f32 %v2213, 1.442695
        %v2224 = vpow.pop %v2223
        %v2225 = vmul.f32 %v2214, 1.442695
        %v2226 = vpow.pop %v2225
        %v2227 = vmul.f32 %v2215, 1.442695
        %v2228 = vpow.pop %v2227
        %v2229 = vmul.f32 %v2216, 1.442695
        %v2230 = vpow.pop %v2229
        %v2231 = vmul.f32 %v2217, 1.442695
        %v2232 = vpow.pop %v2231
        %v2233 = vmul.f32 %v2218, 1.442695
        %v2234 = vpow.pop %v2233
        %v2235 = vsel %vm2186, %v2220, 0.0
        %2236 = vadd.xlane.f32.xlu0 %v2235
        %v2237 = vpop.xlane.xlu0 %2236
        %v2238 = vsel %vm2186, %v2222, 0.0
        %2239 = vadd.xlane.f32.xlu0 %v2238
        %v2240 = vpop.xlane.xlu0 %2239
        %v2241 = vsel %vm2186, %v2224, 0.0
        %2242 = vadd.xlane.f32.xlu0 %v2241
        %v2243 = vpop.xlane.xlu0 %2242
        %v2244 = vsel %vm2186, %v2226, 0.0
        %2245 = vadd.xlane.f32.xlu0 %v2244
        %v2246 = vpop.xlane.xlu0 %2245
        %v2247 = vsel %vm2186, %v2228, 0.0
        %2248 = vadd.xlane.f32.xlu0 %v2247
        %v2249 = vpop.xlane.xlu0 %2248
        %v2250 = vsel %vm2186, %v2230, 0.0
        %2251 = vadd.xlane.f32.xlu0 %v2250
        %v2252 = vpop.xlane.xlu0 %2251
        %v2253 = vsel %vm2186, %v2232, 0.0
        %2254 = vadd.xlane.f32.xlu0 %v2253
        %v2255 = vpop.xlane.xlu0 %2254
        %v2256 = vsel %vm2186, %v2234, 0.0
        %2257 = vadd.xlane.f32.xlu0 %v2256
        %v2258 = vpop.xlane.xlu0 %2257
        %v2259 = vrcp.pop %v2237
        %v2260 = vrcp.pop %v2240
        %v2261 = vrcp.pop %v2243
        %v2262 = vrcp.pop %v2246
        %v2263 = vrcp.pop %v2249
        %v2264 = vrcp.pop %v2252
        %v2265 = vrcp.pop %v2255
        %v2266 = vrcp.pop %v2258
        %v2267 = vmul.f32 %v2237, %v2259
        %v2268 = vmul.f32 %v2240, %v2260
        %v2269 = vmul.f32 %v2243, %v2261
        %v2270 = vmul.f32 %v2246, %v2262
        %v2271 = vmul.f32 %v2249, %v2263
        %v2272 = vmul.f32 %v2252, %v2264
        %v2273 = vmul.f32 %v2255, %v2265
        %v2274 = vmul.f32 %v2258, %v2266
        %v2275 = vsub.f32 2.0, %v2267
        %v2276 = vsub.f32 2.0, %v2268
        %v2277 = vsub.f32 2.0, %v2269
        %v2278 = vsub.f32 2.0, %v2270
        %v2279 = vsub.f32 2.0, %v2271
        %v2280 = vsub.f32 2.0, %v2272
        %v2281 = vsub.f32 2.0, %v2273
        %v2282 = vsub.f32 2.0, %v2274
        %v2283 = vmul.f32 %v2259, %v2275
        %v2284 = vmul.f32 %v2260, %v2276
        %v2285 = vmul.f32 %v2261, %v2277
        %v2286 = vmul.f32 %v2262, %v2278
        %v2287 = vmul.f32 %v2263, %v2279
        %v2288 = vmul.f32 %v2264, %v2280
        %v2289 = vmul.f32 %v2265, %v2281
        %v2290 = vmul.f32 %v2266, %v2282
        %v2291 = vmul.f32 %v2220, %v2283
        %v2292 = vmul.f32 %v2222, %v2284
        %v2293 = vmul.f32 %v2224, %v2285
        %v2294 = vmul.f32 %v2226, %v2286
        %v2295 = vmul.f32 %v2228, %v2287
        %v2296 = vmul.f32 %v2230, %v2288
        %v2297 = vmul.f32 %v2232, %v2289
        %v2298 = vmul.f32 %v2234, %v2290
        %v2299 = vld [vmem:[#allocation3] sm:$0xff]
        %v2300 = vld [vmem:[#allocation3 + $0x8] sm:$0xff]
        %v2301 = vld [vmem:[#allocation3 + $0x10] sm:$0xff]
        %v2302 = vld [vmem:[#allocation3 + $0x18] sm:$0xff]
        %v2303 = vld [vmem:[#allocation3 + $0x20] sm:$0xff]
        %v2304 = vld [vmem:[#allocation3 + $0x28] sm:$0xff]
        %v2305 = vld [vmem:[#allocation3 + $0x30] sm:$0xff]
        %v2306 = vld [vmem:[#allocation3 + $0x38] sm:$0xff]
        %v2308 = vsel %vm2186, %v2291, 0
        %v2311 = vsel %vm2186, %v2292, 0
        %2313 = vmatprep.subr.mxu0 0.0
        %2314 = vmatpush1.msra.mxu0 0.0
        %2315 = vmatprep.subr.mxu0 0.0
        %2316 = vmatpush1.msra.mxu0 0.0
        %2317 = vmatprep.subr.mxu0 0.0
        %2318 = vmatpush1.msra.mxu0 0.0
        %2319 = vmatprep.subr.mxu0 0.0
        %2320 = vmatpush1.msra.mxu0 0.0
        %2321 = vmatprep.subr.mxu0 0.0
        %2322 = vmatpush1.msra.mxu0 0.0
        %2323 = vmatprep.subr.mxu0 0.0
        %2324 = vmatpush1.msra.mxu0 0.0
        %2325 = vmatprep.subr.mxu0 0.0
        %2326 = vmatpush1.msra.mxu0 0.0
        %2327 = vmatprep.subr.mxu0 0.0
        %2328 = vmatpush1.msra.mxu0 0.0
        %2329 = vmatprep.subr.mxu0 0.0
        %2330 = vmatpush1.msra.mxu0 0.0
        %2331 = vmatprep.subr.mxu0 0.0
        %2332 = vmatpush1.msra.mxu0 0.0
        %2333 = vmatprep.subr.mxu0 0.0
        %2334 = vmatpush1.msra.mxu0 0.0
        %2335 = vmatprep.subr.mxu0 0.0
        %2336 = vmatpush1.msra.mxu0 0.0
        %2337 = vmatprep.subr.mxu0 0.0
        %2338 = vmatpush1.msra.mxu0 0.0
        %2339 = vmatprep.subr.mxu0 0.0
        %2340 = vmatpush1.msra.mxu0 0.0
        %2341 = vmatprep.subr.mxu0 0.0
        %2342 = vmatpush1.msra.mxu0 %v2300
        %2343 = vmatprep.subr.mxu0 0.0
        %2344 = vmatpush1.msra.mxu0 %v2299
        %2345 = vmatprep.subr.mxu0 0.0
        %2346 = vmatpush2.msra.mxu0 0.0
        %2347 = vmatprep.subr.mxu0 0.0
        %2348 = vmatpush2.msra.mxu0 0.0
        %2349 = vmatprep.subr.mxu0 0.0
        %2350 = vmatpush2.msra.mxu0 0.0
        %2351 = vmatprep.subr.mxu0 0.0
        %2352 = vmatpush2.msra.mxu0 0.0
        %2353 = vmatprep.subr.mxu0 0.0
        %2354 = vmatpush2.msra.mxu0 0.0
        %2355 = vmatprep.subr.mxu0 0.0
        %2356 = vmatpush2.msra.mxu0 0.0
        %2357 = vmatprep.subr.mxu0 0.0
        %2358 = vmatpush2.msra.mxu0 0.0
        %2359 = vmatprep.subr.mxu0 0.0
        %2360 = vmatpush2.msra.mxu0 0.0
        %2361 = vmatprep.subr.mxu0 0.0
        %2362 = vmatpush2.msra.mxu0 0.0
        %2363 = vmatprep.subr.mxu0 0.0
        %2364 = vmatpush2.msra.mxu0 0.0
        %2365 = vmatprep.subr.mxu0 0.0
        %2366 = vmatpush2.msra.mxu0 0.0
        %2367 = vmatprep.subr.mxu0 0.0
        %2368 = vmatpush2.msra.mxu0 0.0
        %2369 = vmatprep.subr.mxu0 0.0
        %2370 = vmatpush2.msra.mxu0 0.0
        %2371 = vmatprep.subr.mxu0 0.0
        %2372 = vmatpush2.msra.mxu0 0.0
        %2373 = vmatprep.subr.mxu0 0.0
        %2374 = vmatpush2.msra.mxu0 0.0
        %2375 = vmatprep.subr.mxu0 0.0
        %2376 = vmatpush2.msra.mxu0 0.0
        %2377 = vmatprep.mubr.f32.mxu0 0.0
        %2378 = vmatmul.mubr.f32.gmra.mxu0 %v2308
        %v2379 = vpop.f32.mrf.mxu0
        %v2380 = vadd.f32 0.0, %v2379
        %v2381 = vpop.f32.mrf.mxu0
        %2382 = vmatprep.mubr.f32.mxu0 0.0
        %2383 = vmatmul.mubr.f32.gmra.mxu0 %v2311
        %v2384 = vpop.f32.mrf.mxu0
        %v2385 = vadd.f32 0.0, %v2384
        %v2386 = vpop.f32.mrf.mxu0
        %2387 = vdwg.mxu0
        %v2389 = vsel %vm2186, %v2293, 0
        %v2392 = vsel %vm2186, %v2294, 0
        %2394 = vmatprep.subr.mxu0 0.0
        %2395 = vmatpush1.msra.mxu0 0.0
        %2396 = vmatprep.subr.mxu0 0.0
        %2397 = vmatpush1.msra.mxu0 0.0
        %2398 = vmatprep.subr.mxu0 0.0
        %2399 = vmatpush1.msra.mxu0 0.0
        %2400 = vmatprep.subr.mxu0 0.0
        %2401 = vmatpush1.msra.mxu0 0.0
        %2402 = vmatprep.subr.mxu0 0.0
        %2403 = vmatpush1.msra.mxu0 0.0
        %2404 = vmatprep.subr.mxu0 0.0
        %2405 = vmatpush1.msra.mxu0 0.0
        %2406 = vmatprep.subr.mxu0 0.0
        %2407 = vmatpush1.msra.mxu0 0.0
        %2408 = vmatprep.subr.mxu0 0.0
        %2409 = vmatpush1.msra.mxu0 0.0
        %2410 = vmatprep.subr.mxu0 0.0
        %2411 = vmatpush1.msra.mxu0 0.0
        %2412 = vmatprep.subr.mxu0 0.0
        %2413 = vmatpush1.msra.mxu0 0.0
        %2414 = vmatprep.subr.mxu0 0.0
        %2415 = vmatpush1.msra.mxu0 0.0
        %2416 = vmatprep.subr.mxu0 0.0
        %2417 = vmatpush1.msra.mxu0 0.0
        %2418 = vmatprep.subr.mxu0 0.0
        %2419 = vmatpush1.msra.mxu0 0.0
        %2420 = vmatprep.subr.mxu0 0.0
        %2421 = vmatpush1.msra.mxu0 0.0
        %2422 = vmatprep.subr.mxu0 0.0
        %2423 = vmatpush1.msra.mxu0 %v2302
        %2424 = vmatprep.subr.mxu0 0.0
        %2425 = vmatpush1.msra.mxu0 %v2301
        %2426 = vmatprep.subr.mxu0 0.0
        %2427 = vmatpush2.msra.mxu0 0.0
        %2428 = vmatprep.subr.mxu0 0.0
        %2429 = vmatpush2.msra.mxu0 0.0
        %2430 = vmatprep.subr.mxu0 0.0
        %2431 = vmatpush2.msra.mxu0 0.0
        %2432 = vmatprep.subr.mxu0 0.0
        %2433 = vmatpush2.msra.mxu0 0.0
        %2434 = vmatprep.subr.mxu0 0.0
        %2435 = vmatpush2.msra.mxu0 0.0
        %2436 = vmatprep.subr.mxu0 0.0
        %2437 = vmatpush2.msra.mxu0 0.0
        %2438 = vmatprep.subr.mxu0 0.0
        %2439 = vmatpush2.msra.mxu0 0.0
        %2440 = vmatprep.subr.mxu0 0.0
        %2441 = vmatpush2.msra.mxu0 0.0
        %2442 = vmatprep.subr.mxu0 0.0
        %2443 = vmatpush2.msra.mxu0 0.0
        %2444 = vmatprep.subr.mxu0 0.0
        %2445 = vmatpush2.msra.mxu0 0.0
        %2446 = vmatprep.subr.mxu0 0.0
        %2447 = vmatpush2.msra.mxu0 0.0
        %2448 = vmatprep.subr.mxu0 0.0
        %2449 = vmatpush2.msra.mxu0 0.0
        %2450 = vmatprep.subr.mxu0 0.0
        %2451 = vmatpush2.msra.mxu0 0.0
        %2452 = vmatprep.subr.mxu0 0.0
        %2453 = vmatpush2.msra.mxu0 0.0
        %2454 = vmatprep.subr.mxu0 0.0
        %2455 = vmatpush2.msra.mxu0 0.0
        %2456 = vmatprep.subr.mxu0 0.0
        %2457 = vmatpush2.msra.mxu0 0.0
        %2458 = vmatprep.mubr.f32.mxu0 0.0
        %2459 = vmatmul.mubr.f32.gmra.mxu0 %v2389
        %v2460 = vpop.f32.mrf.mxu0
        %v2461 = vadd.f32 0.0, %v2460
        %v2462 = vpop.f32.mrf.mxu0
        %2463 = vmatprep.mubr.f32.mxu0 0.0
        %2464 = vmatmul.mubr.f32.gmra.mxu0 %v2392
        %v2465 = vpop.f32.mrf.mxu0
        %v2466 = vadd.f32 0.0, %v2465
        %v2467 = vpop.f32.mrf.mxu0
        %2468 = vdwg.mxu0
        %v2470 = vsel %vm2186, %v2295, 0
        %v2473 = vsel %vm2186, %v2296, 0
        %2475 = vmatprep.subr.mxu0 0.0
        %2476 = vmatpush1.msra.mxu0 0.0
        %2477 = vmatprep.subr.mxu0 0.0
        %2478 = vmatpush1.msra.mxu0 0.0
        %2479 = vmatprep.subr.mxu0 0.0
        %2480 = vmatpush1.msra.mxu0 0.0
        %2481 = vmatprep.subr.mxu0 0.0
        %2482 = vmatpush1.msra.mxu0 0.0
        %2483 = vmatprep.subr.mxu0 0.0
        %2484 = vmatpush1.msra.mxu0 0.0
        %2485 = vmatprep.subr.mxu0 0.0
        %2486 = vmatpush1.msra.mxu0 0.0
        %2487 = vmatprep.subr.mxu0 0.0
        %2488 = vmatpush1.msra.mxu0 0.0
        %2489 = vmatprep.subr.mxu0 0.0
        %2490 = vmatpush1.msra.mxu0 0.0
        %2491 = vmatprep.subr.mxu0 0.0
        %2492 = vmatpush1.msra.mxu0 0.0
        %2493 = vmatprep.subr.mxu0 0.0
        %2494 = vmatpush1.msra.mxu0 0.0
        %2495 = vmatprep.subr.mxu0 0.0
        %2496 = vmatpush1.msra.mxu0 0.0
        %2497 = vmatprep.subr.mxu0 0.0
        %2498 = vmatpush1.msra.mxu0 0.0
        %2499 = vmatprep.subr.mxu0 0.0
        %2500 = vmatpush1.msra.mxu0 0.0
        %2501 = vmatprep.subr.mxu0 0.0
        %2502 = vmatpush1.msra.mxu0 0.0
        %2503 = vmatprep.subr.mxu0 0.0
        %2504 = vmatpush1.msra.mxu0 %v2304
        %2505 = vmatprep.subr.mxu0 0.0
        %2506 = vmatpush1.msra.mxu0 %v2303
        %2507 = vmatprep.subr.mxu0 0.0
        %2508 = vmatpush2.msra.mxu0 0.0
        %2509 = vmatprep.subr.mxu0 0.0
        %2510 = vmatpush2.msra.mxu0 0.0
        %2511 = vmatprep.subr.mxu0 0.0
        %2512 = vmatpush2.msra.mxu0 0.0
        %2513 = vmatprep.subr.mxu0 0.0
        %2514 = vmatpush2.msra.mxu0 0.0
        %2515 = vmatprep.subr.mxu0 0.0
        %2516 = vmatpush2.msra.mxu0 0.0
        %2517 = vmatprep.subr.mxu0 0.0
        %2518 = vmatpush2.msra.mxu0 0.0
        %2519 = vmatprep.subr.mxu0 0.0
        %2520 = vmatpush2.msra.mxu0 0.0
        %2521 = vmatprep.subr.mxu0 0.0
        %2522 = vmatpush2.msra.mxu0 0.0
        %2523 = vmatprep.subr.mxu0 0.0
        %2524 = vmatpush2.msra.mxu0 0.0
        %2525 = vmatprep.subr.mxu0 0.0
        %2526 = vmatpush2.msra.mxu0 0.0
        %2527 = vmatprep.subr.mxu0 0.0
        %2528 = vmatpush2.msra.mxu0 0.0
        %2529 = vmatprep.subr.mxu0 0.0
        %2530 = vmatpush2.msra.mxu0 0.0
        %2531 = vmatprep.subr.mxu0 0.0
        %2532 = vmatpush2.msra.mxu0 0.0
        %2533 = vmatprep.subr.mxu0 0.0
        %2534 = vmatpush2.msra.mxu0 0.0
        %2535 = vmatprep.subr.mxu0 0.0
        %2536 = vmatpush2.msra.mxu0 0.0
        %2537 = vmatprep.subr.mxu0 0.0
        %2538 = vmatpush2.msra.mxu0 0.0
        %2539 = vmatprep.mubr.f32.mxu0 0.0
        %2540 = vmatmul.mubr.f32.gmra.mxu0 %v2470
        %v2541 = vpop.f32.mrf.mxu0
        %v2542 = vadd.f32 0.0, %v2541
        %v2543 = vpop.f32.mrf.mxu0
        %2544 = vmatprep.mubr.f32.mxu0 0.0
        %2545 = vmatmul.mubr.f32.gmra.mxu0 %v2473
        %v2546 = vpop.f32.mrf.mxu0
        %v2547 = vadd.f32 0.0, %v2546
        %v2548 = vpop.f32.mrf.mxu0
        %2549 = vdwg.mxu0
        %v2551 = vsel %vm2186, %v2297, 0
        %v2554 = vsel %vm2186, %v2298, 0
        %2556 = vmatprep.subr.mxu0 0.0
        %2557 = vmatpush1.msra.mxu0 0.0
        %2558 = vmatprep.subr.mxu0 0.0
        %2559 = vmatpush1.msra.mxu0 0.0
        %2560 = vmatprep.subr.mxu0 0.0
        %2561 = vmatpush1.msra.mxu0 0.0
        %2562 = vmatprep.subr.mxu0 0.0
        %2563 = vmatpush1.msra.mxu0 0.0
        %2564 = vmatprep.subr.mxu0 0.0
        %2565 = vmatpush1.msra.mxu0 0.0
        %2566 = vmatprep.subr.mxu0 0.0
        %2567 = vmatpush1.msra.mxu0 0.0
        %2568 = vmatprep.subr.mxu0 0.0
        %2569 = vmatpush1.msra.mxu0 0.0
        %2570 = vmatprep.subr.mxu0 0.0
        %2571 = vmatpush1.msra.mxu0 0.0
        %2572 = vmatprep.subr.mxu0 0.0
        %2573 = vmatpush1.msra.mxu0 0.0
        %2574 = vmatprep.subr.mxu0 0.0
        %2575 = vmatpush1.msra.mxu0 0.0
        %2576 = vmatprep.subr.mxu0 0.0
        %2577 = vmatpush1.msra.mxu0 0.0
        %2578 = vmatprep.subr.mxu0 0.0
        %2579 = vmatpush1.msra.mxu0 0.0
        %2580 = vmatprep.subr.mxu0 0.0
        %2581 = vmatpush1.msra.mxu0 0.0
        %2582 = vmatprep.subr.mxu0 0.0
        %2583 = vmatpush1.msra.mxu0 0.0
        %2584 = vmatprep.subr.mxu0 0.0
        %2585 = vmatpush1.msra.mxu0 %v2306
        %2586 = vmatprep.subr.mxu0 0.0
        %2587 = vmatpush1.msra.mxu0 %v2305
        %2588 = vmatprep.subr.mxu0 0.0
        %2589 = vmatpush2.msra.mxu0 0.0
        %2590 = vmatprep.subr.mxu0 0.0
        %2591 = vmatpush2.msra.mxu0 0.0
        %2592 = vmatprep.subr.mxu0 0.0
        %2593 = vmatpush2.msra.mxu0 0.0
        %2594 = vmatprep.subr.mxu0 0.0
        %2595 = vmatpush2.msra.mxu0 0.0
        %2596 = vmatprep.subr.mxu0 0.0
        %2597 = vmatpush2.msra.mxu0 0.0
        %2598 = vmatprep.subr.mxu0 0.0
        %2599 = vmatpush2.msra.mxu0 0.0
        %2600 = vmatprep.subr.mxu0 0.0
        %2601 = vmatpush2.msra.mxu0 0.0
        %2602 = vmatprep.subr.mxu0 0.0
        %2603 = vmatpush2.msra.mxu0 0.0
        %2604 = vmatprep.subr.mxu0 0.0
        %2605 = vmatpush2.msra.mxu0 0.0
        %2606 = vmatprep.subr.mxu0 0.0
        %2607 = vmatpush2.msra.mxu0 0.0
        %2608 = vmatprep.subr.mxu0 0.0
        %2609 = vmatpush2.msra.mxu0 0.0
        %2610 = vmatprep.subr.mxu0 0.0
        %2611 = vmatpush2.msra.mxu0 0.0
        %2612 = vmatprep.subr.mxu0 0.0
        %2613 = vmatpush2.msra.mxu0 0.0
        %2614 = vmatprep.subr.mxu0 0.0
        %2615 = vmatpush2.msra.mxu0 0.0
        %2616 = vmatprep.subr.mxu0 0.0
        %2617 = vmatpush2.msra.mxu0 0.0
        %2618 = vmatprep.subr.mxu0 0.0
        %2619 = vmatpush2.msra.mxu0 0.0
        %2620 = vmatprep.mubr.f32.mxu0 0.0
        %2621 = vmatmul.mubr.f32.gmra.mxu0 %v2551
        %v2622 = vpop.f32.mrf.mxu0
        %v2623 = vadd.f32 0.0, %v2622
        %v2624 = vpop.f32.mrf.mxu0
        %2625 = vmatprep.mubr.f32.mxu0 0.0
        %2626 = vmatmul.mubr.f32.gmra.mxu0 %v2554
        %v2627 = vpop.f32.mrf.mxu0
        %v2628 = vadd.f32 0.0, %v2627
        %v2629 = vpop.f32.mrf.mxu0
        %2630 = vdwg.mxu0
        %v2631 = vcombine.low %v2380, %v2542
        %v2632 = vcombine.high %v2380, %v2542
        %v2634 = vunpack.c.l.s4 1983009808
        %v2635 = vunpack.c.0.s8 %v2634
        %v2636 = vlaneseq
        %v2637 = vshrl.u32 %v2636, 7
        %v2638 = vsub.s32 %v2635, %v2637
        %v2639 = vrot.slane %v2631, %v2638
        %v2641 = vunpack.c.l.s4 1983009808
        %v2642 = vunpack.c.0.s8 %v2641
        %v2643 = vlaneseq
        %v2644 = vshrl.u32 %v2643, 7
        %v2645 = vsub.s32 %v2642, %v2644
        %v2646 = vrot.slane %v2632, %v2645
        %v2647 = vcombine.low %v2461, %v2623
        %v2648 = vcombine.high %v2461, %v2623
        %v2650 = vunpack.c.l.s4 1983009808
        %v2651 = vunpack.c.0.s8 %v2650
        %v2652 = vlaneseq
        %v2653 = vshrl.u32 %v2652, 7
        %v2654 = vsub.s32 %v2651, %v2653
        %v2655 = vrot.slane %v2647, %v2654
        %v2657 = vunpack.c.l.s4 1983009808
        %v2658 = vunpack.c.0.s8 %v2657
        %v2659 = vlaneseq
        %v2660 = vshrl.u32 %v2659, 7
        %v2661 = vsub.s32 %v2658, %v2660
        %v2662 = vrot.slane %v2648, %v2661
        %v2663 = vcombine.low %v2639, %v2655
        %v2664 = vcombine.high %v2639, %v2655
        %v2666 = vunpack.c.l.s4 1934713408
        %v2667 = vunpack.c.0.s8 %v2666
        %v2668 = vlaneseq
        %v2669 = vshrl.u32 %v2668, 7
        %v2670 = vsub.s32 %v2667, %v2669
        %v2671 = vrot.slane %v2663, %v2670
        %v2673 = vunpack.c.l.s4 1934713408
        %v2674 = vunpack.c.0.s8 %v2673
        %v2675 = vlaneseq
        %v2676 = vshrl.u32 %v2675, 7
        %v2677 = vsub.s32 %v2674, %v2676
        %v2678 = vrot.slane %v2664, %v2677
        %v2679 = vcombine.low %v2646, %v2662
        %v2680 = vcombine.high %v2646, %v2662
        %v2682 = vunpack.c.l.s4 1934713408
        %v2683 = vunpack.c.0.s8 %v2682
        %v2684 = vlaneseq
        %v2685 = vshrl.u32 %v2684, 7
        %v2686 = vsub.s32 %v2683, %v2685
        %v2687 = vrot.slane %v2679, %v2686
        %v2689 = vunpack.c.l.s4 1934713408
        %v2690 = vunpack.c.0.s8 %v2689
        %v2691 = vlaneseq
        %v2692 = vshrl.u32 %v2691, 7
        %v2693 = vsub.s32 %v2690, %v2692
        %v2694 = vrot.slane %v2680, %v2693
        %v2695 = vcombine.high %v2671, 0.0
        %v2696 = vcombine.high %v2678, 0.0
        %v2697 = vcombine.high %v2687, 0.0
        %v2698 = vcombine.high %v2694, 0.0
        %v2699 = vcombine.low %v2385, %v2547
        %v2700 = vcombine.high %v2385, %v2547
        %v2702 = vunpack.c.l.s4 1983009808
        %v2703 = vunpack.c.0.s8 %v2702
        %v2704 = vlaneseq
        %v2705 = vshrl.u32 %v2704, 7
        %v2706 = vsub.s32 %v2703, %v2705
        %v2707 = vrot.slane %v2699, %v2706
        %v2709 = vunpack.c.l.s4 1983009808
        %v2710 = vunpack.c.0.s8 %v2709
        %v2711 = vlaneseq
        %v2712 = vshrl.u32 %v2711, 7
        %v2713 = vsub.s32 %v2710, %v2712
        %v2714 = vrot.slane %v2700, %v2713
        %v2715 = vcombine.low %v2466, %v2628
        %v2716 = vcombine.high %v2466, %v2628
        %v2718 = vunpack.c.l.s4 1983009808
        %v2719 = vunpack.c.0.s8 %v2718
        %v2720 = vlaneseq
        %v2721 = vshrl.u32 %v2720, 7
        %v2722 = vsub.s32 %v2719, %v2721
        %v2723 = vrot.slane %v2715, %v2722
        %v2725 = vunpack.c.l.s4 1983009808
        %v2726 = vunpack.c.0.s8 %v2725
        %v2727 = vlaneseq
        %v2728 = vshrl.u32 %v2727, 7
        %v2729 = vsub.s32 %v2726, %v2728
        %v2730 = vrot.slane %v2716, %v2729
        %v2731 = vcombine.low %v2707, %v2723
        %v2732 = vcombine.high %v2707, %v2723
        %v2734 = vunpack.c.l.s4 1934713408
        %v2735 = vunpack.c.0.s8 %v2734
        %v2736 = vlaneseq
        %v2737 = vshrl.u32 %v2736, 7
        %v2738 = vsub.s32 %v2735, %v2737
        %v2739 = vrot.slane %v2731, %v2738
        %v2741 = vunpack.c.l.s4 1934713408
        %v2742 = vunpack.c.0.s8 %v2741
        %v2743 = vlaneseq
        %v2744 = vshrl.u32 %v2743, 7
        %v2745 = vsub.s32 %v2742, %v2744
        %v2746 = vrot.slane %v2732, %v2745
        %v2747 = vcombine.low %v2714, %v2730
        %v2748 = vcombine.high %v2714, %v2730
        %v2750 = vunpack.c.l.s4 1934713408
        %v2751 = vunpack.c.0.s8 %v2750
        %v2752 = vlaneseq
        %v2753 = vshrl.u32 %v2752, 7
        %v2754 = vsub.s32 %v2751, %v2753
        %v2755 = vrot.slane %v2747, %v2754
        %v2757 = vunpack.c.l.s4 1934713408
        %v2758 = vunpack.c.0.s8 %v2757
        %v2759 = vlaneseq
        %v2760 = vshrl.u32 %v2759, 7
        %v2761 = vsub.s32 %v2758, %v2760
        %v2762 = vrot.slane %v2748, %v2761
        %v2763 = vcombine.high %v2739, 0.0
        %v2764 = vcombine.high %v2746, 0.0
        %v2765 = vcombine.high %v2755, 0.0
        %v2766 = vcombine.high %v2762, 0.0
        %v2767 = vcombine.low %v2671, %v2678
        %v2769 = vunpack.c.l.s4 1983009808
        %v2770 = vunpack.c.0.s8 %v2769
        %v2771 = vlaneseq
        %v2772 = vshrl.u32 %v2771, 7
        %v2773 = vsub.s32 %v2770, %v2772
        %v2774 = vrot.slane %v2767, %v2773
        %v2775 = vcombine.low %v2695, %v2696
        %v2777 = vunpack.c.l.s4 1983009808
        %v2778 = vunpack.c.0.s8 %v2777
        %v2779 = vlaneseq
        %v2780 = vshrl.u32 %v2779, 7
        %v2781 = vsub.s32 %v2778, %v2780
        %v2782 = vrot.slane %v2775, %v2781
        %v2783 = vcombine.low %v2687, %v2694
        %v2785 = vunpack.c.l.s4 1983009808
        %v2786 = vunpack.c.0.s8 %v2785
        %v2787 = vlaneseq
        %v2788 = vshrl.u32 %v2787, 7
        %v2789 = vsub.s32 %v2786, %v2788
        %v2790 = vrot.slane %v2783, %v2789
        %v2791 = vcombine.low %v2697, %v2698
        %v2793 = vunpack.c.l.s4 1983009808
        %v2794 = vunpack.c.0.s8 %v2793
        %v2795 = vlaneseq
        %v2796 = vshrl.u32 %v2795, 7
        %v2797 = vsub.s32 %v2794, %v2796
        %v2798 = vrot.slane %v2791, %v2797
        %v2799 = vcombine.low %v2774, %v2782
        %v2800 = vcombine.high %v2774, %v2782
        %v2802 = vunpack.c.l.s4 1934713408
        %v2803 = vunpack.c.0.s8 %v2802
        %v2804 = vlaneseq
        %v2805 = vshrl.u32 %v2804, 7
        %v2806 = vsub.s32 %v2803, %v2805
        %v2807 = vrot.slane %v2799, %v2806
        %v2809 = vunpack.c.l.s4 1934713408
        %v2810 = vunpack.c.0.s8 %v2809
        %v2811 = vlaneseq
        %v2812 = vshrl.u32 %v2811, 7
        %v2813 = vsub.s32 %v2810, %v2812
        %v2814 = vrot.slane %v2800, %v2813
        %v2815 = vcombine.low %v2790, %v2798
        %v2816 = vcombine.high %v2790, %v2798
        %v2818 = vunpack.c.l.s4 1934713408
        %v2819 = vunpack.c.0.s8 %v2818
        %v2820 = vlaneseq
        %v2821 = vshrl.u32 %v2820, 7
        %v2822 = vsub.s32 %v2819, %v2821
        %v2823 = vrot.slane %v2815, %v2822
        %v2825 = vunpack.c.l.s4 1934713408
        %v2826 = vunpack.c.0.s8 %v2825
        %v2827 = vlaneseq
        %v2828 = vshrl.u32 %v2827, 7
        %v2829 = vsub.s32 %v2826, %v2828
        %v2830 = vrot.slane %v2816, %v2829
        %v2831 = vcombine.low %v2807, %v2823
        %v2832 = vcombine.high %v2807, %v2823
        %v2833 = vcombine.low %v2814, %v2830
        %v2834 = vcombine.high %v2814, %v2830
        %v2835 = vcombine.low %v2739, %v2746
        %v2837 = vunpack.c.l.s4 1983009808
        %v2838 = vunpack.c.0.s8 %v2837
        %v2839 = vlaneseq
        %v2840 = vshrl.u32 %v2839, 7
        %v2841 = vsub.s32 %v2838, %v2840
        %v2842 = vrot.slane %v2835, %v2841
        %v2843 = vcombine.low %v2763, %v2764
        %v2845 = vunpack.c.l.s4 1983009808
        %v2846 = vunpack.c.0.s8 %v2845
        %v2847 = vlaneseq
        %v2848 = vshrl.u32 %v2847, 7
        %v2849 = vsub.s32 %v2846, %v2848
        %v2850 = vrot.slane %v2843, %v2849
        %v2851 = vcombine.low %v2755, %v2762
        %v2853 = vunpack.c.l.s4 1983009808
        %v2854 = vunpack.c.0.s8 %v2853
        %v2855 = vlaneseq
        %v2856 = vshrl.u32 %v2855, 7
        %v2857 = vsub.s32 %v2854, %v2856
        %v2858 = vrot.slane %v2851, %v2857
        %v2859 = vcombine.low %v2765, %v2766
        %v2861 = vunpack.c.l.s4 1983009808
        %v2862 = vunpack.c.0.s8 %v2861
        %v2863 = vlaneseq
        %v2864 = vshrl.u32 %v2863, 7
        %v2865 = vsub.s32 %v2862, %v2864
        %v2866 = vrot.slane %v2859, %v2865
        %v2867 = vcombine.low %v2842, %v2850
        %v2868 = vcombine.high %v2842, %v2850
        %v2870 = vunpack.c.l.s4 1934713408
        %v2871 = vunpack.c.0.s8 %v2870
        %v2872 = vlaneseq
        %v2873 = vshrl.u32 %v2872, 7
        %v2874 = vsub.s32 %v2871, %v2873
        %v2875 = vrot.slane %v2867, %v2874
        %v2877 = vunpack.c.l.s4 1934713408
        %v2878 = vunpack.c.0.s8 %v2877
        %v2879 = vlaneseq
        %v2880 = vshrl.u32 %v2879, 7
        %v2881 = vsub.s32 %v2878, %v2880
        %v2882 = vrot.slane %v2868, %v2881
        %v2883 = vcombine.low %v2858, %v2866
        %v2884 = vcombine.high %v2858, %v2866
        %v2886 = vunpack.c.l.s4 1934713408
        %v2887 = vunpack.c.0.s8 %v2886
        %v2888 = vlaneseq
        %v2889 = vshrl.u32 %v2888, 7
        %v2890 = vsub.s32 %v2887, %v2889
        %v2891 = vrot.slane %v2883, %v2890
        %v2893 = vunpack.c.l.s4 1934713408
        %v2894 = vunpack.c.0.s8 %v2893
        %v2895 = vlaneseq
        %v2896 = vshrl.u32 %v2895, 7
        %v2897 = vsub.s32 %v2894, %v2896
        %v2898 = vrot.slane %v2884, %v2897
        %v2899 = vcombine.low %v2875, %v2891
        %v2900 = vcombine.high %v2875, %v2891
        %v2901 = vcombine.low %v2882, %v2898
        %v2902 = vcombine.high %v2882, %v2898
        %2905 = vrot.lane.b32.xlu0 %v2832, 8
        %v2906 = vpop.permute.xlu0 %2905
        %2907 = vrot.lane.b32.xlu0 %v2900, 8
        %v2908 = vpop.permute.xlu0 %2907
        %2913 = vrot.lane.b32.xlu0 %v2833, 16
        %v2914 = vpop.permute.xlu0 %2913
        %2915 = vrot.lane.b32.xlu0 %v2901, 16
        %v2916 = vpop.permute.xlu0 %2915
        %2921 = vrot.lane.b32.xlu0 %v2834, 24
        %v2922 = vpop.permute.xlu0 %2921
        %2923 = vrot.lane.b32.xlu0 %v2902, 24
        %v2924 = vpop.permute.xlu0 %2923
        %v2927 = vsel %vm1837, %v2831, %v2906
        %v2928 = vsel %vm1837, %v2899, %v2908
        %v2929 = vsel %vm2186, %v2927, %v2914
        %v2930 = vsel %vm2186, %v2928, %v2916
        %vm2931 = vcmask 195584
        %v2932 = vsel %vm2931, %v2929, %v2922
        %v2933 = vsel %vm2931, %v2930, %v2924
        %v2934 = vld [vmem:[#allocation9] sm:$0xff]
        %v2935 = vld [vmem:[#allocation9 + $0x8] sm:$0xff]
        %v2936 = vld [vmem:[#allocation9 + $0x10] sm:$0xff]
        %v2937 = vld [vmem:[#allocation9 + $0x18] sm:$0xff]
        %v2938 = vld [vmem:[%s9] sm:$0x1]
        %v2940 = vlaneseq
        %v2941 = vshrl.u32 %v2940, 7
        %v2942 = vsub.s32 0, %v2941
        %v2943 = vrot.slane %v2938, %v2942
        %v2946 = vsel %vm1385, %v2932, 0
        %v2949 = vsel %vm1385, %v2933, 0
        %2951 = vmatprep.subr.mxu0 0.0
        %2952 = vmatpush1.msra.mxu0 0.0
        %2953 = vmatprep.subr.mxu0 0.0
        %2954 = vmatpush1.msra.mxu0 0.0
        %2955 = vmatprep.subr.mxu0 0.0
        %2956 = vmatpush1.msra.mxu0 0.0
        %2957 = vmatprep.subr.mxu0 0.0
        %2958 = vmatpush1.msra.mxu0 0.0
        %2959 = vmatprep.subr.mxu0 0.0
        %2960 = vmatpush1.msra.mxu0 0.0
        %2961 = vmatprep.subr.mxu0 0.0
        %2962 = vmatpush1.msra.mxu0 0.0
        %2963 = vmatprep.subr.mxu0 0.0
        %2964 = vmatpush1.msra.mxu0 0.0
        %2965 = vmatprep.subr.mxu0 0.0
        %2966 = vmatpush1.msra.mxu0 0.0
        %2967 = vmatprep.subr.mxu0 0.0
        %2968 = vmatpush1.msra.mxu0 0.0
        %2969 = vmatprep.subr.mxu0 0.0
        %2970 = vmatpush1.msra.mxu0 0.0
        %2971 = vmatprep.subr.mxu0 0.0
        %2972 = vmatpush1.msra.mxu0 0.0
        %2973 = vmatprep.subr.mxu0 0.0
        %2974 = vmatpush1.msra.mxu0 0.0
        %2975 = vmatprep.subr.mxu0 0.0
        %2976 = vmatpush1.msra.mxu0 %v2937
        %2977 = vmatprep.subr.mxu0 0.0
        %2978 = vmatpush1.msra.mxu0 %v2936
        %2979 = vmatprep.subr.mxu0 0.0
        %2980 = vmatpush1.msra.mxu0 %v2935
        %2981 = vmatprep.subr.mxu0 0.0
        %2982 = vmatpush1.msra.mxu0 %v2934
        %2983 = vmatprep.subr.mxu0 0.0
        %2984 = vmatpush2.msra.mxu0 0.0
        %2985 = vmatprep.subr.mxu0 0.0
        %2986 = vmatpush2.msra.mxu0 0.0
        %2987 = vmatprep.subr.mxu0 0.0
        %2988 = vmatpush2.msra.mxu0 0.0
        %2989 = vmatprep.subr.mxu0 0.0
        %2990 = vmatpush2.msra.mxu0 0.0
        %2991 = vmatprep.subr.mxu0 0.0
        %2992 = vmatpush2.msra.mxu0 0.0
        %2993 = vmatprep.subr.mxu0 0.0
        %2994 = vmatpush2.msra.mxu0 0.0
        %2995 = vmatprep.subr.mxu0 0.0
        %2996 = vmatpush2.msra.mxu0 0.0
        %2997 = vmatprep.subr.mxu0 0.0
        %2998 = vmatpush2.msra.mxu0 0.0
        %2999 = vmatprep.subr.mxu0 0.0
        %3000 = vmatpush2.msra.mxu0 0.0
        %3001 = vmatprep.subr.mxu0 0.0
        %3002 = vmatpush2.msra.mxu0 0.0
        %3003 = vmatprep.subr.mxu0 0.0
        %3004 = vmatpush2.msra.mxu0 0.0
        %3005 = vmatprep.subr.mxu0 0.0
        %3006 = vmatpush2.msra.mxu0 0.0
        %3007 = vmatprep.subr.mxu0 0.0
        %3008 = vmatpush2.msra.mxu0 0.0
        %3009 = vmatprep.subr.mxu0 0.0
        %3010 = vmatpush2.msra.mxu0 0.0
        %3011 = vmatprep.subr.mxu0 0.0
        %3012 = vmatpush2.msra.mxu0 0.0
        %3013 = vmatprep.subr.mxu0 0.0
        %3014 = vmatpush2.msra.mxu0 0.0
        %3015 = vmatprep.mubr.f32.mxu0 0.0
        %3016 = vmatmul.mubr.f32.gmra.mxu0 %v2946
        %v3017 = vpop.f32.mrf.mxu0
        %v3018 = vadd.f32 %v2943, %v3017
        %v3019 = vpop.f32.mrf.mxu0
        %3020 = vmatprep.mubr.f32.mxu0 0.0
        %3021 = vmatmul.mubr.f32.gmra.mxu0 %v2949
        %v3022 = vpop.f32.mrf.mxu0
        %v3023 = vadd.f32 %v2943, %v3022
        %v3024 = vpop.f32.mrf.mxu0
        %3025 = vdwg.mxu0
        %v3026 = vadd.f32 %v1381, %v3018
        %v3027 = vadd.f32 %v1382, %v3023
        %v3028 = vld [vmem:[%s10] sm:$0x1]
        %v3029 = vld [vmem:[%s11] sm:$0x1]
        %v3030 = vsel %vm1385, %v3026, 0.0
        %3031 = vadd.xlane.f32.xlu0 %v3030
        %v3032 = vpop.xlane.xlu0 %3031
        %v3033 = vsel %vm1385, %v3027, 0.0
        %3034 = vadd.xlane.f32.xlu0 %v3033
        %v3035 = vpop.xlane.xlu0 %3034
        %v3036 = vmul.f32 %v3032, %v1392
        %v3037 = vmul.f32 %v3035, %v1392
        %v3038 = vsub.f32 %v3026, %v3036
        %v3039 = vsub.f32 %v3027, %v3037
        %v3040 = vmul.f32 %v3038, %v3038
        %v3041 = vmul.f32 %v3039, %v3039
        %v3042 = vsel %vm1385, %v3040, 0.0
        %3043 = vadd.xlane.f32.xlu0 %v3042
        %v3044 = vpop.xlane.xlu0 %3043
        %v3045 = vsel %vm1385, %v3041, 0.0
        %3046 = vadd.xlane.f32.xlu0 %v3045
        %v3047 = vpop.xlane.xlu0 %3046
        %v3048 = vmul.f32 %v3044, %v1392
        %v3049 = vmul.f32 %v3047, %v1392
        %v3050 = vadd.f32 %v3048, 1e-05
        %v3051 = vadd.f32 %v3049, 1e-05
        %v3052 = vrsqrt.pop %v3050
        %v3053 = vrsqrt.pop %v3051
        %v3054 = vmul.f32 %v3038, %v3052
        %v3055 = vmul.f32 %v3039, %v3053
        %v3057 = vlaneseq
        %v3058 = vshrl.u32 %v3057, 7
        %v3059 = vsub.s32 0, %v3058
        %v3060 = vrot.slane %v3028, %v3059
        %v3062 = vmul.f32 %v3054, %v3060
        %v3063 = vmul.f32 %v3055, %v3060
        %v3065 = vlaneseq
        %v3066 = vshrl.u32 %v3065, 7
        %v3067 = vsub.s32 0, %v3066
        %v3068 = vrot.slane %v3029, %v3067
        %v3070 = vadd.f32 %v3062, %v3068
        %v3071 = vadd.f32 %v3063, %v3068
        %v3072 = vld [vmem:[#allocation10] sm:$0xff]
        %v3073 = vld [vmem:[#allocation10 + $0x8] sm:$0xff]
        %v3074 = vld [vmem:[#allocation10 + $0x10] sm:$0xff]
        %v3075 = vld [vmem:[#allocation10 + $0x18] sm:$0xff]
        %v3076 = vld [vmem:[%s13] sm:$0x1]
        %v3078 = vlaneseq
        %v3079 = vshrl.u32 %v3078, 7
        %v3080 = vsub.s32 0, %v3079
        %v3081 = vrot.slane %v3076, %v3080
        %v3084 = vsel %vm1385, %v3070, 0
        %v3087 = vsel %vm1385, %v3071, 0
        %3089 = vmatprep.subr.mxu0 0.0
        %3090 = vmatpush1.msra.mxu0 0.0
        %3091 = vmatprep.subr.mxu0 0.0
        %3092 = vmatpush1.msra.mxu0 0.0
        %3093 = vmatprep.subr.mxu0 0.0
        %3094 = vmatpush1.msra.mxu0 0.0
        %3095 = vmatprep.subr.mxu0 0.0
        %3096 = vmatpush1.msra.mxu0 0.0
        %3097 = vmatprep.subr.mxu0 0.0
        %3098 = vmatpush1.msra.mxu0 0.0
        %3099 = vmatprep.subr.mxu0 0.0
        %3100 = vmatpush1.msra.mxu0 0.0
        %3101 = vmatprep.subr.mxu0 0.0
        %3102 = vmatpush1.msra.mxu0 0.0
        %3103 = vmatprep.subr.mxu0 0.0
        %3104 = vmatpush1.msra.mxu0 0.0
        %3105 = vmatprep.subr.mxu0 0.0
        %3106 = vmatpush1.msra.mxu0 0.0
        %3107 = vmatprep.subr.mxu0 0.0
        %3108 = vmatpush1.msra.mxu0 0.0
        %3109 = vmatprep.subr.mxu0 0.0
        %3110 = vmatpush1.msra.mxu0 0.0
        %3111 = vmatprep.subr.mxu0 0.0
        %3112 = vmatpush1.msra.mxu0 0.0
        %3113 = vmatprep.subr.mxu0 0.0
        %3114 = vmatpush1.msra.mxu0 %v3075
        %3115 = vmatprep.subr.mxu0 0.0
        %3116 = vmatpush1.msra.mxu0 %v3074
        %3117 = vmatprep.subr.mxu0 0.0
        %3118 = vmatpush1.msra.mxu0 %v3073
        %3119 = vmatprep.subr.mxu0 0.0
        %3120 = vmatpush1.msra.mxu0 %v3072
        %3121 = vmatprep.subr.mxu0 0.0
        %3122 = vmatpush2.msra.mxu0 0.0
        %3123 = vmatprep.subr.mxu0 0.0
        %3124 = vmatpush2.msra.mxu0 0.0
        %3125 = vmatprep.subr.mxu0 0.0
        %3126 = vmatpush2.msra.mxu0 0.0
        %3127 = vmatprep.subr.mxu0 0.0
        %3128 = vmatpush2.msra.mxu0 0.0
        %3129 = vmatprep.subr.mxu0 0.0
        %3130 = vmatpush2.msra.mxu0 0.0
        %3131 = vmatprep.subr.mxu0 0.0
        %3132 = vmatpush2.msra.mxu0 0.0
        %3133 = vmatprep.subr.mxu0 0.0
        %3134 = vmatpush2.msra.mxu0 0.0
        %3135 = vmatprep.subr.mxu0 0.0
        %3136 = vmatpush2.msra.mxu0 0.0
        %3137 = vmatprep.subr.mxu0 0.0
        %3138 = vmatpush2.msra.mxu0 0.0
        %3139 = vmatprep.subr.mxu0 0.0
        %3140 = vmatpush2.msra.mxu0 0.0
        %3141 = vmatprep.subr.mxu0 0.0
        %3142 = vmatpush2.msra.mxu0 0.0
        %3143 = vmatprep.subr.mxu0 0.0
        %3144 = vmatpush2.msra.mxu0 0.0
        %3145 = vmatprep.subr.mxu0 0.0
        %3146 = vmatpush2.msra.mxu0 0.0
        %3147 = vmatprep.subr.mxu0 0.0
        %3148 = vmatpush2.msra.mxu0 0.0
        %3149 = vmatprep.subr.mxu0 0.0
        %3150 = vmatpush2.msra.mxu0 0.0
        %3151 = vmatprep.subr.mxu0 0.0
        %3152 = vmatpush2.msra.mxu0 0.0
        %3153 = vmatprep.mubr.f32.mxu0 0.0
        %3154 = vmatmul.mubr.f32.gmra.mxu0 %v3084
        %v3155 = vpop.f32.mrf.mxu0
        %v3156 = vadd.f32 %v3081, %v3155
        %v3157 = vpop.f32.mrf.mxu0
        %3158 = vmatprep.mubr.f32.mxu0 0.0
        %3159 = vmatmul.mubr.f32.gmra.mxu0 %v3087
        %v3160 = vpop.f32.mrf.mxu0
        %v3161 = vadd.f32 %v3081, %v3160
        %v3162 = vpop.f32.mrf.mxu0
        %3163 = vdwg.mxu0
        %v3164 = vmul.f32 %v3156, 0.5
        %v3165 = vmul.f32 %v3161, 0.5
        %v3166 = vmul.f32 %v3156, 0.70710677
        %v3167 = vmul.f32 %v3161, 0.70710677
        %v3168 = verf.f32.pop %v3166
        %v3169 = verf.f32.pop %v3167
        %v3170 = vadd.f32 %v3168, 1.0
        %v3171 = vadd.f32 %v3169, 1.0
        %v3172 = vmul.f32 %v3164, %v3170
        %v3173 = vmul.f32 %v3165, %v3171
        %v3174 = vld [vmem:[%s14] sm:$0xff]
        %v3175 = vld [vmem:[%s14 + $0x8] sm:$0xff]
        %v3176 = vld [vmem:[%s14 + $0x10] sm:$0xff]
        %v3177 = vld [vmem:[%s14 + $0x18] sm:$0xff]
        %v3178 = vld [vmem:[%s14 + $0x20] sm:$0xff]
        %v3179 = vld [vmem:[%s14 + $0x28] sm:$0xff]
        %v3180 = vld [vmem:[%s14 + $0x30] sm:$0xff]
        %v3181 = vld [vmem:[%s14 + $0x38] sm:$0xff]
        %v3182 = vld [vmem:[%s15] sm:$0x1]
        %v3184 = vlaneseq
        %v3185 = vshrl.u32 %v3184, 7
        %v3186 = vsub.s32 0, %v3185
        %v3187 = vrot.slane %v3182, %v3186
        %vm3189 = vcmask 523264
        %v3191 = vsel %vm3189, %v3172, 0
        %v3194 = vsel %vm3189, %v3173, 0
        %3196 = vmatprep.subr.mxu0 0.0
        %3197 = vmatpush1.msra.mxu0 0.0
        %3198 = vmatprep.subr.mxu0 0.0
        %3199 = vmatpush1.msra.mxu0 0.0
        %3200 = vmatprep.subr.mxu0 0.0
        %3201 = vmatpush1.msra.mxu0 0.0
        %3202 = vmatprep.subr.mxu0 0.0
        %3203 = vmatpush1.msra.mxu0 0.0
        %3204 = vmatprep.subr.mxu0 0.0
        %3205 = vmatpush1.msra.mxu0 0.0
        %3206 = vmatprep.subr.mxu0 0.0
        %3207 = vmatpush1.msra.mxu0 0.0
        %3208 = vmatprep.subr.mxu0 0.0
        %3209 = vmatpush1.msra.mxu0 0.0
        %3210 = vmatprep.subr.mxu0 0.0
        %3211 = vmatpush1.msra.mxu0 0.0
        %3212 = vmatprep.subr.mxu0 0.0
        %3213 = vmatpush1.msra.mxu0 %v3181
        %3214 = vmatprep.subr.mxu0 0.0
        %3215 = vmatpush1.msra.mxu0 %v3180
        %3216 = vmatprep.subr.mxu0 0.0
        %3217 = vmatpush1.msra.mxu0 %v3179
        %3218 = vmatprep.subr.mxu0 0.0
        %3219 = vmatpush1.msra.mxu0 %v3178
        %3220 = vmatprep.subr.mxu0 0.0
        %3221 = vmatpush1.msra.mxu0 %v3177
        %3222 = vmatprep.subr.mxu0 0.0
        %3223 = vmatpush1.msra.mxu0 %v3176
        %3224 = vmatprep.subr.mxu0 0.0
        %3225 = vmatpush1.msra.mxu0 %v3175
        %3226 = vmatprep.subr.mxu0 0.0
        %3227 = vmatpush1.msra.mxu0 %v3174
        %3228 = vmatprep.subr.mxu0 0.0
        %3229 = vmatpush2.msra.mxu0 0.0
        %3230 = vmatprep.subr.mxu0 0.0
        %3231 = vmatpush2.msra.mxu0 0.0
        %3232 = vmatprep.subr.mxu0 0.0
        %3233 = vmatpush2.msra.mxu0 0.0
        %3234 = vmatprep.subr.mxu0 0.0
        %3235 = vmatpush2.msra.mxu0 0.0
        %3236 = vmatprep.subr.mxu0 0.0
        %3237 = vmatpush2.msra.mxu0 0.0
        %3238 = vmatprep.subr.mxu0 0.0
        %3239 = vmatpush2.msra.mxu0 0.0
        %3240 = vmatprep.subr.mxu0 0.0
        %3241 = vmatpush2.msra.mxu0 0.0
        %3242 = vmatprep.subr.mxu0 0.0
        %3243 = vmatpush2.msra.mxu0 0.0
        %3244 = vmatprep.subr.mxu0 0.0
        %3245 = vmatpush2.msra.mxu0 0.0
        %3246 = vmatprep.subr.mxu0 0.0
        %3247 = vmatpush2.msra.mxu0 0.0
        %3248 = vmatprep.subr.mxu0 0.0
        %3249 = vmatpush2.msra.mxu0 0.0
        %3250 = vmatprep.subr.mxu0 0.0
        %3251 = vmatpush2.msra.mxu0 0.0
        %3252 = vmatprep.subr.mxu0 0.0
        %3253 = vmatpush2.msra.mxu0 0.0
        %3254 = vmatprep.subr.mxu0 0.0
        %3255 = vmatpush2.msra.mxu0 0.0
        %3256 = vmatprep.subr.mxu0 0.0
        %3257 = vmatpush2.msra.mxu0 0.0
        %3258 = vmatprep.subr.mxu0 0.0
        %3259 = vmatpush2.msra.mxu0 0.0
        %3260 = vmatprep.mubr.f32.mxu0 0.0
        %3261 = vmatmul.mubr.f32.gmra.mxu0 %v3191
        %v3262 = vpop.f32.mrf.mxu0
        %v3263 = vadd.f32 %v3187, %v3262
        %v3264 = vpop.f32.mrf.mxu0
        %3265 = vmatprep.mubr.f32.mxu0 0.0
        %3266 = vmatmul.mubr.f32.gmra.mxu0 %v3194
        %v3267 = vpop.f32.mrf.mxu0
        %v3268 = vadd.f32 %v3187, %v3267
        %v3269 = vpop.f32.mrf.mxu0
        %3270 = vdwg.mxu0
        %v3271 = vadd.f32 %v3026, %v3263
        %v3272 = vadd.f32 %v3027, %v3268
        %3273 = vst.msk [vmem:[%s613] sm:$0xff] %vm1385, %v3271
        %3274 = vst.msk [vmem:[%s613 + $0x8] sm:$0xff] %vm1385, %v3272
        %s3275 = sand.u32 %s403, 1
        %s3276 = scalar_lea.sflag [#allocation6], %s3275
        %s3277 = sand.u32 %s403, 1
        %s3278 = smul.addr %s3277, 16
        %s3279 = scalar_lea.vmem [#allocation12], %s3278
        // Predicated region
        $region105: #{tpu_custom_call.1} parent=83 // pred_check
          %p3280 = pneg %p413
        $region106: #{tpu_custom_call.1} parent=83 // pred_check_branch
          %3282 = sbr.rel (%p3280) target = $region108
        $region107: #{tpu_custom_call.1} parent=83 // pred_region
          %s3283 = smul.u32 2, %s38
          %s3285 = ssub.s32 256, 256
          %3286 = vsyncadd %s3276, %s3285
          %s3287 = smul.addr %s37, 2
          %s3288 = sadd.s32 %s3283, %s3287
          %s3289 = smul.addr %s3288, 128
          %s3290 = scalar_lea.hbm %s16, %s3289
          %s3291 = sshll.u32 %s3279, 4
          %s3292 = int_to_ptr.vmem [resolvable:$true] %s3291
          %3297 = dma.vmem_to_hbm [thread:$0]  %s3292, 256, %s3290, %s3276, 128, 128, 8
        $region108: #{tpu_custom_call.1} parent=83 // pred_fallthru
          _
      $region84: #{tpu_custom_call.1} parent=5 // pred_fallthru
        _
      %p3298 = scmp.le.s32.totalorder 2, %s28
      // Predicated region
      $region109: #{tpu_custom_call.1} parent=5 // pred_check
        %p3299 = pneg %p3298
      $region110: #{tpu_custom_call.1} parent=5 // pred_check_branch
        %3301 = sbr.rel (%p3299) target = $region112
      $region111: #{tpu_custom_call.1} parent=5 // pred_region
        %s3302 = ssub.s32 %s28, 2
        // Predicated region
        $region113: #{tpu_custom_call.1} parent=111 // pred_check
          %p3303 = pneg %p419
        $region114: #{tpu_custom_call.1} parent=111 // pred_check_branch
          %3305 = sbr.rel (%p3303) target = $region116
        $region115: #{tpu_custom_call.1} parent=111 // pred_region
          %s3306 = sand.u32 %s404, 1
          %s3307 = scalar_lea.sflag [#allocation6], %s3306
          %s3308 = sand.u32 %s404, 1
          %s3309 = smul.addr %s3308, 16
          %s3310 = scalar_lea.vmem [#allocation12], %s3309
          %3311 = dma.done %s3307, 256
        $region116: #{tpu_custom_call.1} parent=111 // pred_fallthru
          _
      $region112: #{tpu_custom_call.1} parent=5 // pred_fallthru
        _
    $region6: #{tpu_custom_call.1} parent=1 // loop_footer
      %s32 = sadd.s32 1, %s28
    $region7: #{tpu_custom_call.1} parent=1 // loop_footer_branch
      %27 = sbr.rel target = $region3
    $region8: #{tpu_custom_call.1} parent=1 // loop_exit
      _
    %3312 = vsyncpa [#allocation5], 1
    %s3313 = scalar_lea.sflag [#allocation5], 1
    %3314 = vsyncpa %s3313, 1
    %3315 = vsyncpa [#allocation8], 1
    %3316 = vsyncpa [#allocation11], 1
    %3317 = vsyncpa [#allocation6], 1
    %s3318 = scalar_lea.sflag [#allocation6], 1
    %3319 = vsyncpa %s3318, 1

</llo_original>
